<compile_context>
chip_gen: v6e
topology: v6e:2x2x1
jax: 0.10.0
libtpu: 0.0.40
codegen_flags: <defaults>
</compile_context>

<pallas_src>
import functools

import jax
import jax.numpy as jnp
from jax.experimental import pallas as pl
from jax.experimental.pallas import tpu as pltpu

EPS = 1e-5
F_IN = 1024
H0 = 512
H1 = 256

# Largest batch run as one resident block (single HBM read of x).  Per-row VMEM
# footprint of the fused kernel is ~22 KB (x, xn, h0..h2, out, bf16 casts), so
# N=1024 is ~25 MiB: under the 48 MiB scoped limit and under v7x's 64 MiB VMEM.
_SINGLE_PASS_MAX_N = 1024
_VMEM_LIMIT = 48 * 1024 * 1024


def _cost(n):
    flops = 2 * n * (F_IN * H0 + H0 * H1 + H1 * F_IN)
    bytes_accessed = (2 * n * F_IN * 4                              # x in + out (f32)
                      + (F_IN * H0 + H0 * H1 + H1 * F_IN) * 2       # bf16 weights
                      + (4 * F_IN + H0 + H1) * 4)                   # gamma/beta/biases/stats
    return pl.CostEstimate(flops=flops, transcendentals=0,
                           bytes_accessed=bytes_accessed)


# ------------------- single-pass fused kernel (batch fits VMEM) -------------------
def _foo1_single_pass_kernel(x_ref, gamma_ref, beta_ref,
                             w0_ref, b0_ref, w1_ref, b1_ref, w2_ref, b2_ref,
                             o_ref, *, inv_n):
    x = x_ref[...]                                              # (N, 1024) f32
    mean = jnp.sum(x, axis=0, keepdims=True) * inv_n
    xc = x - mean
    var = jnp.sum(xc * xc, axis=0, keepdims=True) * inv_n        # centered: no cancellation
    scale = gamma_ref[...] * jax.lax.rsqrt(var + EPS)            # rsqrt -> EUP slot
    xn = xc * scale + beta_ref[...]                              # BN apply (f32 VPU)

    # Linear chain on the MXU: bf16 inputs, f32 accumulation, f32 bias add.
    h0 = jnp.dot(xn.astype(jnp.bfloat16), w0_ref[...],
                 preferred_element_type=jnp.float32) + b0_ref[...]   # (N, 512)
    h1 = jnp.dot(h0.astype(jnp.bfloat16), w1_ref[...],
                 preferred_element_type=jnp.float32) + b1_ref[...]   # (N, 256)
    h2 = jnp.dot(h1.astype(jnp.bfloat16), w2_ref[...],
                 preferred_element_type=jnp.float32) + b2_ref[...]   # (N, 1024)

    o_ref[...] = jnp.maximum(xn + h2, 0.0)                       # residual + ReLU (f32)


def _foo1_single_pass(x, gamma, beta, w0, b0, w1, b1, w2, b2):
    n = x.shape[0]
    kernel = functools.partial(_foo1_single_pass_kernel, inv_n=1.0 / n)

    def resident(shape):
        return pl.BlockSpec(shape, lambda i: (0, 0))

    return pl.pallas_call(
        kernel,
        out_shape=jax.ShapeDtypeStruct((n, F_IN), jnp.float32),
        grid=(1,),
        in_specs=[
            resident((n, F_IN)),                       # x (whole batch, resident)
            resident((1, F_IN)), resident((1, F_IN)),  # gamma, beta
            resident((F_IN, H0)), resident((1, H0)),   # w0 (bf16), b0
            resident((H0, H1)), resident((1, H1)),     # w1 (bf16), b1
            resident((H1, F_IN)), resident((1, F_IN)), # w2 (bf16), b2
        ],
        out_specs=resident((n, F_IN)),
        compiler_params=pltpu.CompilerParams(
            dimension_semantics=("arbitrary",),
            vmem_limit_bytes=_VMEM_LIMIT),
        cost_estimate=_cost(n),
    )(x, gamma, beta, w0, b0, w1, b1, w2, b2)


# --------------------------- two-pass path (large batch) --------------------------
def _bn_stats_kernel(x_ref, sum_ref, sumsq_ref):
    # Sequential ("arbitrary") grid axis: single shared accumulators, init at step 0.
    @pl.when(pl.program_id(0) == 0)
    def _():
        sum_ref[...] = jnp.zeros_like(sum_ref)
        sumsq_ref[...] = jnp.zeros_like(sumsq_ref)

    x = x_ref[...]                                               # (TM, 1024) f32
    sum_ref[...] += jnp.sum(x, axis=0, keepdims=True)
    sumsq_ref[...] += jnp.sum(x * x, axis=0, keepdims=True)


def _foo1_tiled_kernel(x_ref, s_ref, ss_ref, gamma_ref, beta_ref,
                       w0_ref, b0_ref, w1_ref, b1_ref, w2_ref, b2_ref,
                       o_ref, *, inv_n):
    # BN-stat finalization folded in here: a (1,1024) rsqrt per tile is free
    # (EUP slot) under a mem-bound kernel; no XLA glue ops between pallas_calls.
    mean = s_ref[...] * inv_n
    # TODO(synk): E[x^2]-E[x]^2 can cancel when |mean| >> std; use a centered /
    # Welford combine if robustness to such inputs is required.
    var = ss_ref[...] * inv_n - mean * mean
    scale = gamma_ref[...] * jax.lax.rsqrt(var + EPS)
    shift = beta_ref[...] - mean * scale

    xn = x_ref[...] * scale + shift                              # (TM, 1024) f32
    h0 = jnp.dot(xn.astype(jnp.bfloat16), w0_ref[...],
                 preferred_element_type=jnp.float32) + b0_ref[...]
    h1 = jnp.dot(h0.astype(jnp.bfloat16), w1_ref[...],
                 preferred_element_type=jnp.float32) + b1_ref[...]
    h2 = jnp.dot(h1.astype(jnp.bfloat16), w2_ref[...],
                 preferred_element_type=jnp.float32) + b2_ref[...]
    o_ref[...] = jnp.maximum(xn + h2, 0.0)


def _pick_batch_tile(n):
    # Larger tiles for HBM-roofline efficiency (~63% @256 vs ~85% @512+ measured),
    # but keep >=4 grid steps so the pipeline ramps and each v7x TC gets >=2 tiles.
    if n >= 4 * 512:
        return 512
    if n >= 4 * 256:
        return 256
    return 128


def _foo1_two_pass(x, gamma, beta, w0, b0, w1, b1, w2, b2):
    n = x.shape[0]
    tm = _pick_batch_tile(n)
    nt = pl.cdiv(n, tm)
    npad = nt * tm
    if npad != n:
        # Zero rows add nothing to sum / sumsq and the stats divide by the true n,
        # so padding does not change BN numerics; padded output rows are sliced off.
        x = jnp.pad(x, ((0, npad - n), (0, 0)))

    # Pass 1: full-batch sum / sum-of-squares (sequential accumulation).
    s, ss = pl.pallas_call(
        _bn_stats_kernel,
        out_shape=(jax.ShapeDtypeStruct((1, F_IN), jnp.float32),
                   jax.ShapeDtypeStruct((1, F_IN), jnp.float32)),
        grid=(nt,),
        in_specs=[pl.BlockSpec((tm, F_IN), lambda i: (i, 0))],
        out_specs=(pl.BlockSpec((1, F_IN), lambda i: (0, 0)),
                   pl.BlockSpec((1, F_IN), lambda i: (0, 0))),
        compiler_params=pltpu.CompilerParams(
            dimension_semantics=("arbitrary",)),
    )(x)

    # Pass 2: fused BN apply + 3 matmuls + residual + ReLU, batch-tiled & pipelined.
    kernel = functools.partial(_foo1_tiled_kernel, inv_n=1.0 / n)

    def resident(shape):                 # constant block index => VMEM-resident
        return pl.BlockSpec(shape, lambda i: (0, 0))

    out = pl.pallas_call(
        kernel,
        out_shape=jax.ShapeDtypeStruct((npad, F_IN), jnp.float32),
        grid=(nt,),
        in_specs=[
            pl.BlockSpec((tm, F_IN), lambda i: (i, 0)),   # x: batch-tiled, pipelined
            resident((1, F_IN)), resident((1, F_IN)),     # sum, sumsq
            resident((1, F_IN)), resident((1, F_IN)),     # gamma, beta
            resident((F_IN, H0)), resident((1, H0)),      # w0 (bf16), b0
            resident((H0, H1)), resident((1, H1)),        # w1 (bf16), b1
            resident((H1, F_IN)), resident((1, F_IN)),    # w2 (bf16), b2
        ],
        out_specs=pl.BlockSpec((tm, F_IN), lambda i: (i, 0)),
        compiler_params=pltpu.CompilerParams(
            dimension_semantics=("parallel",),            # megacore sharding on v7x
            vmem_limit_bytes=_VMEM_LIMIT),
        cost_estimate=_cost(n),
    )(x, s, ss, gamma, beta, w0, b0, w1, b1, w2, b2)
    return out[:n] if npad != n else out


def foo1_forward(x, params, *, single_pass_max_n=_SINGLE_PASS_MAX_N):
    gamma, beta, w0, b0, w1, b1, w2, b2 = params          # weights already bf16
    n = x.shape[0]
    if n <= single_pass_max_n:
        return _foo1_single_pass(x, gamma, beta, w0, b0, w1, b1, w2, b2)
    return _foo1_two_pass(x, gamma, beta, w0, b0, w1, b1, w2, b2)


# ------------------------------ params / reference -------------------------------
def init_params(key):
    ks = jax.random.split(key, 6)
    gamma = jnp.ones((1, F_IN), jnp.float32)              # PyTorch default affine init
    beta = jnp.zeros((1, F_IN), jnp.float32)

    def lin(kw, kb, fin, fout):
        bound = 1.0 / jnp.sqrt(fin)
        w = jax.random.uniform(kw, (fin, fout), jnp.float32, -bound, bound)
        b = jax.random.uniform(kb, (1, fout), jnp.float32, -bound, bound)
        return w, b

    w0, b0 = lin(ks[0], ks[1], F_IN, H0)
    w1, b1 = lin(ks[2], ks[3], H0, H1)
    w2, b2 = lin(ks[4], ks[5], H1, F_IN)
    return (gamma, beta, w0, b0, w1, b1, w2, b2)           # f32 master params


def to_kernel_params(params):
    gamma, beta, w0, b0, w1, b1, w2, b2 = params
    # bf16 weights halve HBM weight traffic and double MXU throughput; biases/BN stay f32.
    return (gamma, beta,
            w0.astype(jnp.bfloat16), b0,
            w1.astype(jnp.bfloat16), b1,
            w2.astype(jnp.bfloat16), b2)


def foo1_reference(x, params):
    gamma, beta, w0, b0, w1, b1, w2, b2 = params           # f32 reference
    mean = jnp.mean(x, axis=0, keepdims=True)
    var = jnp.mean((x - mean) ** 2, axis=0, keepdims=True)
    xn = (x - mean) / jnp.sqrt(var + EPS) * gamma + beta
    h0 = xn @ w0 + b0
    h1 = h0 @ w1 + b1
    h2 = h1 @ w2 + b2
    return jnp.maximum(xn + h2, 0.0)


if __name__ == "__main__":
    key = jax.random.PRNGKey(0)
    kx, kp = jax.random.split(key)
    params = init_params(kp)
    kparams = to_kernel_params(params)

    # Small batch -> single-pass fused kernel (x read from HBM exactly once).
    n1 = 64
    x1 = jax.random.normal(kx, (n1, F_IN), jnp.float32)
    out1 = jax.block_until_ready(foo1_forward(x1, kparams))
    ref1 = foo1_reference(x1, params)
    assert out1.shape == (n1, F_IN) and out1.dtype == jnp.float32
    assert jnp.allclose(out1, ref1, atol=3e-2, rtol=3e-2), \
        float(jnp.max(jnp.abs(out1 - ref1)))

    # Irregular batch forced onto the tiled two-pass path (exercises padding + stats).
    n2 = 320
    x2 = jax.random.normal(jax.random.fold_in(kx, 1), (n2, F_IN), jnp.float32)
    out2 = jax.block_until_ready(foo1_forward(x2, kparams, single_pass_max_n=0))
    ref2 = foo1_reference(x2, params)
    assert out2.shape == (n2, F_IN) and out2.dtype == jnp.float32
    assert jnp.allclose(out2, ref2, atol=3e-2, rtol=3e-2), \
        float(jnp.max(jnp.abs(out2 - ref2)))

    print("KERNEL_OK")
</pallas_src>

<mosaic_0001>
module attributes {stable_mosaic.version = 11 : i64} {
  func.func @_foo1_single_pass_kernel(%arg0: i32, %arg1: memref<64x1024xf32, #tpu.memory_space<vmem>>, %arg2: memref<1x1024xf32, #tpu.memory_space<vmem>>, %arg3: memref<1x1024xf32, #tpu.memory_space<vmem>>, %arg4: memref<1024x512xbf16, #tpu.memory_space<vmem>>, %arg5: memref<1x512xf32, #tpu.memory_space<vmem>>, %arg6: memref<512x256xbf16, #tpu.memory_space<vmem>>, %arg7: memref<1x256xf32, #tpu.memory_space<vmem>>, %arg8: memref<256x1024xbf16, #tpu.memory_space<vmem>>, %arg9: memref<1x1024xf32, #tpu.memory_space<vmem>>, %arg10: memref<64x1024xf32, #tpu.memory_space<vmem>>) attributes {dimension_semantics = [#tpu.dimension_semantics<arbitrary>], iteration_bounds = array<i64: 1>, scalar_prefetch = 0 : i64, scratch_operands = 0 : i64, tpu.core_type = #tpu.core_type<tc>, window_params = [{pipeline_mode = #tpu.pipeline_mode<synchronous>, transform_indices = @transform_0, window_bounds = array<i64: 64, 1024>}, {pipeline_mode = #tpu.pipeline_mode<synchronous>, transform_indices = @transform_1, window_bounds = array<i64: 1, 1024>}, {pipeline_mode = #tpu.pipeline_mode<synchronous>, transform_indices = @transform_2, window_bounds = array<i64: 1, 1024>}, {pipeline_mode = #tpu.pipeline_mode<synchronous>, transform_indices = @transform_3, window_bounds = array<i64: 1024, 512>}, {pipeline_mode = #tpu.pipeline_mode<synchronous>, transform_indices = @transform_4, window_bounds = array<i64: 1, 512>}, {pipeline_mode = #tpu.pipeline_mode<synchronous>, transform_indices = @transform_5, window_bounds = array<i64: 512, 256>}, {pipeline_mode = #tpu.pipeline_mode<synchronous>, transform_indices = @transform_6, window_bounds = array<i64: 1, 256>}, {pipeline_mode = #tpu.pipeline_mode<synchronous>, transform_indices = @transform_7, window_bounds = array<i64: 256, 1024>}, {pipeline_mode = #tpu.pipeline_mode<synchronous>, transform_indices = @transform_8, window_bounds = array<i64: 1, 1024>}, {pipeline_mode = #tpu.pipeline_mode<synchronous>, transform_indices = @transform_9, window_bounds = array<i64: 64, 1024>}]} {
    %c0 = arith.constant 0 : index
    %c0_0 = arith.constant 0 : index
    %0 = vector.load %arg1[%c0, %c0_0] : memref<64x1024xf32, #tpu.memory_space<vmem>>, vector<64x1024xf32>
    %cst = arith.constant dense<0.000000e+00> : vector<1024xf32>
    %1 = vector.multi_reduction <add>, %0, %cst [0] : vector<64x1024xf32> to vector<1024xf32>
    %2 = vector.shape_cast %1 : vector<1024xf32> to vector<1x1024xf32>
    %cst_1 = arith.constant 1.562500e-02 : f32
    %3 = vector.broadcast %cst_1 : f32 to vector<1x1024xf32>
    %4 = arith.mulf %2, %3 : vector<1x1024xf32>
    %5 = vector.broadcast %4 : vector<1x1024xf32> to vector<64x1024xf32>
    %6 = arith.subf %0, %5 : vector<64x1024xf32>
    %7 = arith.mulf %6, %6 : vector<64x1024xf32>
    %cst_2 = arith.constant dense<0.000000e+00> : vector<1024xf32>
    %8 = vector.multi_reduction <add>, %7, %cst_2 [0] : vector<64x1024xf32> to vector<1024xf32>
    %9 = vector.shape_cast %8 : vector<1024xf32> to vector<1x1024xf32>
    %cst_3 = arith.constant 1.562500e-02 : f32
    %10 = vector.broadcast %cst_3 : f32 to vector<1x1024xf32>
    %11 = arith.mulf %9, %10 : vector<1x1024xf32>
    %c0_4 = arith.constant 0 : index
    %c0_5 = arith.constant 0 : index
    %12 = vector.load %arg2[%c0_4, %c0_5] : memref<1x1024xf32, #tpu.memory_space<vmem>>, vector<1x1024xf32>
    %cst_6 = arith.constant 9.99999974E-6 : f32
    %13 = vector.broadcast %cst_6 : f32 to vector<1x1024xf32>
    %14 = arith.addf %11, %13 : vector<1x1024xf32>
    %15 = math.rsqrt %14 : vector<1x1024xf32>
    %16 = arith.mulf %12, %15 : vector<1x1024xf32>
    %17 = vector.broadcast %16 : vector<1x1024xf32> to vector<64x1024xf32>
    %18 = arith.mulf %6, %17 : vector<64x1024xf32>
    %c0_7 = arith.constant 0 : index
    %c0_8 = arith.constant 0 : index
    %19 = vector.load %arg3[%c0_7, %c0_8] : memref<1x1024xf32, #tpu.memory_space<vmem>>, vector<1x1024xf32>
    %20 = vector.broadcast %19 : vector<1x1024xf32> to vector<64x1024xf32>
    %21 = arith.addf %18, %20 : vector<64x1024xf32>
    %22 = arith.truncf %21 : vector<64x1024xf32> to vector<64x1024xbf16>
    %c0_9 = arith.constant 0 : index
    %c0_10 = arith.constant 0 : index
    %23 = vector.load %arg4[%c0_9, %c0_10] : memref<1024x512xbf16, #tpu.memory_space<vmem>>, vector<1024x512xbf16>
    %cst_11 = arith.constant dense<0.000000e+00> : vector<64x512xf32>
    %24 = tpu.matmul %22, %23, %cst_11 {dimension_numbers = #tpu.dot_dimension_numbers<[1], [0], [0], [1], [0, 0, 1, 1], [], []>} : vector<64x1024xbf16>, vector<1024x512xbf16>, vector<64x512xf32> -> vector<64x512xf32>
    %c0_12 = arith.constant 0 : index
    %c0_13 = arith.constant 0 : index
    %25 = vector.load %arg5[%c0_12, %c0_13] : memref<1x512xf32, #tpu.memory_space<vmem>>, vector<1x512xf32>
    %26 = vector.broadcast %25 : vector<1x512xf32> to vector<64x512xf32>
    %27 = arith.addf %24, %26 : vector<64x512xf32>
    %28 = arith.truncf %27 : vector<64x512xf32> to vector<64x512xbf16>
    %c0_14 = arith.constant 0 : index
    %c0_15 = arith.constant 0 : index
    %29 = vector.load %arg6[%c0_14, %c0_15] : memref<512x256xbf16, #tpu.memory_space<vmem>>, vector<512x256xbf16>
    %cst_16 = arith.constant dense<0.000000e+00> : vector<64x256xf32>
    %30 = tpu.matmul %28, %29, %cst_16 {dimension_numbers = #tpu.dot_dimension_numbers<[1], [0], [0], [1], [0, 0, 1, 1], [], []>} : vector<64x512xbf16>, vector<512x256xbf16>, vector<64x256xf32> -> vector<64x256xf32>
    %c0_17 = arith.constant 0 : index
    %c0_18 = arith.constant 0 : index
    %31 = vector.load %arg7[%c0_17, %c0_18] : memref<1x256xf32, #tpu.memory_space<vmem>>, vector<1x256xf32>
    %32 = vector.broadcast %31 : vector<1x256xf32> to vector<64x256xf32>
    %33 = arith.addf %30, %32 : vector<64x256xf32>
    %34 = arith.truncf %33 : vector<64x256xf32> to vector<64x256xbf16>
    %c0_19 = arith.constant 0 : index
    %c0_20 = arith.constant 0 : index
    %35 = vector.load %arg8[%c0_19, %c0_20] : memref<256x1024xbf16, #tpu.memory_space<vmem>>, vector<256x1024xbf16>
    %cst_21 = arith.constant dense<0.000000e+00> : vector<64x1024xf32>
    %36 = tpu.matmul %34, %35, %cst_21 {dimension_numbers = #tpu.dot_dimension_numbers<[1], [0], [0], [1], [0, 0, 1, 1], [], []>} : vector<64x256xbf16>, vector<256x1024xbf16>, vector<64x1024xf32> -> vector<64x1024xf32>
    %c0_22 = arith.constant 0 : index
    %c0_23 = arith.constant 0 : index
    %37 = vector.load %arg9[%c0_22, %c0_23] : memref<1x1024xf32, #tpu.memory_space<vmem>>, vector<1x1024xf32>
    %38 = vector.broadcast %37 : vector<1x1024xf32> to vector<64x1024xf32>
    %39 = arith.addf %36, %38 : vector<64x1024xf32>
    %40 = arith.addf %21, %39 : vector<64x1024xf32>
    %cst_24 = arith.constant 0.000000e+00 : f32
    %41 = vector.broadcast %cst_24 : f32 to vector<64x1024xf32>
    %42 = arith.maximumf %40, %41 : vector<64x1024xf32>
    %c0_25 = arith.constant 0 : index
    %c0_26 = arith.constant 0 : index
    %43 = vector.load %arg10[%c0_25, %c0_26] : memref<64x1024xf32, #tpu.memory_space<vmem>>, vector<64x1024xf32>
    tpu.vector_store %arg10[%c0_25, %c0_26], %42 {strides = array<i32>} : memref<64x1024xf32, #tpu.memory_space<vmem>>, vector<64x1024xf32>,
    return
  }
  func.func @transform_0(%arg0: i32) -> (i32, i32) {
    %c0_i32 = arith.constant 0 : i32
    %c0_i32_0 = arith.constant 0 : i32
    %c0_i32_1 = arith.constant 0 : i32
    return %c0_i32, %c0_i32_0 : i32, i32
  }
  func.func @transform_1(%arg0: i32) -> (i32, i32) {
    %c0_i32 = arith.constant 0 : i32
    %c0_i32_0 = arith.constant 0 : i32
    %c0_i32_1 = arith.constant 0 : i32
    return %c0_i32, %c0_i32_0 : i32, i32
  }
  func.func @transform_2(%arg0: i32) -> (i32, i32) {
    %c0_i32 = arith.constant 0 : i32
    %c0_i32_0 = arith.constant 0 : i32
    %c0_i32_1 = arith.constant 0 : i32
    return %c0_i32, %c0_i32_0 : i32, i32
  }
  func.func @transform_3(%arg0: i32) -> (i32, i32) {
    %c0_i32 = arith.constant 0 : i32
    %c0_i32_0 = arith.constant 0 : i32
    %c0_i32_1 = arith.constant 0 : i32
    return %c0_i32, %c0_i32_0 : i32, i32
  }
  func.func @transform_4(%arg0: i32) -> (i32, i32) {
    %c0_i32 = arith.constant 0 : i32
    %c0_i32_0 = arith.constant 0 : i32
    %c0_i32_1 = arith.constant 0 : i32
    return %c0_i32, %c0_i32_0 : i32, i32
  }
  func.func @transform_5(%arg0: i32) -> (i32, i32) {
    %c0_i32 = arith.constant 0 : i32
    %c0_i32_0 = arith.constant 0 : i32
    %c0_i32_1 = arith.constant 0 : i32
    return %c0_i32, %c0_i32_0 : i32, i32
  }
  func.func @transform_6(%arg0: i32) -> (i32, i32) {
    %c0_i32 = arith.constant 0 : i32
    %c0_i32_0 = arith.constant 0 : i32
    %c0_i32_1 = arith.constant 0 : i32
    return %c0_i32, %c0_i32_0 : i32, i32
  }
  func.func @transform_7(%arg0: i32) -> (i32, i32) {
    %c0_i32 = arith.constant 0 : i32
    %c0_i32_0 = arith.constant 0 : i32
    %c0_i32_1 = arith.constant 0 : i32
    return %c0_i32, %c0_i32_0 : i32, i32
  }
  func.func @transform_8(%arg0: i32) -> (i32, i32) {
    %c0_i32 = arith.constant 0 : i32
    %c0_i32_0 = arith.constant 0 : i32
    %c0_i32_1 = arith.constant 0 : i32
    return %c0_i32, %c0_i32_0 : i32, i32
  }
  func.func @transform_9(%arg0: i32) -> (i32, i32) {
    %c0_i32 = arith.constant 0 : i32
    %c0_i32_0 = arith.constant 0 : i32
    %c0_i32_1 = arith.constant 0 : i32
    return %c0_i32, %c0_i32_0 : i32, i32
  }
}

</mosaic_0001>

<llo_original>
// kernel: tpu_custom_call.1
$region0: #{tpu_custom_call.1}
  #allocation0 [shape = 'u32[]', space=smem, size = 0x4, offset = 0x4, fixed_abs, tag = 'smem constant byte address 0x4 - core index']
  #allocation1 [shape = 'u32[144,128]{1,0:T(1,128)}', space=vmem, size = 0x12000, scoped, tag = 'internal scratch']
  %s0 = inlined_call_operand.hbm [shape: f32[64,1024], index: 0, kind: input, shape index: {}]
  %s1 = inlined_call_operand.hbm [shape: f32[1,1024], index: 1, kind: input, shape index: {}]
  %s2 = inlined_call_operand.hbm [shape: f32[1,1024], index: 2, kind: input, shape index: {}]
  %s3 = inlined_call_operand.hbm [shape: bf16[1024,512], index: 3, kind: input, shape index: {}]
  %s4 = inlined_call_operand.vmem [shape: f32[1,512], index: 4, kind: input, shape index: {}]
  %s5 = inlined_call_operand.hbm [shape: bf16[512,256], index: 5, kind: input, shape index: {}]
  %s6 = inlined_call_operand.vmem [shape: f32[1,256], index: 6, kind: input, shape index: {}]
  %s7 = inlined_call_operand.hbm [shape: bf16[256,1024], index: 7, kind: input, shape index: {}]
  %s8 = inlined_call_operand.vmem [shape: f32[1,1024], index: 8, kind: input, shape index: {}]
  %s9 = inlined_call_operand.hbm [shape: f32[64,1024], index: 9, kind: output, shape index: {}]
  %s10 = sld [smem:[#allocation0]]
  $region70: #{tpu_custom_call.1} parent=0
    _
  %s12 = ssub.s32 1, %s10
  %s13 = scalar_select 0, %s12, %s10
  $region1: #{tpu_custom_call.1} parent=0
    #allocation2 [shape = 'u8[262144]{0}', space=vmem, size = 0x40000, scoped, tag = 'input window, operand 0, single buffered']
    #allocation3 [shape = 's32[1]{0}', space=sflag, size = 0x4, scoped, tag = 'scoped memory for tpu_custom_call.1']
    #allocation4 [shape = 's32[1]{0}', space=sflag, size = 0x4, scoped, tag = 'scoped memory for tpu_custom_call.1']
    #allocation5 [shape = 'u8[4096]{0}', space=vmem, size = 0x1000, scoped, tag = 'input window, operand 1, single buffered']
    #allocation6 [shape = 's32[1]{0}', space=sflag, size = 0x4, scoped, tag = 'scoped memory for tpu_custom_call.1']
    #allocation7 [shape = 'u8[4096]{0}', space=vmem, size = 0x1000, scoped, tag = 'input window, operand 2, single buffered']
    #allocation8 [shape = 'u8[1048576]{0}', space=vmem, size = 0x100000, scoped, tag = 'input window, operand 3, single buffered']
    #allocation9 [shape = 's32[1]{0}', space=sflag, size = 0x4, scoped, tag = 'scoped memory for tpu_custom_call.1']
    #allocation10 [shape = 'u8[262144]{0}', space=vmem, size = 0x40000, scoped, tag = 'input window, operand 5, single buffered']
    #allocation11 [shape = 'u8[524288]{0}', space=vmem, size = 0x80000, scoped, tag = 'input window, operand 7, single buffered']
    #allocation12 [shape = 's32[1]{0}', space=sflag, size = 0x4, scoped, tag = 'scoped memory for tpu_custom_call.1']
    #allocation13 [shape = 'u8[262144]{0}', space=vmem, size = 0x40000, scoped, tag = 'output window, operand 0, single buffered']
    %14 = vsyncpa [#allocation3], 0
    %15 = vsyncpa [#allocation6], 0
    %16 = vsyncpa [#allocation9], 0
    %17 = vsyncpa [#allocation12], 0
    %18 = vsyncpa [#allocation4], 0
    // Predicated region
    $region2: #{tpu_custom_call.1} parent=1 // pred_check
      _
    $region3: #{tpu_custom_call.1} parent=1 // pred_check_branch
      %20 = sbr.rel (0) target = $region5
    $region4: #{tpu_custom_call.1} parent=1 // pred_region
      %s22 = ssub.s32 8192, 8192
      %23 = vsyncadd [#allocation3], %s22
      %s24 = sshll.u32 [#allocation2], 4
      %s25 = int_to_ptr.vmem [resolvable:$true] %s24
      %30 = dma.hbm_to_vmem [thread:$0]  %s0, 8192, %s25, [#allocation3], 1024, 1024, 64
    $region5: #{tpu_custom_call.1} parent=1 // pred_fallthru
      _
    // Predicated region
    $region6: #{tpu_custom_call.1} parent=1 // pred_check
      _
    $region7: #{tpu_custom_call.1} parent=1 // pred_check_branch
      %32 = sbr.rel (0) target = $region9
    $region8: #{tpu_custom_call.1} parent=1 // pred_region
      %s34 = ssub.s32 128, 128
      %35 = vsyncadd [#allocation6], %s34
      %s37 = sshll.u32 [#allocation5], 4
      %s38 = int_to_ptr.vmem [resolvable:$true] %s37
      %40 = dma.hbm_to_vmem [thread:$0]  %s1, 128, %s38, [#allocation6]
    $region9: #{tpu_custom_call.1} parent=1 // pred_fallthru
      _
    // Predicated region
    $region10: #{tpu_custom_call.1} parent=1 // pred_check
      _
    $region11: #{tpu_custom_call.1} parent=1 // pred_check_branch
      %42 = sbr.rel (0) target = $region13
    $region12: #{tpu_custom_call.1} parent=1 // pred_region
      %s44 = ssub.s32 128, 128
      %45 = vsyncadd [#allocation6], %s44
      %s47 = sshll.u32 [#allocation7], 4
      %s48 = int_to_ptr.vmem [resolvable:$true] %s47
      %50 = dma.hbm_to_vmem [thread:$0]  %s2, 128, %s48, [#allocation6]
    $region13: #{tpu_custom_call.1} parent=1 // pred_fallthru
      _
    // Predicated region
    $region14: #{tpu_custom_call.1} parent=1 // pred_check
      _
    $region15: #{tpu_custom_call.1} parent=1 // pred_check_branch
      %52 = sbr.rel (0) target = $region17
    $region16: #{tpu_custom_call.1} parent=1 // pred_region
      %s54 = ssub.s32 32768, 32768
      %55 = vsyncadd [#allocation9], %s54
      %s56 = sshll.u32 [#allocation8], 4
      %s57 = int_to_ptr.vmem [resolvable:$true] %s56
      %62 = dma.hbm_to_vmem [thread:$0]  %s3, 32768, %s57, [#allocation9], 256, 256, 16
    $region17: #{tpu_custom_call.1} parent=1 // pred_fallthru
      _
    // Predicated region
    $region18: #{tpu_custom_call.1} parent=1 // pred_check
      _
    $region19: #{tpu_custom_call.1} parent=1 // pred_check_branch
      %64 = sbr.rel (0) target = $region21
    $region20: #{tpu_custom_call.1} parent=1 // pred_region
      _
    $region21: #{tpu_custom_call.1} parent=1 // pred_fallthru
      _
    // Predicated region
    $region22: #{tpu_custom_call.1} parent=1 // pred_check
      _
    $region23: #{tpu_custom_call.1} parent=1 // pred_check_branch
      %66 = sbr.rel (0) target = $region25
    $region24: #{tpu_custom_call.1} parent=1 // pred_region
      %s68 = ssub.s32 8192, 8192
      %69 = vsyncadd [#allocation9], %s68
      %s70 = sshll.u32 [#allocation10], 4
      %s71 = int_to_ptr.vmem [resolvable:$true] %s70
      %76 = dma.hbm_to_vmem [thread:$0]  %s5, 8192, %s71, [#allocation9], 128, 128, 8
    $region25: #{tpu_custom_call.1} parent=1 // pred_fallthru
      _
    // Predicated region
    $region26: #{tpu_custom_call.1} parent=1 // pred_check
      _
    $region27: #{tpu_custom_call.1} parent=1 // pred_check_branch
      %78 = sbr.rel (0) target = $region29
    $region28: #{tpu_custom_call.1} parent=1 // pred_region
      _
    $region29: #{tpu_custom_call.1} parent=1 // pred_fallthru
      _
    // Predicated region
    $region30: #{tpu_custom_call.1} parent=1 // pred_check
      _
    $region31: #{tpu_custom_call.1} parent=1 // pred_check_branch
      %80 = sbr.rel (0) target = $region33
    $region32: #{tpu_custom_call.1} parent=1 // pred_region
      %s82 = ssub.s32 16384, 16384
      %83 = vsyncadd [#allocation12], %s82
      %s84 = sshll.u32 [#allocation11], 4
      %s85 = int_to_ptr.vmem [resolvable:$true] %s84
      %90 = dma.hbm_to_vmem [thread:$0]  %s7, 16384, %s85, [#allocation12], 512, 512, 32
    $region33: #{tpu_custom_call.1} parent=1 // pred_fallthru
      _
    // Predicated region
    $region34: #{tpu_custom_call.1} parent=1 // pred_check
      _
    $region35: #{tpu_custom_call.1} parent=1 // pred_check_branch
      %92 = sbr.rel (0) target = $region37
    $region36: #{tpu_custom_call.1} parent=1 // pred_region
      _
    $region37: #{tpu_custom_call.1} parent=1 // pred_fallthru
      _
    // Predicated region
    $region38: #{tpu_custom_call.1} parent=1 // pred_check
      _
    $region39: #{tpu_custom_call.1} parent=1 // pred_check_branch
      %94 = sbr.rel (0) target = $region41
    $region40: #{tpu_custom_call.1} parent=1 // pred_region
      %95 = dma.done [#allocation3], 8192
    $region41: #{tpu_custom_call.1} parent=1 // pred_fallthru
      _
    // Predicated region
    $region42: #{tpu_custom_call.1} parent=1 // pred_check
      _
    $region43: #{tpu_custom_call.1} parent=1 // pred_check_branch
      %97 = sbr.rel (0) target = $region45
    $region44: #{tpu_custom_call.1} parent=1 // pred_region
      %98 = dma.done [#allocation6], 128
    $region45: #{tpu_custom_call.1} parent=1 // pred_fallthru
      _
    // Predicated region
    $region46: #{tpu_custom_call.1} parent=1 // pred_check
      _
    $region47: #{tpu_custom_call.1} parent=1 // pred_check_branch
      %100 = sbr.rel (0) target = $region49
    $region48: #{tpu_custom_call.1} parent=1 // pred_region
      %101 = dma.done [#allocation6], 128
    $region49: #{tpu_custom_call.1} parent=1 // pred_fallthru
      _
    // Predicated region
    $region50: #{tpu_custom_call.1} parent=1 // pred_check
      _
    $region51: #{tpu_custom_call.1} parent=1 // pred_check_branch
      %103 = sbr.rel (0) target = $region53
    $region52: #{tpu_custom_call.1} parent=1 // pred_region
      %104 = dma.done [#allocation9], 32768
    $region53: #{tpu_custom_call.1} parent=1 // pred_fallthru
      _
    // Predicated region
    $region54: #{tpu_custom_call.1} parent=1 // pred_check
      _
    $region55: #{tpu_custom_call.1} parent=1 // pred_check_branch
      %106 = sbr.rel (0) target = $region57
    $region56: #{tpu_custom_call.1} parent=1 // pred_region
      %107 = dma.done [#allocation9], 8192
    $region57: #{tpu_custom_call.1} parent=1 // pred_fallthru
      _
    // Predicated region
    $region58: #{tpu_custom_call.1} parent=1 // pred_check
      _
    $region59: #{tpu_custom_call.1} parent=1 // pred_check_branch
      %109 = sbr.rel (0) target = $region61
    $region60: #{tpu_custom_call.1} parent=1 // pred_region
      %110 = dma.done [#allocation12], 16384
    $region61: #{tpu_custom_call.1} parent=1 // pred_fallthru
      _
    %v111 = vld [vmem:[#allocation2] sm:$0xff]
    %v112 = vld [vmem:[#allocation2 + $0x8] sm:$0xff]
    %v113 = vld [vmem:[#allocation2 + $0x10] sm:$0xff]
    %v114 = vld [vmem:[#allocation2 + $0x18] sm:$0xff]
    %v115 = vld [vmem:[#allocation2 + $0x20] sm:$0xff]
    %v116 = vld [vmem:[#allocation2 + $0x28] sm:$0xff]
    %v117 = vld [vmem:[#allocation2 + $0x30] sm:$0xff]
    %v118 = vld [vmem:[#allocation2 + $0x38] sm:$0xff]
    %v119 = vld [vmem:[#allocation2 + $0x40] sm:$0xff]
    %v120 = vld [vmem:[#allocation2 + $0x48] sm:$0xff]
    %v121 = vld [vmem:[#allocation2 + $0x50] sm:$0xff]
    %v122 = vld [vmem:[#allocation2 + $0x58] sm:$0xff]
    %v123 = vld [vmem:[#allocation2 + $0x60] sm:$0xff]
    %v124 = vld [vmem:[#allocation2 + $0x68] sm:$0xff]
    %v125 = vld [vmem:[#allocation2 + $0x70] sm:$0xff]
    %v126 = vld [vmem:[#allocation2 + $0x78] sm:$0xff]
    %v127 = vld [vmem:[#allocation2 + $0x80] sm:$0xff]
    %v128 = vld [vmem:[#allocation2 + $0x88] sm:$0xff]
    %v129 = vld [vmem:[#allocation2 + $0x90] sm:$0xff]
    %v130 = vld [vmem:[#allocation2 + $0x98] sm:$0xff]
    %v131 = vld [vmem:[#allocation2 + $0xa0] sm:$0xff]
    %v132 = vld [vmem:[#allocation2 + $0xa8] sm:$0xff]
    %v133 = vld [vmem:[#allocation2 + $0xb0] sm:$0xff]
    %v134 = vld [vmem:[#allocation2 + $0xb8] sm:$0xff]
    %v135 = vld [vmem:[#allocation2 + $0xc0] sm:$0xff]
    %v136 = vld [vmem:[#allocation2 + $0xc8] sm:$0xff]
    %v137 = vld [vmem:[#allocation2 + $0xd0] sm:$0xff]
    %v138 = vld [vmem:[#allocation2 + $0xd8] sm:$0xff]
    %v139 = vld [vmem:[#allocation2 + $0xe0] sm:$0xff]
    %v140 = vld [vmem:[#allocation2 + $0xe8] sm:$0xff]
    %v141 = vld [vmem:[#allocation2 + $0xf0] sm:$0xff]
    %v142 = vld [vmem:[#allocation2 + $0xf8] sm:$0xff]
    %v143 = vld [vmem:[#allocation2 + $0x100] sm:$0xff]
    %v144 = vld [vmem:[#allocation2 + $0x108] sm:$0xff]
    %v145 = vld [vmem:[#allocation2 + $0x110] sm:$0xff]
    %v146 = vld [vmem:[#allocation2 + $0x118] sm:$0xff]
    %v147 = vld [vmem:[#allocation2 + $0x120] sm:$0xff]
    %v148 = vld [vmem:[#allocation2 + $0x128] sm:$0xff]
    %v149 = vld [vmem:[#allocation2 + $0x130] sm:$0xff]
    %v150 = vld [vmem:[#allocation2 + $0x138] sm:$0xff]
    %v151 = vld [vmem:[#allocation2 + $0x140] sm:$0xff]
    %v152 = vld [vmem:[#allocation2 + $0x148] sm:$0xff]
    %v153 = vld [vmem:[#allocation2 + $0x150] sm:$0xff]
    %v154 = vld [vmem:[#allocation2 + $0x158] sm:$0xff]
    %v155 = vld [vmem:[#allocation2 + $0x160] sm:$0xff]
    %v156 = vld [vmem:[#allocation2 + $0x168] sm:$0xff]
    %v157 = vld [vmem:[#allocation2 + $0x170] sm:$0xff]
    %v158 = vld [vmem:[#allocation2 + $0x178] sm:$0xff]
    %v159 = vld [vmem:[#allocation2 + $0x180] sm:$0xff]
    %v160 = vld [vmem:[#allocation2 + $0x188] sm:$0xff]
    %v161 = vld [vmem:[#allocation2 + $0x190] sm:$0xff]
    %v162 = vld [vmem:[#allocation2 + $0x198] sm:$0xff]
    %v163 = vld [vmem:[#allocation2 + $0x1a0] sm:$0xff]
    %v164 = vld [vmem:[#allocation2 + $0x1a8] sm:$0xff]
    %v165 = vld [vmem:[#allocation2 + $0x1b0] sm:$0xff]
    %v166 = vld [vmem:[#allocation2 + $0x1b8] sm:$0xff]
    %v167 = vld [vmem:[#allocation2 + $0x1c0] sm:$0xff]
    %v168 = vld [vmem:[#allocation2 + $0x1c8] sm:$0xff]
    %v169 = vld [vmem:[#allocation2 + $0x1d0] sm:$0xff]
    %v170 = vld [vmem:[#allocation2 + $0x1d8] sm:$0xff]
    %v171 = vld [vmem:[#allocation2 + $0x1e0] sm:$0xff]
    %v172 = vld [vmem:[#allocation2 + $0x1e8] sm:$0xff]
    %v173 = vld [vmem:[#allocation2 + $0x1f0] sm:$0xff]
    %v174 = vld [vmem:[#allocation2 + $0x1f8] sm:$0xff]
    %v175 = vadd.f32 %v111, %v119
    %v176 = vadd.f32 %v175, %v127
    %v177 = vadd.f32 %v176, %v135
    %v178 = vadd.f32 %v177, %v143
    %v179 = vadd.f32 %v178, %v151
    %v180 = vadd.f32 %v179, %v159
    %v181 = vadd.f32 %v180, %v167
    %v182 = vrot.slane %v181, 4
    %v183 = vadd.f32 %v181, %v182
    %v184 = vrot.slane %v183, 2
    %v185 = vadd.f32 %v183, %v184
    %v186 = vrot.slane %v185, 1
    %v187 = vadd.f32 %v185, %v186
    %v188 = vadd.f32 %v112, %v120
    %v189 = vadd.f32 %v188, %v128
    %v190 = vadd.f32 %v189, %v136
    %v191 = vadd.f32 %v190, %v144
    %v192 = vadd.f32 %v191, %v152
    %v193 = vadd.f32 %v192, %v160
    %v194 = vadd.f32 %v193, %v168
    %v195 = vrot.slane %v194, 4
    %v196 = vadd.f32 %v194, %v195
    %v197 = vrot.slane %v196, 2
    %v198 = vadd.f32 %v196, %v197
    %v199 = vrot.slane %v198, 1
    %v200 = vadd.f32 %v198, %v199
    %v201 = vadd.f32 %v113, %v121
    %v202 = vadd.f32 %v201, %v129
    %v203 = vadd.f32 %v202, %v137
    %v204 = vadd.f32 %v203, %v145
    %v205 = vadd.f32 %v204, %v153
    %v206 = vadd.f32 %v205, %v161
    %v207 = vadd.f32 %v206, %v169
    %v208 = vrot.slane %v207, 4
    %v209 = vadd.f32 %v207, %v208
    %v210 = vrot.slane %v209, 2
    %v211 = vadd.f32 %v209, %v210
    %v212 = vrot.slane %v211, 1
    %v213 = vadd.f32 %v211, %v212
    %v214 = vadd.f32 %v114, %v122
    %v215 = vadd.f32 %v214, %v130
    %v216 = vadd.f32 %v215, %v138
    %v217 = vadd.f32 %v216, %v146
    %v218 = vadd.f32 %v217, %v154
    %v219 = vadd.f32 %v218, %v162
    %v220 = vadd.f32 %v219, %v170
    %v221 = vrot.slane %v220, 4
    %v222 = vadd.f32 %v220, %v221
    %v223 = vrot.slane %v222, 2
    %v224 = vadd.f32 %v222, %v223
    %v225 = vrot.slane %v224, 1
    %v226 = vadd.f32 %v224, %v225
    %v227 = vadd.f32 %v115, %v123
    %v228 = vadd.f32 %v227, %v131
    %v229 = vadd.f32 %v228, %v139
    %v230 = vadd.f32 %v229, %v147
    %v231 = vadd.f32 %v230, %v155
    %v232 = vadd.f32 %v231, %v163
    %v233 = vadd.f32 %v232, %v171
    %v234 = vrot.slane %v233, 4
    %v235 = vadd.f32 %v233, %v234
    %v236 = vrot.slane %v235, 2
    %v237 = vadd.f32 %v235, %v236
    %v238 = vrot.slane %v237, 1
    %v239 = vadd.f32 %v237, %v238
    %v240 = vadd.f32 %v116, %v124
    %v241 = vadd.f32 %v240, %v132
    %v242 = vadd.f32 %v241, %v140
    %v243 = vadd.f32 %v242, %v148
    %v244 = vadd.f32 %v243, %v156
    %v245 = vadd.f32 %v244, %v164
    %v246 = vadd.f32 %v245, %v172
    %v247 = vrot.slane %v246, 4
    %v248 = vadd.f32 %v246, %v247
    %v249 = vrot.slane %v248, 2
    %v250 = vadd.f32 %v248, %v249
    %v251 = vrot.slane %v250, 1
    %v252 = vadd.f32 %v250, %v251
    %v253 = vadd.f32 %v117, %v125
    %v254 = vadd.f32 %v253, %v133
    %v255 = vadd.f32 %v254, %v141
    %v256 = vadd.f32 %v255, %v149
    %v257 = vadd.f32 %v256, %v157
    %v258 = vadd.f32 %v257, %v165
    %v259 = vadd.f32 %v258, %v173
    %v260 = vrot.slane %v259, 4
    %v261 = vadd.f32 %v259, %v260
    %v262 = vrot.slane %v261, 2
    %v263 = vadd.f32 %v261, %v262
    %v264 = vrot.slane %v263, 1
    %v265 = vadd.f32 %v263, %v264
    %v266 = vadd.f32 %v118, %v126
    %v267 = vadd.f32 %v266, %v134
    %v268 = vadd.f32 %v267, %v142
    %v269 = vadd.f32 %v268, %v150
    %v270 = vadd.f32 %v269, %v158
    %v271 = vadd.f32 %v270, %v166
    %v272 = vadd.f32 %v271, %v174
    %v273 = vrot.slane %v272, 4
    %v274 = vadd.f32 %v272, %v273
    %v275 = vrot.slane %v274, 2
    %v276 = vadd.f32 %v274, %v275
    %v277 = vrot.slane %v276, 1
    %v278 = vadd.f32 %v276, %v277
    %v279 = vmul.f32 %v187, 0.015625
    %v280 = vmul.f32 %v200, 0.015625
    %v281 = vmul.f32 %v213, 0.015625
    %v282 = vmul.f32 %v226, 0.015625
    %v283 = vmul.f32 %v239, 0.015625
    %v284 = vmul.f32 %v252, 0.015625
    %v285 = vmul.f32 %v265, 0.015625
    %v286 = vmul.f32 %v278, 0.015625
    %v287 = vsub.f32 %v111, %v279
    %v288 = vsub.f32 %v112, %v280
    %v289 = vsub.f32 %v113, %v281
    %v290 = vsub.f32 %v114, %v282
    %v291 = vsub.f32 %v115, %v283
    %v292 = vsub.f32 %v116, %v284
    %v293 = vsub.f32 %v117, %v285
    %v294 = vsub.f32 %v118, %v286
    %v295 = vsub.f32 %v119, %v279
    %v296 = vsub.f32 %v120, %v280
    %v297 = vsub.f32 %v121, %v281
    %v298 = vsub.f32 %v122, %v282
    %v299 = vsub.f32 %v123, %v283
    %v300 = vsub.f32 %v124, %v284
    %v301 = vsub.f32 %v125, %v285
    %v302 = vsub.f32 %v126, %v286
    %v303 = vsub.f32 %v127, %v279
    %v304 = vsub.f32 %v128, %v280
    %v305 = vsub.f32 %v129, %v281
    %v306 = vsub.f32 %v130, %v282
    %v307 = vsub.f32 %v131, %v283
    %v308 = vsub.f32 %v132, %v284
    %v309 = vsub.f32 %v133, %v285
    %v310 = vsub.f32 %v134, %v286
    %v311 = vsub.f32 %v135, %v279
    %v312 = vsub.f32 %v136, %v280
    %v313 = vsub.f32 %v137, %v281
    %v314 = vsub.f32 %v138, %v282
    %v315 = vsub.f32 %v139, %v283
    %v316 = vsub.f32 %v140, %v284
    %v317 = vsub.f32 %v141, %v285
    %v318 = vsub.f32 %v142, %v286
    %v319 = vsub.f32 %v143, %v279
    %v320 = vsub.f32 %v144, %v280
    %v321 = vsub.f32 %v145, %v281
    %v322 = vsub.f32 %v146, %v282
    %v323 = vsub.f32 %v147, %v283
    %v324 = vsub.f32 %v148, %v284
    %v325 = vsub.f32 %v149, %v285
    %v326 = vsub.f32 %v150, %v286
    %v327 = vsub.f32 %v151, %v279
    %v328 = vsub.f32 %v152, %v280
    %v329 = vsub.f32 %v153, %v281
    %v330 = vsub.f32 %v154, %v282
    %v331 = vsub.f32 %v155, %v283
    %v332 = vsub.f32 %v156, %v284
    %v333 = vsub.f32 %v157, %v285
    %v334 = vsub.f32 %v158, %v286
    %v335 = vsub.f32 %v159, %v279
    %v336 = vsub.f32 %v160, %v280
    %v337 = vsub.f32 %v161, %v281
    %v338 = vsub.f32 %v162, %v282
    %v339 = vsub.f32 %v163, %v283
    %v340 = vsub.f32 %v164, %v284
    %v341 = vsub.f32 %v165, %v285
    %v342 = vsub.f32 %v166, %v286
    %v343 = vsub.f32 %v167, %v279
    %v344 = vsub.f32 %v168, %v280
    %v345 = vsub.f32 %v169, %v281
    %v346 = vsub.f32 %v170, %v282
    %v347 = vsub.f32 %v171, %v283
    %v348 = vsub.f32 %v172, %v284
    %v349 = vsub.f32 %v173, %v285
    %v350 = vsub.f32 %v174, %v286
    %v351 = vmul.f32 %v287, %v287
    %v352 = vmul.f32 %v288, %v288
    %v353 = vmul.f32 %v289, %v289
    %v354 = vmul.f32 %v290, %v290
    %v355 = vmul.f32 %v291, %v291
    %v356 = vmul.f32 %v292, %v292
    %v357 = vmul.f32 %v293, %v293
    %v358 = vmul.f32 %v294, %v294
    %v359 = vmul.f32 %v295, %v295
    %v360 = vmul.f32 %v296, %v296
    %v361 = vmul.f32 %v297, %v297
    %v362 = vmul.f32 %v298, %v298
    %v363 = vmul.f32 %v299, %v299
    %v364 = vmul.f32 %v300, %v300
    %v365 = vmul.f32 %v301, %v301
    %v366 = vmul.f32 %v302, %v302
    %v367 = vmul.f32 %v303, %v303
    %v368 = vmul.f32 %v304, %v304
    %v369 = vmul.f32 %v305, %v305
    %v370 = vmul.f32 %v306, %v306
    %v371 = vmul.f32 %v307, %v307
    %v372 = vmul.f32 %v308, %v308
    %v373 = vmul.f32 %v309, %v309
    %v374 = vmul.f32 %v310, %v310
    %v375 = vmul.f32 %v311, %v311
    %v376 = vmul.f32 %v312, %v312
    %v377 = vmul.f32 %v313, %v313
    %v378 = vmul.f32 %v314, %v314
    %v379 = vmul.f32 %v315, %v315
    %v380 = vmul.f32 %v316, %v316
    %v381 = vmul.f32 %v317, %v317
    %v382 = vmul.f32 %v318, %v318
    %v383 = vmul.f32 %v319, %v319
    %v384 = vmul.f32 %v320, %v320
    %v385 = vmul.f32 %v321, %v321
    %v386 = vmul.f32 %v322, %v322
    %v387 = vmul.f32 %v323, %v323
    %v388 = vmul.f32 %v324, %v324
    %v389 = vmul.f32 %v325, %v325
    %v390 = vmul.f32 %v326, %v326
    %v391 = vmul.f32 %v327, %v327
    %v392 = vmul.f32 %v328, %v328
    %v393 = vmul.f32 %v329, %v329
    %v394 = vmul.f32 %v330, %v330
    %v395 = vmul.f32 %v331, %v331
    %v396 = vmul.f32 %v332, %v332
    %v397 = vmul.f32 %v333, %v333
    %v398 = vmul.f32 %v334, %v334
    %v399 = vmul.f32 %v335, %v335
    %v400 = vmul.f32 %v336, %v336
    %v401 = vmul.f32 %v337, %v337
    %v402 = vmul.f32 %v338, %v338
    %v403 = vmul.f32 %v339, %v339
    %v404 = vmul.f32 %v340, %v340
    %v405 = vmul.f32 %v341, %v341
    %v406 = vmul.f32 %v342, %v342
    %v407 = vmul.f32 %v343, %v343
    %v408 = vmul.f32 %v344, %v344
    %v409 = vmul.f32 %v345, %v345
    %v410 = vmul.f32 %v346, %v346
    %v411 = vmul.f32 %v347, %v347
    %v412 = vmul.f32 %v348, %v348
    %v413 = vmul.f32 %v349, %v349
    %v414 = vmul.f32 %v350, %v350
    %v415 = vadd.f32 %v351, %v359
    %v416 = vadd.f32 %v415, %v367
    %v417 = vadd.f32 %v416, %v375
    %v418 = vadd.f32 %v417, %v383
    %v419 = vadd.f32 %v418, %v391
    %v420 = vadd.f32 %v419, %v399
    %v421 = vadd.f32 %v420, %v407
    %v422 = vrot.slane %v421, 4
    %v423 = vadd.f32 %v421, %v422
    %v424 = vrot.slane %v423, 2
    %v425 = vadd.f32 %v423, %v424
    %v426 = vrot.slane %v425, 1
    %v427 = vadd.f32 %v425, %v426
    %v428 = vadd.f32 %v352, %v360
    %v429 = vadd.f32 %v428, %v368
    %v430 = vadd.f32 %v429, %v376
    %v431 = vadd.f32 %v430, %v384
    %v432 = vadd.f32 %v431, %v392
    %v433 = vadd.f32 %v432, %v400
    %v434 = vadd.f32 %v433, %v408
    %v435 = vrot.slane %v434, 4
    %v436 = vadd.f32 %v434, %v435
    %v437 = vrot.slane %v436, 2
    %v438 = vadd.f32 %v436, %v437
    %v439 = vrot.slane %v438, 1
    %v440 = vadd.f32 %v438, %v439
    %v441 = vadd.f32 %v353, %v361
    %v442 = vadd.f32 %v441, %v369
    %v443 = vadd.f32 %v442, %v377
    %v444 = vadd.f32 %v443, %v385
    %v445 = vadd.f32 %v444, %v393
    %v446 = vadd.f32 %v445, %v401
    %v447 = vadd.f32 %v446, %v409
    %v448 = vrot.slane %v447, 4
    %v449 = vadd.f32 %v447, %v448
    %v450 = vrot.slane %v449, 2
    %v451 = vadd.f32 %v449, %v450
    %v452 = vrot.slane %v451, 1
    %v453 = vadd.f32 %v451, %v452
    %v454 = vadd.f32 %v354, %v362
    %v455 = vadd.f32 %v454, %v370
    %v456 = vadd.f32 %v455, %v378
    %v457 = vadd.f32 %v456, %v386
    %v458 = vadd.f32 %v457, %v394
    %v459 = vadd.f32 %v458, %v402
    %v460 = vadd.f32 %v459, %v410
    %v461 = vrot.slane %v460, 4
    %v462 = vadd.f32 %v460, %v461
    %v463 = vrot.slane %v462, 2
    %v464 = vadd.f32 %v462, %v463
    %v465 = vrot.slane %v464, 1
    %v466 = vadd.f32 %v464, %v465
    %v467 = vadd.f32 %v355, %v363
    %v468 = vadd.f32 %v467, %v371
    %v469 = vadd.f32 %v468, %v379
    %v470 = vadd.f32 %v469, %v387
    %v471 = vadd.f32 %v470, %v395
    %v472 = vadd.f32 %v471, %v403
    %v473 = vadd.f32 %v472, %v411
    %v474 = vrot.slane %v473, 4
    %v475 = vadd.f32 %v473, %v474
    %v476 = vrot.slane %v475, 2
    %v477 = vadd.f32 %v475, %v476
    %v478 = vrot.slane %v477, 1
    %v479 = vadd.f32 %v477, %v478
    %v480 = vadd.f32 %v356, %v364
    %v481 = vadd.f32 %v480, %v372
    %v482 = vadd.f32 %v481, %v380
    %v483 = vadd.f32 %v482, %v388
    %v484 = vadd.f32 %v483, %v396
    %v485 = vadd.f32 %v484, %v404
    %v486 = vadd.f32 %v485, %v412
    %v487 = vrot.slane %v486, 4
    %v488 = vadd.f32 %v486, %v487
    %v489 = vrot.slane %v488, 2
    %v490 = vadd.f32 %v488, %v489
    %v491 = vrot.slane %v490, 1
    %v492 = vadd.f32 %v490, %v491
    %v493 = vadd.f32 %v357, %v365
    %v494 = vadd.f32 %v493, %v373
    %v495 = vadd.f32 %v494, %v381
    %v496 = vadd.f32 %v495, %v389
    %v497 = vadd.f32 %v496, %v397
    %v498 = vadd.f32 %v497, %v405
    %v499 = vadd.f32 %v498, %v413
    %v500 = vrot.slane %v499, 4
    %v501 = vadd.f32 %v499, %v500
    %v502 = vrot.slane %v501, 2
    %v503 = vadd.f32 %v501, %v502
    %v504 = vrot.slane %v503, 1
    %v505 = vadd.f32 %v503, %v504
    %v506 = vadd.f32 %v358, %v366
    %v507 = vadd.f32 %v506, %v374
    %v508 = vadd.f32 %v507, %v382
    %v509 = vadd.f32 %v508, %v390
    %v510 = vadd.f32 %v509, %v398
    %v511 = vadd.f32 %v510, %v406
    %v512 = vadd.f32 %v511, %v414
    %v513 = vrot.slane %v512, 4
    %v514 = vadd.f32 %v512, %v513
    %v515 = vrot.slane %v514, 2
    %v516 = vadd.f32 %v514, %v515
    %v517 = vrot.slane %v516, 1
    %v518 = vadd.f32 %v516, %v517
    %v519 = vmul.f32 %v427, 0.015625
    %v520 = vmul.f32 %v440, 0.015625
    %v521 = vmul.f32 %v453, 0.015625
    %v522 = vmul.f32 %v466, 0.015625
    %v523 = vmul.f32 %v479, 0.015625
    %v524 = vmul.f32 %v492, 0.015625
    %v525 = vmul.f32 %v505, 0.015625
    %v526 = vmul.f32 %v518, 0.015625
    %v527 = vld [vmem:[#allocation5] sm:$0xff]
    %v528 = vadd.f32 %v519, 1e-05
    %v529 = vadd.f32 %v520, 1e-05
    %v530 = vadd.f32 %v521, 1e-05
    %v531 = vadd.f32 %v522, 1e-05
    %v532 = vadd.f32 %v523, 1e-05
    %v533 = vadd.f32 %v524, 1e-05
    %v534 = vadd.f32 %v525, 1e-05
    %v535 = vadd.f32 %v526, 1e-05
    %v536 = vrsqrt.pop %v528
    %v537 = vrsqrt.pop %v529
    %v538 = vrsqrt.pop %v530
    %v539 = vrsqrt.pop %v531
    %v540 = vrsqrt.pop %v532
    %v541 = vrsqrt.pop %v533
    %v542 = vrsqrt.pop %v534
    %v543 = vrsqrt.pop %v535
    %v552 = vcombine.low %v536, %v537
    %v553 = vcombine.low %v538, %v539
    %v554 = vcombine.low %v540, %v541
    %v555 = vcombine.low %v542, %v543
    %v557 = vunpack.c.l.s4 1966171168
    %v558 = vunpack.c.0.s8 %v557
    %v559 = vlaneseq
    %v560 = vshrl.u32 %v559, 7
    %v561 = vsub.s32 %v558, %v560
    %v562 = vrot.slane %v552, %v561
    %v564 = vunpack.c.l.s4 1966171168
    %v565 = vunpack.c.0.s8 %v564
    %v566 = vlaneseq
    %v567 = vshrl.u32 %v566, 7
    %v568 = vsub.s32 %v565, %v567
    %v569 = vrot.slane %v553, %v568
    %v571 = vunpack.c.l.s4 1966171168
    %v572 = vunpack.c.0.s8 %v571
    %v573 = vlaneseq
    %v574 = vshrl.u32 %v573, 7
    %v575 = vsub.s32 %v572, %v574
    %v576 = vrot.slane %v554, %v575
    %v578 = vunpack.c.l.s4 1966171168
    %v579 = vunpack.c.0.s8 %v578
    %v580 = vlaneseq
    %v581 = vshrl.u32 %v580, 7
    %v582 = vsub.s32 %v579, %v581
    %v583 = vrot.slane %v555, %v582
    %v584 = vcombine.low %v562, %v569
    %v585 = vcombine.low %v576, %v583
    %v587 = vunpack.c.l.s4 1966171168
    %v588 = vunpack.c.0.s8 %v587
    %v589 = vlaneseq
    %v590 = vshrl.u32 %v589, 7
    %v591 = vsub.s32 %v588, %v590
    %v592 = vrot.slane %v584, %v591
    %v594 = vunpack.c.l.s4 1966171168
    %v595 = vunpack.c.0.s8 %v594
    %v596 = vlaneseq
    %v597 = vshrl.u32 %v596, 7
    %v598 = vsub.s32 %v595, %v597
    %v599 = vrot.slane %v585, %v598
    %v600 = vcombine.low %v592, %v599
    %v602 = vmul.f32 %v527, %v600
    %v604 = vlaneseq
    %v605 = vshrl.u32 %v604, 7
    %v606 = vsub.s32 0, %v605
    %v607 = vrot.slane %v602, %v606
    %v608 = vlaneseq
    %v609 = vshrl.u32 %v608, 7
    %v610 = vsub.s32 1, %v609
    %v611 = vrot.slane %v602, %v610
    %v612 = vlaneseq
    %v613 = vshrl.u32 %v612, 7
    %v614 = vsub.s32 2, %v613
    %v615 = vrot.slane %v602, %v614
    %v616 = vlaneseq
    %v617 = vshrl.u32 %v616, 7
    %v618 = vsub.s32 3, %v617
    %v619 = vrot.slane %v602, %v618
    %v620 = vlaneseq
    %v621 = vshrl.u32 %v620, 7
    %v622 = vsub.s32 4, %v621
    %v623 = vrot.slane %v602, %v622
    %v624 = vlaneseq
    %v625 = vshrl.u32 %v624, 7
    %v626 = vsub.s32 5, %v625
    %v627 = vrot.slane %v602, %v626
    %v628 = vlaneseq
    %v629 = vshrl.u32 %v628, 7
    %v630 = vsub.s32 6, %v629
    %v631 = vrot.slane %v602, %v630
    %v632 = vlaneseq
    %v633 = vshrl.u32 %v632, 7
    %v634 = vsub.s32 7, %v633
    %v635 = vrot.slane %v602, %v634
    %v644 = vmul.f32 %v287, %v607
    %v645 = vmul.f32 %v288, %v611
    %v646 = vmul.f32 %v289, %v615
    %v647 = vmul.f32 %v290, %v619
    %v648 = vmul.f32 %v291, %v623
    %v649 = vmul.f32 %v292, %v627
    %v650 = vmul.f32 %v293, %v631
    %v651 = vmul.f32 %v294, %v635
    %v652 = vmul.f32 %v295, %v607
    %v653 = vmul.f32 %v296, %v611
    %v654 = vmul.f32 %v297, %v615
    %v655 = vmul.f32 %v298, %v619
    %v656 = vmul.f32 %v299, %v623
    %v657 = vmul.f32 %v300, %v627
    %v658 = vmul.f32 %v301, %v631
    %v659 = vmul.f32 %v302, %v635
    %v660 = vmul.f32 %v303, %v607
    %v661 = vmul.f32 %v304, %v611
    %v662 = vmul.f32 %v305, %v615
    %v663 = vmul.f32 %v306, %v619
    %v664 = vmul.f32 %v307, %v623
    %v665 = vmul.f32 %v308, %v627
    %v666 = vmul.f32 %v309, %v631
    %v667 = vmul.f32 %v310, %v635
    %v668 = vmul.f32 %v311, %v607
    %v669 = vmul.f32 %v312, %v611
    %v670 = vmul.f32 %v313, %v615
    %v671 = vmul.f32 %v314, %v619
    %v672 = vmul.f32 %v315, %v623
    %v673 = vmul.f32 %v316, %v627
    %v674 = vmul.f32 %v317, %v631
    %v675 = vmul.f32 %v318, %v635
    %v676 = vmul.f32 %v319, %v607
    %v677 = vmul.f32 %v320, %v611
    %v678 = vmul.f32 %v321, %v615
    %v679 = vmul.f32 %v322, %v619
    %v680 = vmul.f32 %v323, %v623
    %v681 = vmul.f32 %v324, %v627
    %v682 = vmul.f32 %v325, %v631
    %v683 = vmul.f32 %v326, %v635
    %v684 = vmul.f32 %v327, %v607
    %v685 = vmul.f32 %v328, %v611
    %v686 = vmul.f32 %v329, %v615
    %v687 = vmul.f32 %v330, %v619
    %v688 = vmul.f32 %v331, %v623
    %v689 = vmul.f32 %v332, %v627
    %v690 = vmul.f32 %v333, %v631
    %v691 = vmul.f32 %v334, %v635
    %v692 = vmul.f32 %v335, %v607
    %v693 = vmul.f32 %v336, %v611
    %v694 = vmul.f32 %v337, %v615
    %v695 = vmul.f32 %v338, %v619
    %v696 = vmul.f32 %v339, %v623
    %v697 = vmul.f32 %v340, %v627
    %v698 = vmul.f32 %v341, %v631
    %v699 = vmul.f32 %v342, %v635
    %v700 = vmul.f32 %v343, %v607
    %v701 = vmul.f32 %v344, %v611
    %v702 = vmul.f32 %v345, %v615
    %v703 = vmul.f32 %v346, %v619
    %v704 = vmul.f32 %v347, %v623
    %v705 = vmul.f32 %v348, %v627
    %v706 = vmul.f32 %v349, %v631
    %v707 = vmul.f32 %v350, %v635
    %v708 = vld [vmem:[#allocation7] sm:$0xff]
    %v710 = vlaneseq
    %v711 = vshrl.u32 %v710, 7
    %v712 = vsub.s32 0, %v711
    %v713 = vrot.slane %v708, %v712
    %v714 = vlaneseq
    %v715 = vshrl.u32 %v714, 7
    %v716 = vsub.s32 1, %v715
    %v717 = vrot.slane %v708, %v716
    %v718 = vlaneseq
    %v719 = vshrl.u32 %v718, 7
    %v720 = vsub.s32 2, %v719
    %v721 = vrot.slane %v708, %v720
    %v722 = vlaneseq
    %v723 = vshrl.u32 %v722, 7
    %v724 = vsub.s32 3, %v723
    %v725 = vrot.slane %v708, %v724
    %v726 = vlaneseq
    %v727 = vshrl.u32 %v726, 7
    %v728 = vsub.s32 4, %v727
    %v729 = vrot.slane %v708, %v728
    %v730 = vlaneseq
    %v731 = vshrl.u32 %v730, 7
    %v732 = vsub.s32 5, %v731
    %v733 = vrot.slane %v708, %v732
    %v734 = vlaneseq
    %v735 = vshrl.u32 %v734, 7
    %v736 = vsub.s32 6, %v735
    %v737 = vrot.slane %v708, %v736
    %v738 = vlaneseq
    %v739 = vshrl.u32 %v738, 7
    %v740 = vsub.s32 7, %v739
    %v741 = vrot.slane %v708, %v740
    %v750 = vadd.f32 %v644, %v713
    %v751 = vadd.f32 %v645, %v717
    %v752 = vadd.f32 %v646, %v721
    %v753 = vadd.f32 %v647, %v725
    %v754 = vadd.f32 %v648, %v729
    %v755 = vadd.f32 %v649, %v733
    %v756 = vadd.f32 %v650, %v737
    %v757 = vadd.f32 %v651, %v741
    %v758 = vadd.f32 %v652, %v713
    %v759 = vadd.f32 %v653, %v717
    %v760 = vadd.f32 %v654, %v721
    %v761 = vadd.f32 %v655, %v725
    %v762 = vadd.f32 %v656, %v729
    %v763 = vadd.f32 %v657, %v733
    %v764 = vadd.f32 %v658, %v737
    %v765 = vadd.f32 %v659, %v741
    %v766 = vadd.f32 %v660, %v713
    %v767 = vadd.f32 %v661, %v717
    %v768 = vadd.f32 %v662, %v721
    %v769 = vadd.f32 %v663, %v725
    %v770 = vadd.f32 %v664, %v729
    %v771 = vadd.f32 %v665, %v733
    %v772 = vadd.f32 %v666, %v737
    %v773 = vadd.f32 %v667, %v741
    %v774 = vadd.f32 %v668, %v713
    %v775 = vadd.f32 %v669, %v717
    %v776 = vadd.f32 %v670, %v721
    %v777 = vadd.f32 %v671, %v725
    %v778 = vadd.f32 %v672, %v729
    %v779 = vadd.f32 %v673, %v733
    %v780 = vadd.f32 %v674, %v737
    %v781 = vadd.f32 %v675, %v741
    %v782 = vadd.f32 %v676, %v713
    %v783 = vadd.f32 %v677, %v717
    %v784 = vadd.f32 %v678, %v721
    %v785 = vadd.f32 %v679, %v725
    %v786 = vadd.f32 %v680, %v729
    %v787 = vadd.f32 %v681, %v733
    %v788 = vadd.f32 %v682, %v737
    %v789 = vadd.f32 %v683, %v741
    %v790 = vadd.f32 %v684, %v713
    %v791 = vadd.f32 %v685, %v717
    %v792 = vadd.f32 %v686, %v721
    %v793 = vadd.f32 %v687, %v725
    %v794 = vadd.f32 %v688, %v729
    %v795 = vadd.f32 %v689, %v733
    %v796 = vadd.f32 %v690, %v737
    %v797 = vadd.f32 %v691, %v741
    %v798 = vadd.f32 %v692, %v713
    %v799 = vadd.f32 %v693, %v717
    %v800 = vadd.f32 %v694, %v721
    %v801 = vadd.f32 %v695, %v725
    %v802 = vadd.f32 %v696, %v729
    %v803 = vadd.f32 %v697, %v733
    %v804 = vadd.f32 %v698, %v737
    %v805 = vadd.f32 %v699, %v741
    %v806 = vadd.f32 %v700, %v713
    %v807 = vadd.f32 %v701, %v717
    %v808 = vadd.f32 %v702, %v721
    %v809 = vadd.f32 %v703, %v725
    %v810 = vadd.f32 %v704, %v729
    %v811 = vadd.f32 %v705, %v733
    %v812 = vadd.f32 %v706, %v737
    %v813 = vadd.f32 %v707, %v741
    %v814 = vpack.c.bf16 %v758, %v750
    %v815 = vpack.c.bf16 %v759, %v751
    %v816 = vpack.c.bf16 %v760, %v752
    %v817 = vpack.c.bf16 %v761, %v753
    %v818 = vpack.c.bf16 %v762, %v754
    %v819 = vpack.c.bf16 %v763, %v755
    %v820 = vpack.c.bf16 %v764, %v756
    %v821 = vpack.c.bf16 %v765, %v757
    %v822 = vpack.c.bf16 %v774, %v766
    %v823 = vpack.c.bf16 %v775, %v767
    %v824 = vpack.c.bf16 %v776, %v768
    %v825 = vpack.c.bf16 %v777, %v769
    %v826 = vpack.c.bf16 %v778, %v770
    %v827 = vpack.c.bf16 %v779, %v771
    %v828 = vpack.c.bf16 %v780, %v772
    %v829 = vpack.c.bf16 %v781, %v773
    %v830 = vpack.c.bf16 %v790, %v782
    %v831 = vpack.c.bf16 %v791, %v783
    %v832 = vpack.c.bf16 %v792, %v784
    %v833 = vpack.c.bf16 %v793, %v785
    %v834 = vpack.c.bf16 %v794, %v786
    %v835 = vpack.c.bf16 %v795, %v787
    %v836 = vpack.c.bf16 %v796, %v788
    %v837 = vpack.c.bf16 %v797, %v789
    %v838 = vpack.c.bf16 %v806, %v798
    %v839 = vpack.c.bf16 %v807, %v799
    %v840 = vpack.c.bf16 %v808, %v800
    %v841 = vpack.c.bf16 %v809, %v801
    %v842 = vpack.c.bf16 %v810, %v802
    %v843 = vpack.c.bf16 %v811, %v803
    %v844 = vpack.c.bf16 %v812, %v804
    %v845 = vpack.c.bf16 %v813, %v805
    %v846 = vld [vmem:[#allocation8] sm:$0xff]
    %v847 = vld [vmem:[#allocation8 + $0x8] sm:$0xff]
    %v848 = vld [vmem:[#allocation8 + $0x10] sm:$0xff]
    %v849 = vld [vmem:[#allocation8 + $0x18] sm:$0xff]
    %v850 = vld [vmem:[#allocation8 + $0x20] sm:$0xff]
    %v851 = vld [vmem:[#allocation8 + $0x28] sm:$0xff]
    %v852 = vld [vmem:[#allocation8 + $0x30] sm:$0xff]
    %v853 = vld [vmem:[#allocation8 + $0x38] sm:$0xff]
    %v854 = vld [vmem:[#allocation8 + $0x40] sm:$0xff]
    %v855 = vld [vmem:[#allocation8 + $0x48] sm:$0xff]
    %v856 = vld [vmem:[#allocation8 + $0x50] sm:$0xff]
    %v857 = vld [vmem:[#allocation8 + $0x58] sm:$0xff]
    %v858 = vld [vmem:[#allocation8 + $0x60] sm:$0xff]
    %v859 = vld [vmem:[#allocation8 + $0x68] sm:$0xff]
    %v860 = vld [vmem:[#allocation8 + $0x70] sm:$0xff]
    %v861 = vld [vmem:[#allocation8 + $0x78] sm:$0xff]
    %v862 = vld [vmem:[#allocation8 + $0x80] sm:$0xff]
    %v863 = vld [vmem:[#allocation8 + $0x88] sm:$0xff]
    %v864 = vld [vmem:[#allocation8 + $0x90] sm:$0xff]
    %v865 = vld [vmem:[#allocation8 + $0x98] sm:$0xff]
    %v866 = vld [vmem:[#allocation8 + $0xa0] sm:$0xff]
    %v867 = vld [vmem:[#allocation8 + $0xa8] sm:$0xff]
    %v868 = vld [vmem:[#allocation8 + $0xb0] sm:$0xff]
    %v869 = vld [vmem:[#allocation8 + $0xb8] sm:$0xff]
    %v870 = vld [vmem:[#allocation8 + $0xc0] sm:$0xff]
    %v871 = vld [vmem:[#allocation8 + $0xc8] sm:$0xff]
    %v872 = vld [vmem:[#allocation8 + $0xd0] sm:$0xff]
    %v873 = vld [vmem:[#allocation8 + $0xd8] sm:$0xff]
    %v874 = vld [vmem:[#allocation8 + $0xe0] sm:$0xff]
    %v875 = vld [vmem:[#allocation8 + $0xe8] sm:$0xff]
    %v876 = vld [vmem:[#allocation8 + $0xf0] sm:$0xff]
    %v877 = vld [vmem:[#allocation8 + $0xf8] sm:$0xff]
    %v878 = vld [vmem:[#allocation8 + $0x100] sm:$0xff]
    %v879 = vld [vmem:[#allocation8 + $0x108] sm:$0xff]
    %v880 = vld [vmem:[#allocation8 + $0x110] sm:$0xff]
    %v881 = vld [vmem:[#allocation8 + $0x118] sm:$0xff]
    %v882 = vld [vmem:[#allocation8 + $0x120] sm:$0xff]
    %v883 = vld [vmem:[#allocation8 + $0x128] sm:$0xff]
    %v884 = vld [vmem:[#allocation8 + $0x130] sm:$0xff]
    %v885 = vld [vmem:[#allocation8 + $0x138] sm:$0xff]
    %v886 = vld [vmem:[#allocation8 + $0x140] sm:$0xff]
    %v887 = vld [vmem:[#allocation8 + $0x148] sm:$0xff]
    %v888 = vld [vmem:[#allocation8 + $0x150] sm:$0xff]
    %v889 = vld [vmem:[#allocation8 + $0x158] sm:$0xff]
    %v890 = vld [vmem:[#allocation8 + $0x160] sm:$0xff]
    %v891 = vld [vmem:[#allocation8 + $0x168] sm:$0xff]
    %v892 = vld [vmem:[#allocation8 + $0x170] sm:$0xff]
    %v893 = vld [vmem:[#allocation8 + $0x178] sm:$0xff]
    %v894 = vld [vmem:[#allocation8 + $0x180] sm:$0xff]
    %v895 = vld [vmem:[#allocation8 + $0x188] sm:$0xff]
    %v896 = vld [vmem:[#allocation8 + $0x190] sm:$0xff]
    %v897 = vld [vmem:[#allocation8 + $0x198] sm:$0xff]
    %v898 = vld [vmem:[#allocation8 + $0x1a0] sm:$0xff]
    %v899 = vld [vmem:[#allocation8 + $0x1a8] sm:$0xff]
    %v900 = vld [vmem:[#allocation8 + $0x1b0] sm:$0xff]
    %v901 = vld [vmem:[#allocation8 + $0x1b8] sm:$0xff]
    %v902 = vld [vmem:[#allocation8 + $0x1c0] sm:$0xff]
    %v903 = vld [vmem:[#allocation8 + $0x1c8] sm:$0xff]
    %v904 = vld [vmem:[#allocation8 + $0x1d0] sm:$0xff]
    %v905 = vld [vmem:[#allocation8 + $0x1d8] sm:$0xff]
    %v906 = vld [vmem:[#allocation8 + $0x1e0] sm:$0xff]
    %v907 = vld [vmem:[#allocation8 + $0x1e8] sm:$0xff]
    %v908 = vld [vmem:[#allocation8 + $0x1f0] sm:$0xff]
    %v909 = vld [vmem:[#allocation8 + $0x1f8] sm:$0xff]
    %v910 = vld [vmem:[#allocation8 + $0x200] sm:$0xff]
    %v911 = vld [vmem:[#allocation8 + $0x208] sm:$0xff]
    %v912 = vld [vmem:[#allocation8 + $0x210] sm:$0xff]
    %v913 = vld [vmem:[#allocation8 + $0x218] sm:$0xff]
    %v914 = vld [vmem:[#allocation8 + $0x220] sm:$0xff]
    %v915 = vld [vmem:[#allocation8 + $0x228] sm:$0xff]
    %v916 = vld [vmem:[#allocation8 + $0x230] sm:$0xff]
    %v917 = vld [vmem:[#allocation8 + $0x238] sm:$0xff]
    %v918 = vld [vmem:[#allocation8 + $0x240] sm:$0xff]
    %v919 = vld [vmem:[#allocation8 + $0x248] sm:$0xff]
    %v920 = vld [vmem:[#allocation8 + $0x250] sm:$0xff]
    %v921 = vld [vmem:[#allocation8 + $0x258] sm:$0xff]
    %v922 = vld [vmem:[#allocation8 + $0x260] sm:$0xff]
    %v923 = vld [vmem:[#allocation8 + $0x268] sm:$0xff]
    %v924 = vld [vmem:[#allocation8 + $0x270] sm:$0xff]
    %v925 = vld [vmem:[#allocation8 + $0x278] sm:$0xff]
    %v926 = vld [vmem:[#allocation8 + $0x280] sm:$0xff]
    %v927 = vld [vmem:[#allocation8 + $0x288] sm:$0xff]
    %v928 = vld [vmem:[#allocation8 + $0x290] sm:$0xff]
    %v929 = vld [vmem:[#allocation8 + $0x298] sm:$0xff]
    %v930 = vld [vmem:[#allocation8 + $0x2a0] sm:$0xff]
    %v931 = vld [vmem:[#allocation8 + $0x2a8] sm:$0xff]
    %v932 = vld [vmem:[#allocation8 + $0x2b0] sm:$0xff]
    %v933 = vld [vmem:[#allocation8 + $0x2b8] sm:$0xff]
    %v934 = vld [vmem:[#allocation8 + $0x2c0] sm:$0xff]
    %v935 = vld [vmem:[#allocation8 + $0x2c8] sm:$0xff]
    %v936 = vld [vmem:[#allocation8 + $0x2d0] sm:$0xff]
    %v937 = vld [vmem:[#allocation8 + $0x2d8] sm:$0xff]
    %v938 = vld [vmem:[#allocation8 + $0x2e0] sm:$0xff]
    %v939 = vld [vmem:[#allocation8 + $0x2e8] sm:$0xff]
    %v940 = vld [vmem:[#allocation8 + $0x2f0] sm:$0xff]
    %v941 = vld [vmem:[#allocation8 + $0x2f8] sm:$0xff]
    %v942 = vld [vmem:[#allocation8 + $0x300] sm:$0xff]
    %v943 = vld [vmem:[#allocation8 + $0x308] sm:$0xff]
    %v944 = vld [vmem:[#allocation8 + $0x310] sm:$0xff]
    %v945 = vld [vmem:[#allocation8 + $0x318] sm:$0xff]
    %v946 = vld [vmem:[#allocation8 + $0x320] sm:$0xff]
    %v947 = vld [vmem:[#allocation8 + $0x328] sm:$0xff]
    %v948 = vld [vmem:[#allocation8 + $0x330] sm:$0xff]
    %v949 = vld [vmem:[#allocation8 + $0x338] sm:$0xff]
    %v950 = vld [vmem:[#allocation8 + $0x340] sm:$0xff]
    %v951 = vld [vmem:[#allocation8 + $0x348] sm:$0xff]
    %v952 = vld [vmem:[#allocation8 + $0x350] sm:$0xff]
    %v953 = vld [vmem:[#allocation8 + $0x358] sm:$0xff]
    %v954 = vld [vmem:[#allocation8 + $0x360] sm:$0xff]
    %v955 = vld [vmem:[#allocation8 + $0x368] sm:$0xff]
    %v956 = vld [vmem:[#allocation8 + $0x370] sm:$0xff]
    %v957 = vld [vmem:[#allocation8 + $0x378] sm:$0xff]
    %v958 = vld [vmem:[#allocation8 + $0x380] sm:$0xff]
    %v959 = vld [vmem:[#allocation8 + $0x388] sm:$0xff]
    %v960 = vld [vmem:[#allocation8 + $0x390] sm:$0xff]
    %v961 = vld [vmem:[#allocation8 + $0x398] sm:$0xff]
    %v962 = vld [vmem:[#allocation8 + $0x3a0] sm:$0xff]
    %v963 = vld [vmem:[#allocation8 + $0x3a8] sm:$0xff]
    %v964 = vld [vmem:[#allocation8 + $0x3b0] sm:$0xff]
    %v965 = vld [vmem:[#allocation8 + $0x3b8] sm:$0xff]
    %v966 = vld [vmem:[#allocation8 + $0x3c0] sm:$0xff]
    %v967 = vld [vmem:[#allocation8 + $0x3c8] sm:$0xff]
    %v968 = vld [vmem:[#allocation8 + $0x3d0] sm:$0xff]
    %v969 = vld [vmem:[#allocation8 + $0x3d8] sm:$0xff]
    %v970 = vld [vmem:[#allocation8 + $0x3e0] sm:$0xff]
    %v971 = vld [vmem:[#allocation8 + $0x3e8] sm:$0xff]
    %v972 = vld [vmem:[#allocation8 + $0x3f0] sm:$0xff]
    %v973 = vld [vmem:[#allocation8 + $0x3f8] sm:$0xff]
    %v974 = vld [vmem:[#allocation8 + $0x400] sm:$0xff]
    %v975 = vld [vmem:[#allocation8 + $0x408] sm:$0xff]
    %v976 = vld [vmem:[#allocation8 + $0x410] sm:$0xff]
    %v977 = vld [vmem:[#allocation8 + $0x418] sm:$0xff]
    %v978 = vld [vmem:[#allocation8 + $0x420] sm:$0xff]
    %v979 = vld [vmem:[#allocation8 + $0x428] sm:$0xff]
    %v980 = vld [vmem:[#allocation8 + $0x430] sm:$0xff]
    %v981 = vld [vmem:[#allocation8 + $0x438] sm:$0xff]
    %v982 = vld [vmem:[#allocation8 + $0x440] sm:$0xff]
    %v983 = vld [vmem:[#allocation8 + $0x448] sm:$0xff]
    %v984 = vld [vmem:[#allocation8 + $0x450] sm:$0xff]
    %v985 = vld [vmem:[#allocation8 + $0x458] sm:$0xff]
    %v986 = vld [vmem:[#allocation8 + $0x460] sm:$0xff]
    %v987 = vld [vmem:[#allocation8 + $0x468] sm:$0xff]
    %v988 = vld [vmem:[#allocation8 + $0x470] sm:$0xff]
    %v989 = vld [vmem:[#allocation8 + $0x478] sm:$0xff]
    %v990 = vld [vmem:[#allocation8 + $0x480] sm:$0xff]
    %v991 = vld [vmem:[#allocation8 + $0x488] sm:$0xff]
    %v992 = vld [vmem:[#allocation8 + $0x490] sm:$0xff]
    %v993 = vld [vmem:[#allocation8 + $0x498] sm:$0xff]
    %v994 = vld [vmem:[#allocation8 + $0x4a0] sm:$0xff]
    %v995 = vld [vmem:[#allocation8 + $0x4a8] sm:$0xff]
    %v996 = vld [vmem:[#allocation8 + $0x4b0] sm:$0xff]
    %v997 = vld [vmem:[#allocation8 + $0x4b8] sm:$0xff]
    %v998 = vld [vmem:[#allocation8 + $0x4c0] sm:$0xff]
    %v999 = vld [vmem:[#allocation8 + $0x4c8] sm:$0xff]
    %v1000 = vld [vmem:[#allocation8 + $0x4d0] sm:$0xff]
    %v1001 = vld [vmem:[#allocation8 + $0x4d8] sm:$0xff]
    %v1002 = vld [vmem:[#allocation8 + $0x4e0] sm:$0xff]
    %v1003 = vld [vmem:[#allocation8 + $0x4e8] sm:$0xff]
    %v1004 = vld [vmem:[#allocation8 + $0x4f0] sm:$0xff]
    %v1005 = vld [vmem:[#allocation8 + $0x4f8] sm:$0xff]
    %v1006 = vld [vmem:[#allocation8 + $0x500] sm:$0xff]
    %v1007 = vld [vmem:[#allocation8 + $0x508] sm:$0xff]
    %v1008 = vld [vmem:[#allocation8 + $0x510] sm:$0xff]
    %v1009 = vld [vmem:[#allocation8 + $0x518] sm:$0xff]
    %v1010 = vld [vmem:[#allocation8 + $0x520] sm:$0xff]
    %v1011 = vld [vmem:[#allocation8 + $0x528] sm:$0xff]
    %v1012 = vld [vmem:[#allocation8 + $0x530] sm:$0xff]
    %v1013 = vld [vmem:[#allocation8 + $0x538] sm:$0xff]
    %v1014 = vld [vmem:[#allocation8 + $0x540] sm:$0xff]
    %v1015 = vld [vmem:[#allocation8 + $0x548] sm:$0xff]
    %v1016 = vld [vmem:[#allocation8 + $0x550] sm:$0xff]
    %v1017 = vld [vmem:[#allocation8 + $0x558] sm:$0xff]
    %v1018 = vld [vmem:[#allocation8 + $0x560] sm:$0xff]
    %v1019 = vld [vmem:[#allocation8 + $0x568] sm:$0xff]
    %v1020 = vld [vmem:[#allocation8 + $0x570] sm:$0xff]
    %v1021 = vld [vmem:[#allocation8 + $0x578] sm:$0xff]
    %v1022 = vld [vmem:[#allocation8 + $0x580] sm:$0xff]
    %v1023 = vld [vmem:[#allocation8 + $0x588] sm:$0xff]
    %v1024 = vld [vmem:[#allocation8 + $0x590] sm:$0xff]
    %v1025 = vld [vmem:[#allocation8 + $0x598] sm:$0xff]
    %v1026 = vld [vmem:[#allocation8 + $0x5a0] sm:$0xff]
    %v1027 = vld [vmem:[#allocation8 + $0x5a8] sm:$0xff]
    %v1028 = vld [vmem:[#allocation8 + $0x5b0] sm:$0xff]
    %v1029 = vld [vmem:[#allocation8 + $0x5b8] sm:$0xff]
    %v1030 = vld [vmem:[#allocation8 + $0x5c0] sm:$0xff]
    %v1031 = vld [vmem:[#allocation8 + $0x5c8] sm:$0xff]
    %v1032 = vld [vmem:[#allocation8 + $0x5d0] sm:$0xff]
    %v1033 = vld [vmem:[#allocation8 + $0x5d8] sm:$0xff]
    %v1034 = vld [vmem:[#allocation8 + $0x5e0] sm:$0xff]
    %v1035 = vld [vmem:[#allocation8 + $0x5e8] sm:$0xff]
    %v1036 = vld [vmem:[#allocation8 + $0x5f0] sm:$0xff]
    %v1037 = vld [vmem:[#allocation8 + $0x5f8] sm:$0xff]
    %v1038 = vld [vmem:[#allocation8 + $0x600] sm:$0xff]
    %v1039 = vld [vmem:[#allocation8 + $0x608] sm:$0xff]
    %v1040 = vld [vmem:[#allocation8 + $0x610] sm:$0xff]
    %v1041 = vld [vmem:[#allocation8 + $0x618] sm:$0xff]
    %v1042 = vld [vmem:[#allocation8 + $0x620] sm:$0xff]
    %v1043 = vld [vmem:[#allocation8 + $0x628] sm:$0xff]
    %v1044 = vld [vmem:[#allocation8 + $0x630] sm:$0xff]
    %v1045 = vld [vmem:[#allocation8 + $0x638] sm:$0xff]
    %v1046 = vld [vmem:[#allocation8 + $0x640] sm:$0xff]
    %v1047 = vld [vmem:[#allocation8 + $0x648] sm:$0xff]
    %v1048 = vld [vmem:[#allocation8 + $0x650] sm:$0xff]
    %v1049 = vld [vmem:[#allocation8 + $0x658] sm:$0xff]
    %v1050 = vld [vmem:[#allocation8 + $0x660] sm:$0xff]
    %v1051 = vld [vmem:[#allocation8 + $0x668] sm:$0xff]
    %v1052 = vld [vmem:[#allocation8 + $0x670] sm:$0xff]
    %v1053 = vld [vmem:[#allocation8 + $0x678] sm:$0xff]
    %v1054 = vld [vmem:[#allocation8 + $0x680] sm:$0xff]
    %v1055 = vld [vmem:[#allocation8 + $0x688] sm:$0xff]
    %v1056 = vld [vmem:[#allocation8 + $0x690] sm:$0xff]
    %v1057 = vld [vmem:[#allocation8 + $0x698] sm:$0xff]
    %v1058 = vld [vmem:[#allocation8 + $0x6a0] sm:$0xff]
    %v1059 = vld [vmem:[#allocation8 + $0x6a8] sm:$0xff]
    %v1060 = vld [vmem:[#allocation8 + $0x6b0] sm:$0xff]
    %v1061 = vld [vmem:[#allocation8 + $0x6b8] sm:$0xff]
    %v1062 = vld [vmem:[#allocation8 + $0x6c0] sm:$0xff]
    %v1063 = vld [vmem:[#allocation8 + $0x6c8] sm:$0xff]
    %v1064 = vld [vmem:[#allocation8 + $0x6d0] sm:$0xff]
    %v1065 = vld [vmem:[#allocation8 + $0x6d8] sm:$0xff]
    %v1066 = vld [vmem:[#allocation8 + $0x6e0] sm:$0xff]
    %v1067 = vld [vmem:[#allocation8 + $0x6e8] sm:$0xff]
    %v1068 = vld [vmem:[#allocation8 + $0x6f0] sm:$0xff]
    %v1069 = vld [vmem:[#allocation8 + $0x6f8] sm:$0xff]
    %v1070 = vld [vmem:[#allocation8 + $0x700] sm:$0xff]
    %v1071 = vld [vmem:[#allocation8 + $0x708] sm:$0xff]
    %v1072 = vld [vmem:[#allocation8 + $0x710] sm:$0xff]
    %v1073 = vld [vmem:[#allocation8 + $0x718] sm:$0xff]
    %v1074 = vld [vmem:[#allocation8 + $0x720] sm:$0xff]
    %v1075 = vld [vmem:[#allocation8 + $0x728] sm:$0xff]
    %v1076 = vld [vmem:[#allocation8 + $0x730] sm:$0xff]
    %v1077 = vld [vmem:[#allocation8 + $0x738] sm:$0xff]
    %v1078 = vld [vmem:[#allocation8 + $0x740] sm:$0xff]
    %v1079 = vld [vmem:[#allocation8 + $0x748] sm:$0xff]
    %v1080 = vld [vmem:[#allocation8 + $0x750] sm:$0xff]
    %v1081 = vld [vmem:[#allocation8 + $0x758] sm:$0xff]
    %v1082 = vld [vmem:[#allocation8 + $0x760] sm:$0xff]
    %v1083 = vld [vmem:[#allocation8 + $0x768] sm:$0xff]
    %v1084 = vld [vmem:[#allocation8 + $0x770] sm:$0xff]
    %v1085 = vld [vmem:[#allocation8 + $0x778] sm:$0xff]
    %v1086 = vld [vmem:[#allocation8 + $0x780] sm:$0xff]
    %v1087 = vld [vmem:[#allocation8 + $0x788] sm:$0xff]
    %v1088 = vld [vmem:[#allocation8 + $0x790] sm:$0xff]
    %v1089 = vld [vmem:[#allocation8 + $0x798] sm:$0xff]
    %v1090 = vld [vmem:[#allocation8 + $0x7a0] sm:$0xff]
    %v1091 = vld [vmem:[#allocation8 + $0x7a8] sm:$0xff]
    %v1092 = vld [vmem:[#allocation8 + $0x7b0] sm:$0xff]
    %v1093 = vld [vmem:[#allocation8 + $0x7b8] sm:$0xff]
    %v1094 = vld [vmem:[#allocation8 + $0x7c0] sm:$0xff]
    %v1095 = vld [vmem:[#allocation8 + $0x7c8] sm:$0xff]
    %v1096 = vld [vmem:[#allocation8 + $0x7d0] sm:$0xff]
    %v1097 = vld [vmem:[#allocation8 + $0x7d8] sm:$0xff]
    %v1098 = vld [vmem:[#allocation8 + $0x7e0] sm:$0xff]
    %v1099 = vld [vmem:[#allocation8 + $0x7e8] sm:$0xff]
    %v1100 = vld [vmem:[#allocation8 + $0x7f0] sm:$0xff]
    %v1101 = vld [vmem:[#allocation8 + $0x7f8] sm:$0xff]
    %v1102 = vld [vmem:[%s4] sm:$0xf]
    %v1104 = vlaneseq
    %v1105 = vshrl.u32 %v1104, 7
    %v1106 = vsub.s32 0, %v1105
    %v1107 = vrot.slane %v1102, %v1106
    %v1108 = vlaneseq
    %v1109 = vshrl.u32 %v1108, 7
    %v1110 = vsub.s32 1, %v1109
    %v1111 = vrot.slane %v1102, %v1110
    %v1112 = vlaneseq
    %v1113 = vshrl.u32 %v1112, 7
    %v1114 = vsub.s32 2, %v1113
    %v1115 = vrot.slane %v1102, %v1114
    %v1116 = vlaneseq
    %v1117 = vshrl.u32 %v1116, 7
    %v1118 = vsub.s32 3, %v1117
    %v1119 = vrot.slane %v1102, %v1118
    %v1380 = vunpack.c.l.b16 %v846
    %v1381 = vunpack.c.h.b16 %v846
    %v1382 = vunpack.c.l.b16 %v847
    %v1383 = vunpack.c.h.b16 %v847
    %v1384 = vunpack.c.l.b16 %v848
    %v1385 = vunpack.c.h.b16 %v848
    %v1386 = vunpack.c.l.b16 %v849
    %v1387 = vunpack.c.h.b16 %v849
    %v1388 = vunpack.c.l.b16 %v850
    %v1389 = vunpack.c.h.b16 %v850
    %v1390 = vunpack.c.l.b16 %v851
    %v1391 = vunpack.c.h.b16 %v851
    %v1392 = vunpack.c.l.b16 %v852
    %v1393 = vunpack.c.h.b16 %v852
    %v1394 = vunpack.c.l.b16 %v853
    %v1395 = vunpack.c.h.b16 %v853
    %v1396 = vunpack.c.l.b16 %v854
    %v1397 = vunpack.c.h.b16 %v854
    %v1398 = vunpack.c.l.b16 %v855
    %v1399 = vunpack.c.h.b16 %v855
    %v1400 = vunpack.c.l.b16 %v856
    %v1401 = vunpack.c.h.b16 %v856
    %v1402 = vunpack.c.l.b16 %v857
    %v1403 = vunpack.c.h.b16 %v857
    %v1404 = vunpack.c.l.b16 %v858
    %v1405 = vunpack.c.h.b16 %v858
    %v1406 = vunpack.c.l.b16 %v859
    %v1407 = vunpack.c.h.b16 %v859
    %v1408 = vunpack.c.l.b16 %v860
    %v1409 = vunpack.c.h.b16 %v860
    %v1410 = vunpack.c.l.b16 %v861
    %v1411 = vunpack.c.h.b16 %v861
    %v1412 = vunpack.c.l.b16 %v862
    %v1413 = vunpack.c.h.b16 %v862
    %v1414 = vunpack.c.l.b16 %v863
    %v1415 = vunpack.c.h.b16 %v863
    %v1416 = vunpack.c.l.b16 %v864
    %v1417 = vunpack.c.h.b16 %v864
    %v1418 = vunpack.c.l.b16 %v865
    %v1419 = vunpack.c.h.b16 %v865
    %v1420 = vunpack.c.l.b16 %v866
    %v1421 = vunpack.c.h.b16 %v866
    %v1422 = vunpack.c.l.b16 %v867
    %v1423 = vunpack.c.h.b16 %v867
    %v1424 = vunpack.c.l.b16 %v868
    %v1425 = vunpack.c.h.b16 %v868
    %v1426 = vunpack.c.l.b16 %v869
    %v1427 = vunpack.c.h.b16 %v869
    %v1428 = vunpack.c.l.b16 %v870
    %v1429 = vunpack.c.h.b16 %v870
    %v1430 = vunpack.c.l.b16 %v871
    %v1431 = vunpack.c.h.b16 %v871
    %v1432 = vunpack.c.l.b16 %v872
    %v1433 = vunpack.c.h.b16 %v872
    %v1434 = vunpack.c.l.b16 %v873
    %v1435 = vunpack.c.h.b16 %v873
    %v1436 = vunpack.c.l.b16 %v874
    %v1437 = vunpack.c.h.b16 %v874
    %v1438 = vunpack.c.l.b16 %v875
    %v1439 = vunpack.c.h.b16 %v875
    %v1440 = vunpack.c.l.b16 %v876
    %v1441 = vunpack.c.h.b16 %v876
    %v1442 = vunpack.c.l.b16 %v877
    %v1443 = vunpack.c.h.b16 %v877
    %v1444 = vunpack.c.l.b16 %v878
    %v1445 = vunpack.c.h.b16 %v878
    %v1446 = vunpack.c.l.b16 %v879
    %v1447 = vunpack.c.h.b16 %v879
    %v1448 = vunpack.c.l.b16 %v880
    %v1449 = vunpack.c.h.b16 %v880
    %v1450 = vunpack.c.l.b16 %v881
    %v1451 = vunpack.c.h.b16 %v881
    %v1452 = vunpack.c.l.b16 %v882
    %v1453 = vunpack.c.h.b16 %v882
    %v1454 = vunpack.c.l.b16 %v883
    %v1455 = vunpack.c.h.b16 %v883
    %v1456 = vunpack.c.l.b16 %v884
    %v1457 = vunpack.c.h.b16 %v884
    %v1458 = vunpack.c.l.b16 %v885
    %v1459 = vunpack.c.h.b16 %v885
    %v1460 = vunpack.c.l.b16 %v886
    %v1461 = vunpack.c.h.b16 %v886
    %v1462 = vunpack.c.l.b16 %v887
    %v1463 = vunpack.c.h.b16 %v887
    %v1464 = vunpack.c.l.b16 %v888
    %v1465 = vunpack.c.h.b16 %v888
    %v1466 = vunpack.c.l.b16 %v889
    %v1467 = vunpack.c.h.b16 %v889
    %v1468 = vunpack.c.l.b16 %v890
    %v1469 = vunpack.c.h.b16 %v890
    %v1470 = vunpack.c.l.b16 %v891
    %v1471 = vunpack.c.h.b16 %v891
    %v1472 = vunpack.c.l.b16 %v892
    %v1473 = vunpack.c.h.b16 %v892
    %v1474 = vunpack.c.l.b16 %v893
    %v1475 = vunpack.c.h.b16 %v893
    %v1476 = vunpack.c.l.b16 %v894
    %v1477 = vunpack.c.h.b16 %v894
    %v1478 = vunpack.c.l.b16 %v895
    %v1479 = vunpack.c.h.b16 %v895
    %v1480 = vunpack.c.l.b16 %v896
    %v1481 = vunpack.c.h.b16 %v896
    %v1482 = vunpack.c.l.b16 %v897
    %v1483 = vunpack.c.h.b16 %v897
    %v1484 = vunpack.c.l.b16 %v898
    %v1485 = vunpack.c.h.b16 %v898
    %v1486 = vunpack.c.l.b16 %v899
    %v1487 = vunpack.c.h.b16 %v899
    %v1488 = vunpack.c.l.b16 %v900
    %v1489 = vunpack.c.h.b16 %v900
    %v1490 = vunpack.c.l.b16 %v901
    %v1491 = vunpack.c.h.b16 %v901
    %v1492 = vunpack.c.l.b16 %v902
    %v1493 = vunpack.c.h.b16 %v902
    %v1494 = vunpack.c.l.b16 %v903
    %v1495 = vunpack.c.h.b16 %v903
    %v1496 = vunpack.c.l.b16 %v904
    %v1497 = vunpack.c.h.b16 %v904
    %v1498 = vunpack.c.l.b16 %v905
    %v1499 = vunpack.c.h.b16 %v905
    %v1500 = vunpack.c.l.b16 %v906
    %v1501 = vunpack.c.h.b16 %v906
    %v1502 = vunpack.c.l.b16 %v907
    %v1503 = vunpack.c.h.b16 %v907
    %v1504 = vunpack.c.l.b16 %v908
    %v1505 = vunpack.c.h.b16 %v908
    %v1506 = vunpack.c.l.b16 %v909
    %v1507 = vunpack.c.h.b16 %v909
    %v1508 = vunpack.c.l.b16 %v910
    %v1509 = vunpack.c.h.b16 %v910
    %v1510 = vunpack.c.l.b16 %v911
    %v1511 = vunpack.c.h.b16 %v911
    %v1512 = vunpack.c.l.b16 %v912
    %v1513 = vunpack.c.h.b16 %v912
    %v1514 = vunpack.c.l.b16 %v913
    %v1515 = vunpack.c.h.b16 %v913
    %v1516 = vunpack.c.l.b16 %v914
    %v1517 = vunpack.c.h.b16 %v914
    %v1518 = vunpack.c.l.b16 %v915
    %v1519 = vunpack.c.h.b16 %v915
    %v1520 = vunpack.c.l.b16 %v916
    %v1521 = vunpack.c.h.b16 %v916
    %v1522 = vunpack.c.l.b16 %v917
    %v1523 = vunpack.c.h.b16 %v917
    %v1524 = vunpack.c.l.b16 %v918
    %v1525 = vunpack.c.h.b16 %v918
    %v1526 = vunpack.c.l.b16 %v919
    %v1527 = vunpack.c.h.b16 %v919
    %v1528 = vunpack.c.l.b16 %v920
    %v1529 = vunpack.c.h.b16 %v920
    %v1530 = vunpack.c.l.b16 %v921
    %v1531 = vunpack.c.h.b16 %v921
    %v1532 = vunpack.c.l.b16 %v922
    %v1533 = vunpack.c.h.b16 %v922
    %v1534 = vunpack.c.l.b16 %v923
    %v1535 = vunpack.c.h.b16 %v923
    %v1536 = vunpack.c.l.b16 %v924
    %v1537 = vunpack.c.h.b16 %v924
    %v1538 = vunpack.c.l.b16 %v925
    %v1539 = vunpack.c.h.b16 %v925
    %v1540 = vunpack.c.l.b16 %v926
    %v1541 = vunpack.c.h.b16 %v926
    %v1542 = vunpack.c.l.b16 %v927
    %v1543 = vunpack.c.h.b16 %v927
    %v1544 = vunpack.c.l.b16 %v928
    %v1545 = vunpack.c.h.b16 %v928
    %v1546 = vunpack.c.l.b16 %v929
    %v1547 = vunpack.c.h.b16 %v929
    %v1548 = vunpack.c.l.b16 %v930
    %v1549 = vunpack.c.h.b16 %v930
    %v1550 = vunpack.c.l.b16 %v931
    %v1551 = vunpack.c.h.b16 %v931
    %v1552 = vunpack.c.l.b16 %v932
    %v1553 = vunpack.c.h.b16 %v932
    %v1554 = vunpack.c.l.b16 %v933
    %v1555 = vunpack.c.h.b16 %v933
    %v1556 = vunpack.c.l.b16 %v934
    %v1557 = vunpack.c.h.b16 %v934
    %v1558 = vunpack.c.l.b16 %v935
    %v1559 = vunpack.c.h.b16 %v935
    %v1560 = vunpack.c.l.b16 %v936
    %v1561 = vunpack.c.h.b16 %v936
    %v1562 = vunpack.c.l.b16 %v937
    %v1563 = vunpack.c.h.b16 %v937
    %v1564 = vunpack.c.l.b16 %v938
    %v1565 = vunpack.c.h.b16 %v938
    %v1566 = vunpack.c.l.b16 %v939
    %v1567 = vunpack.c.h.b16 %v939
    %v1568 = vunpack.c.l.b16 %v940
    %v1569 = vunpack.c.h.b16 %v940
    %v1570 = vunpack.c.l.b16 %v941
    %v1571 = vunpack.c.h.b16 %v941
    %v1572 = vunpack.c.l.b16 %v942
    %v1573 = vunpack.c.h.b16 %v942
    %v1574 = vunpack.c.l.b16 %v943
    %v1575 = vunpack.c.h.b16 %v943
    %v1576 = vunpack.c.l.b16 %v944
    %v1577 = vunpack.c.h.b16 %v944
    %v1578 = vunpack.c.l.b16 %v945
    %v1579 = vunpack.c.h.b16 %v945
    %v1580 = vunpack.c.l.b16 %v946
    %v1581 = vunpack.c.h.b16 %v946
    %v1582 = vunpack.c.l.b16 %v947
    %v1583 = vunpack.c.h.b16 %v947
    %v1584 = vunpack.c.l.b16 %v948
    %v1585 = vunpack.c.h.b16 %v948
    %v1586 = vunpack.c.l.b16 %v949
    %v1587 = vunpack.c.h.b16 %v949
    %v1588 = vunpack.c.l.b16 %v950
    %v1589 = vunpack.c.h.b16 %v950
    %v1590 = vunpack.c.l.b16 %v951
    %v1591 = vunpack.c.h.b16 %v951
    %v1592 = vunpack.c.l.b16 %v952
    %v1593 = vunpack.c.h.b16 %v952
    %v1594 = vunpack.c.l.b16 %v953
    %v1595 = vunpack.c.h.b16 %v953
    %v1596 = vunpack.c.l.b16 %v954
    %v1597 = vunpack.c.h.b16 %v954
    %v1598 = vunpack.c.l.b16 %v955
    %v1599 = vunpack.c.h.b16 %v955
    %v1600 = vunpack.c.l.b16 %v956
    %v1601 = vunpack.c.h.b16 %v956
    %v1602 = vunpack.c.l.b16 %v957
    %v1603 = vunpack.c.h.b16 %v957
    %v1604 = vunpack.c.l.b16 %v958
    %v1605 = vunpack.c.h.b16 %v958
    %v1606 = vunpack.c.l.b16 %v959
    %v1607 = vunpack.c.h.b16 %v959
    %v1608 = vunpack.c.l.b16 %v960
    %v1609 = vunpack.c.h.b16 %v960
    %v1610 = vunpack.c.l.b16 %v961
    %v1611 = vunpack.c.h.b16 %v961
    %v1612 = vunpack.c.l.b16 %v962
    %v1613 = vunpack.c.h.b16 %v962
    %v1614 = vunpack.c.l.b16 %v963
    %v1615 = vunpack.c.h.b16 %v963
    %v1616 = vunpack.c.l.b16 %v964
    %v1617 = vunpack.c.h.b16 %v964
    %v1618 = vunpack.c.l.b16 %v965
    %v1619 = vunpack.c.h.b16 %v965
    %v1620 = vunpack.c.l.b16 %v966
    %v1621 = vunpack.c.h.b16 %v966
    %v1622 = vunpack.c.l.b16 %v967
    %v1623 = vunpack.c.h.b16 %v967
    %v1624 = vunpack.c.l.b16 %v968
    %v1625 = vunpack.c.h.b16 %v968
    %v1626 = vunpack.c.l.b16 %v969
    %v1627 = vunpack.c.h.b16 %v969
    %v1628 = vunpack.c.l.b16 %v970
    %v1629 = vunpack.c.h.b16 %v970
    %v1630 = vunpack.c.l.b16 %v971
    %v1631 = vunpack.c.h.b16 %v971
    %v1632 = vunpack.c.l.b16 %v972
    %v1633 = vunpack.c.h.b16 %v972
    %v1634 = vunpack.c.l.b16 %v973
    %v1635 = vunpack.c.h.b16 %v973
    %v1636 = vunpack.c.l.b16 %v974
    %v1637 = vunpack.c.h.b16 %v974
    %v1638 = vunpack.c.l.b16 %v975
    %v1639 = vunpack.c.h.b16 %v975
    %v1640 = vunpack.c.l.b16 %v976
    %v1641 = vunpack.c.h.b16 %v976
    %v1642 = vunpack.c.l.b16 %v977
    %v1643 = vunpack.c.h.b16 %v977
    %v1644 = vunpack.c.l.b16 %v978
    %v1645 = vunpack.c.h.b16 %v978
    %v1646 = vunpack.c.l.b16 %v979
    %v1647 = vunpack.c.h.b16 %v979
    %v1648 = vunpack.c.l.b16 %v980
    %v1649 = vunpack.c.h.b16 %v980
    %v1650 = vunpack.c.l.b16 %v981
    %v1651 = vunpack.c.h.b16 %v981
    %v1652 = vunpack.c.l.b16 %v982
    %v1653 = vunpack.c.h.b16 %v982
    %v1654 = vunpack.c.l.b16 %v983
    %v1655 = vunpack.c.h.b16 %v983
    %v1656 = vunpack.c.l.b16 %v984
    %v1657 = vunpack.c.h.b16 %v984
    %v1658 = vunpack.c.l.b16 %v985
    %v1659 = vunpack.c.h.b16 %v985
    %v1660 = vunpack.c.l.b16 %v986
    %v1661 = vunpack.c.h.b16 %v986
    %v1662 = vunpack.c.l.b16 %v987
    %v1663 = vunpack.c.h.b16 %v987
    %v1664 = vunpack.c.l.b16 %v988
    %v1665 = vunpack.c.h.b16 %v988
    %v1666 = vunpack.c.l.b16 %v989
    %v1667 = vunpack.c.h.b16 %v989
    %v1668 = vunpack.c.l.b16 %v990
    %v1669 = vunpack.c.h.b16 %v990
    %v1670 = vunpack.c.l.b16 %v991
    %v1671 = vunpack.c.h.b16 %v991
    %v1672 = vunpack.c.l.b16 %v992
    %v1673 = vunpack.c.h.b16 %v992
    %v1674 = vunpack.c.l.b16 %v993
    %v1675 = vunpack.c.h.b16 %v993
    %v1676 = vunpack.c.l.b16 %v994
    %v1677 = vunpack.c.h.b16 %v994
    %v1678 = vunpack.c.l.b16 %v995
    %v1679 = vunpack.c.h.b16 %v995
    %v1680 = vunpack.c.l.b16 %v996
    %v1681 = vunpack.c.h.b16 %v996
    %v1682 = vunpack.c.l.b16 %v997
    %v1683 = vunpack.c.h.b16 %v997
    %v1684 = vunpack.c.l.b16 %v998
    %v1685 = vunpack.c.h.b16 %v998
    %v1686 = vunpack.c.l.b16 %v999
    %v1687 = vunpack.c.h.b16 %v999
    %v1688 = vunpack.c.l.b16 %v1000
    %v1689 = vunpack.c.h.b16 %v1000
    %v1690 = vunpack.c.l.b16 %v1001
    %v1691 = vunpack.c.h.b16 %v1001
    %v1692 = vunpack.c.l.b16 %v1002
    %v1693 = vunpack.c.h.b16 %v1002
    %v1694 = vunpack.c.l.b16 %v1003
    %v1695 = vunpack.c.h.b16 %v1003
    %v1696 = vunpack.c.l.b16 %v1004
    %v1697 = vunpack.c.h.b16 %v1004
    %v1698 = vunpack.c.l.b16 %v1005
    %v1699 = vunpack.c.h.b16 %v1005
    %v1700 = vunpack.c.l.b16 %v1006
    %v1701 = vunpack.c.h.b16 %v1006
    %v1702 = vunpack.c.l.b16 %v1007
    %v1703 = vunpack.c.h.b16 %v1007
    %v1704 = vunpack.c.l.b16 %v1008
    %v1705 = vunpack.c.h.b16 %v1008
    %v1706 = vunpack.c.l.b16 %v1009
    %v1707 = vunpack.c.h.b16 %v1009
    %v1708 = vunpack.c.l.b16 %v1010
    %v1709 = vunpack.c.h.b16 %v1010
    %v1710 = vunpack.c.l.b16 %v1011
    %v1711 = vunpack.c.h.b16 %v1011
    %v1712 = vunpack.c.l.b16 %v1012
    %v1713 = vunpack.c.h.b16 %v1012
    %v1714 = vunpack.c.l.b16 %v1013
    %v1715 = vunpack.c.h.b16 %v1013
    %v1716 = vunpack.c.l.b16 %v1014
    %v1717 = vunpack.c.h.b16 %v1014
    %v1718 = vunpack.c.l.b16 %v1015
    %v1719 = vunpack.c.h.b16 %v1015
    %v1720 = vunpack.c.l.b16 %v1016
    %v1721 = vunpack.c.h.b16 %v1016
    %v1722 = vunpack.c.l.b16 %v1017
    %v1723 = vunpack.c.h.b16 %v1017
    %v1724 = vunpack.c.l.b16 %v1018
    %v1725 = vunpack.c.h.b16 %v1018
    %v1726 = vunpack.c.l.b16 %v1019
    %v1727 = vunpack.c.h.b16 %v1019
    %v1728 = vunpack.c.l.b16 %v1020
    %v1729 = vunpack.c.h.b16 %v1020
    %v1730 = vunpack.c.l.b16 %v1021
    %v1731 = vunpack.c.h.b16 %v1021
    %v1732 = vunpack.c.l.b16 %v1022
    %v1733 = vunpack.c.h.b16 %v1022
    %v1734 = vunpack.c.l.b16 %v1023
    %v1735 = vunpack.c.h.b16 %v1023
    %v1736 = vunpack.c.l.b16 %v1024
    %v1737 = vunpack.c.h.b16 %v1024
    %v1738 = vunpack.c.l.b16 %v1025
    %v1739 = vunpack.c.h.b16 %v1025
    %v1740 = vunpack.c.l.b16 %v1026
    %v1741 = vunpack.c.h.b16 %v1026
    %v1742 = vunpack.c.l.b16 %v1027
    %v1743 = vunpack.c.h.b16 %v1027
    %v1744 = vunpack.c.l.b16 %v1028
    %v1745 = vunpack.c.h.b16 %v1028
    %v1746 = vunpack.c.l.b16 %v1029
    %v1747 = vunpack.c.h.b16 %v1029
    %v1748 = vunpack.c.l.b16 %v1030
    %v1749 = vunpack.c.h.b16 %v1030
    %v1750 = vunpack.c.l.b16 %v1031
    %v1751 = vunpack.c.h.b16 %v1031
    %v1752 = vunpack.c.l.b16 %v1032
    %v1753 = vunpack.c.h.b16 %v1032
    %v1754 = vunpack.c.l.b16 %v1033
    %v1755 = vunpack.c.h.b16 %v1033
    %v1756 = vunpack.c.l.b16 %v1034
    %v1757 = vunpack.c.h.b16 %v1034
    %v1758 = vunpack.c.l.b16 %v1035
    %v1759 = vunpack.c.h.b16 %v1035
    %v1760 = vunpack.c.l.b16 %v1036
    %v1761 = vunpack.c.h.b16 %v1036
    %v1762 = vunpack.c.l.b16 %v1037
    %v1763 = vunpack.c.h.b16 %v1037
    %v1764 = vunpack.c.l.b16 %v1038
    %v1765 = vunpack.c.h.b16 %v1038
    %v1766 = vunpack.c.l.b16 %v1039
    %v1767 = vunpack.c.h.b16 %v1039
    %v1768 = vunpack.c.l.b16 %v1040
    %v1769 = vunpack.c.h.b16 %v1040
    %v1770 = vunpack.c.l.b16 %v1041
    %v1771 = vunpack.c.h.b16 %v1041
    %v1772 = vunpack.c.l.b16 %v1042
    %v1773 = vunpack.c.h.b16 %v1042
    %v1774 = vunpack.c.l.b16 %v1043
    %v1775 = vunpack.c.h.b16 %v1043
    %v1776 = vunpack.c.l.b16 %v1044
    %v1777 = vunpack.c.h.b16 %v1044
    %v1778 = vunpack.c.l.b16 %v1045
    %v1779 = vunpack.c.h.b16 %v1045
    %v1780 = vunpack.c.l.b16 %v1046
    %v1781 = vunpack.c.h.b16 %v1046
    %v1782 = vunpack.c.l.b16 %v1047
    %v1783 = vunpack.c.h.b16 %v1047
    %v1784 = vunpack.c.l.b16 %v1048
    %v1785 = vunpack.c.h.b16 %v1048
    %v1786 = vunpack.c.l.b16 %v1049
    %v1787 = vunpack.c.h.b16 %v1049
    %v1788 = vunpack.c.l.b16 %v1050
    %v1789 = vunpack.c.h.b16 %v1050
    %v1790 = vunpack.c.l.b16 %v1051
    %v1791 = vunpack.c.h.b16 %v1051
    %v1792 = vunpack.c.l.b16 %v1052
    %v1793 = vunpack.c.h.b16 %v1052
    %v1794 = vunpack.c.l.b16 %v1053
    %v1795 = vunpack.c.h.b16 %v1053
    %v1796 = vunpack.c.l.b16 %v1054
    %v1797 = vunpack.c.h.b16 %v1054
    %v1798 = vunpack.c.l.b16 %v1055
    %v1799 = vunpack.c.h.b16 %v1055
    %v1800 = vunpack.c.l.b16 %v1056
    %v1801 = vunpack.c.h.b16 %v1056
    %v1802 = vunpack.c.l.b16 %v1057
    %v1803 = vunpack.c.h.b16 %v1057
    %v1804 = vunpack.c.l.b16 %v1058
    %v1805 = vunpack.c.h.b16 %v1058
    %v1806 = vunpack.c.l.b16 %v1059
    %v1807 = vunpack.c.h.b16 %v1059
    %v1808 = vunpack.c.l.b16 %v1060
    %v1809 = vunpack.c.h.b16 %v1060
    %v1810 = vunpack.c.l.b16 %v1061
    %v1811 = vunpack.c.h.b16 %v1061
    %v1812 = vunpack.c.l.b16 %v1062
    %v1813 = vunpack.c.h.b16 %v1062
    %v1814 = vunpack.c.l.b16 %v1063
    %v1815 = vunpack.c.h.b16 %v1063
    %v1816 = vunpack.c.l.b16 %v1064
    %v1817 = vunpack.c.h.b16 %v1064
    %v1818 = vunpack.c.l.b16 %v1065
    %v1819 = vunpack.c.h.b16 %v1065
    %v1820 = vunpack.c.l.b16 %v1066
    %v1821 = vunpack.c.h.b16 %v1066
    %v1822 = vunpack.c.l.b16 %v1067
    %v1823 = vunpack.c.h.b16 %v1067
    %v1824 = vunpack.c.l.b16 %v1068
    %v1825 = vunpack.c.h.b16 %v1068
    %v1826 = vunpack.c.l.b16 %v1069
    %v1827 = vunpack.c.h.b16 %v1069
    %v1828 = vunpack.c.l.b16 %v1070
    %v1829 = vunpack.c.h.b16 %v1070
    %v1830 = vunpack.c.l.b16 %v1071
    %v1831 = vunpack.c.h.b16 %v1071
    %v1832 = vunpack.c.l.b16 %v1072
    %v1833 = vunpack.c.h.b16 %v1072
    %v1834 = vunpack.c.l.b16 %v1073
    %v1835 = vunpack.c.h.b16 %v1073
    %v1836 = vunpack.c.l.b16 %v1074
    %v1837 = vunpack.c.h.b16 %v1074
    %v1838 = vunpack.c.l.b16 %v1075
    %v1839 = vunpack.c.h.b16 %v1075
    %v1840 = vunpack.c.l.b16 %v1076
    %v1841 = vunpack.c.h.b16 %v1076
    %v1842 = vunpack.c.l.b16 %v1077
    %v1843 = vunpack.c.h.b16 %v1077
    %v1844 = vunpack.c.l.b16 %v1078
    %v1845 = vunpack.c.h.b16 %v1078
    %v1846 = vunpack.c.l.b16 %v1079
    %v1847 = vunpack.c.h.b16 %v1079
    %v1848 = vunpack.c.l.b16 %v1080
    %v1849 = vunpack.c.h.b16 %v1080
    %v1850 = vunpack.c.l.b16 %v1081
    %v1851 = vunpack.c.h.b16 %v1081
    %v1852 = vunpack.c.l.b16 %v1082
    %v1853 = vunpack.c.h.b16 %v1082
    %v1854 = vunpack.c.l.b16 %v1083
    %v1855 = vunpack.c.h.b16 %v1083
    %v1856 = vunpack.c.l.b16 %v1084
    %v1857 = vunpack.c.h.b16 %v1084
    %v1858 = vunpack.c.l.b16 %v1085
    %v1859 = vunpack.c.h.b16 %v1085
    %v1860 = vunpack.c.l.b16 %v1086
    %v1861 = vunpack.c.h.b16 %v1086
    %v1862 = vunpack.c.l.b16 %v1087
    %v1863 = vunpack.c.h.b16 %v1087
    %v1864 = vunpack.c.l.b16 %v1088
    %v1865 = vunpack.c.h.b16 %v1088
    %v1866 = vunpack.c.l.b16 %v1089
    %v1867 = vunpack.c.h.b16 %v1089
    %v1868 = vunpack.c.l.b16 %v1090
    %v1869 = vunpack.c.h.b16 %v1090
    %v1870 = vunpack.c.l.b16 %v1091
    %v1871 = vunpack.c.h.b16 %v1091
    %v1872 = vunpack.c.l.b16 %v1092
    %v1873 = vunpack.c.h.b16 %v1092
    %v1874 = vunpack.c.l.b16 %v1093
    %v1875 = vunpack.c.h.b16 %v1093
    %v1876 = vunpack.c.l.b16 %v1094
    %v1877 = vunpack.c.h.b16 %v1094
    %v1878 = vunpack.c.l.b16 %v1095
    %v1879 = vunpack.c.h.b16 %v1095
    %v1880 = vunpack.c.l.b16 %v1096
    %v1881 = vunpack.c.h.b16 %v1096
    %v1882 = vunpack.c.l.b16 %v1097
    %v1883 = vunpack.c.h.b16 %v1097
    %v1884 = vunpack.c.l.b16 %v1098
    %v1885 = vunpack.c.h.b16 %v1098
    %v1886 = vunpack.c.l.b16 %v1099
    %v1887 = vunpack.c.h.b16 %v1099
    %v1888 = vunpack.c.l.b16 %v1100
    %v1889 = vunpack.c.h.b16 %v1100
    %v1890 = vunpack.c.l.b16 %v1101
    %v1891 = vunpack.c.h.b16 %v1101
    %v1892 = vpack.c.b16 %v1384, %v1380
    %v1893 = vpack.c.b16 %v1385, %v1381
    %v1894 = vpack.c.b16 %v1386, %v1382
    %v1895 = vpack.c.b16 %v1387, %v1383
    %v1896 = vpack.c.b16 %v1392, %v1388
    %v1897 = vpack.c.b16 %v1393, %v1389
    %v1898 = vpack.c.b16 %v1394, %v1390
    %v1899 = vpack.c.b16 %v1395, %v1391
    %v1900 = vpack.c.b16 %v1400, %v1396
    %v1901 = vpack.c.b16 %v1401, %v1397
    %v1902 = vpack.c.b16 %v1402, %v1398
    %v1903 = vpack.c.b16 %v1403, %v1399
    %v1904 = vpack.c.b16 %v1408, %v1404
    %v1905 = vpack.c.b16 %v1409, %v1405
    %v1906 = vpack.c.b16 %v1410, %v1406
    %v1907 = vpack.c.b16 %v1411, %v1407
    %v1908 = vpack.c.b16 %v1416, %v1412
    %v1909 = vpack.c.b16 %v1417, %v1413
    %v1910 = vpack.c.b16 %v1418, %v1414
    %v1911 = vpack.c.b16 %v1419, %v1415
    %v1912 = vpack.c.b16 %v1424, %v1420
    %v1913 = vpack.c.b16 %v1425, %v1421
    %v1914 = vpack.c.b16 %v1426, %v1422
    %v1915 = vpack.c.b16 %v1427, %v1423
    %v1916 = vpack.c.b16 %v1432, %v1428
    %v1917 = vpack.c.b16 %v1433, %v1429
    %v1918 = vpack.c.b16 %v1434, %v1430
    %v1919 = vpack.c.b16 %v1435, %v1431
    %v1920 = vpack.c.b16 %v1440, %v1436
    %v1921 = vpack.c.b16 %v1441, %v1437
    %v1922 = vpack.c.b16 %v1442, %v1438
    %v1923 = vpack.c.b16 %v1443, %v1439
    %v1924 = vpack.c.b16 %v1448, %v1444
    %v1925 = vpack.c.b16 %v1449, %v1445
    %v1926 = vpack.c.b16 %v1450, %v1446
    %v1927 = vpack.c.b16 %v1451, %v1447
    %v1928 = vpack.c.b16 %v1456, %v1452
    %v1929 = vpack.c.b16 %v1457, %v1453
    %v1930 = vpack.c.b16 %v1458, %v1454
    %v1931 = vpack.c.b16 %v1459, %v1455
    %v1932 = vpack.c.b16 %v1464, %v1460
    %v1933 = vpack.c.b16 %v1465, %v1461
    %v1934 = vpack.c.b16 %v1466, %v1462
    %v1935 = vpack.c.b16 %v1467, %v1463
    %v1936 = vpack.c.b16 %v1472, %v1468
    %v1937 = vpack.c.b16 %v1473, %v1469
    %v1938 = vpack.c.b16 %v1474, %v1470
    %v1939 = vpack.c.b16 %v1475, %v1471
    %v1940 = vpack.c.b16 %v1480, %v1476
    %v1941 = vpack.c.b16 %v1481, %v1477
    %v1942 = vpack.c.b16 %v1482, %v1478
    %v1943 = vpack.c.b16 %v1483, %v1479
    %v1944 = vpack.c.b16 %v1488, %v1484
    %v1945 = vpack.c.b16 %v1489, %v1485
    %v1946 = vpack.c.b16 %v1490, %v1486
    %v1947 = vpack.c.b16 %v1491, %v1487
    %v1948 = vpack.c.b16 %v1496, %v1492
    %v1949 = vpack.c.b16 %v1497, %v1493
    %v1950 = vpack.c.b16 %v1498, %v1494
    %v1951 = vpack.c.b16 %v1499, %v1495
    %v1952 = vpack.c.b16 %v1504, %v1500
    %v1953 = vpack.c.b16 %v1505, %v1501
    %v1954 = vpack.c.b16 %v1506, %v1502
    %v1955 = vpack.c.b16 %v1507, %v1503
    %v1956 = vpack.c.b16 %v1512, %v1508
    %v1957 = vpack.c.b16 %v1513, %v1509
    %v1958 = vpack.c.b16 %v1514, %v1510
    %v1959 = vpack.c.b16 %v1515, %v1511
    %v1960 = vpack.c.b16 %v1520, %v1516
    %v1961 = vpack.c.b16 %v1521, %v1517
    %v1962 = vpack.c.b16 %v1522, %v1518
    %v1963 = vpack.c.b16 %v1523, %v1519
    %v1964 = vpack.c.b16 %v1528, %v1524
    %v1965 = vpack.c.b16 %v1529, %v1525
    %v1966 = vpack.c.b16 %v1530, %v1526
    %v1967 = vpack.c.b16 %v1531, %v1527
    %v1968 = vpack.c.b16 %v1536, %v1532
    %v1969 = vpack.c.b16 %v1537, %v1533
    %v1970 = vpack.c.b16 %v1538, %v1534
    %v1971 = vpack.c.b16 %v1539, %v1535
    %v1972 = vpack.c.b16 %v1544, %v1540
    %v1973 = vpack.c.b16 %v1545, %v1541
    %v1974 = vpack.c.b16 %v1546, %v1542
    %v1975 = vpack.c.b16 %v1547, %v1543
    %v1976 = vpack.c.b16 %v1552, %v1548
    %v1977 = vpack.c.b16 %v1553, %v1549
    %v1978 = vpack.c.b16 %v1554, %v1550
    %v1979 = vpack.c.b16 %v1555, %v1551
    %v1980 = vpack.c.b16 %v1560, %v1556
    %v1981 = vpack.c.b16 %v1561, %v1557
    %v1982 = vpack.c.b16 %v1562, %v1558
    %v1983 = vpack.c.b16 %v1563, %v1559
    %v1984 = vpack.c.b16 %v1568, %v1564
    %v1985 = vpack.c.b16 %v1569, %v1565
    %v1986 = vpack.c.b16 %v1570, %v1566
    %v1987 = vpack.c.b16 %v1571, %v1567
    %v1988 = vpack.c.b16 %v1576, %v1572
    %v1989 = vpack.c.b16 %v1577, %v1573
    %v1990 = vpack.c.b16 %v1578, %v1574
    %v1991 = vpack.c.b16 %v1579, %v1575
    %v1992 = vpack.c.b16 %v1584, %v1580
    %v1993 = vpack.c.b16 %v1585, %v1581
    %v1994 = vpack.c.b16 %v1586, %v1582
    %v1995 = vpack.c.b16 %v1587, %v1583
    %v1996 = vpack.c.b16 %v1592, %v1588
    %v1997 = vpack.c.b16 %v1593, %v1589
    %v1998 = vpack.c.b16 %v1594, %v1590
    %v1999 = vpack.c.b16 %v1595, %v1591
    %v2000 = vpack.c.b16 %v1600, %v1596
    %v2001 = vpack.c.b16 %v1601, %v1597
    %v2002 = vpack.c.b16 %v1602, %v1598
    %v2003 = vpack.c.b16 %v1603, %v1599
    %v2004 = vpack.c.b16 %v1608, %v1604
    %v2005 = vpack.c.b16 %v1609, %v1605
    %v2006 = vpack.c.b16 %v1610, %v1606
    %v2007 = vpack.c.b16 %v1611, %v1607
    %v2008 = vpack.c.b16 %v1616, %v1612
    %v2009 = vpack.c.b16 %v1617, %v1613
    %v2010 = vpack.c.b16 %v1618, %v1614
    %v2011 = vpack.c.b16 %v1619, %v1615
    %v2012 = vpack.c.b16 %v1624, %v1620
    %v2013 = vpack.c.b16 %v1625, %v1621
    %v2014 = vpack.c.b16 %v1626, %v1622
    %v2015 = vpack.c.b16 %v1627, %v1623
    %v2016 = vpack.c.b16 %v1632, %v1628
    %v2017 = vpack.c.b16 %v1633, %v1629
    %v2018 = vpack.c.b16 %v1634, %v1630
    %v2019 = vpack.c.b16 %v1635, %v1631
    %v2020 = vpack.c.b16 %v1640, %v1636
    %v2021 = vpack.c.b16 %v1641, %v1637
    %v2022 = vpack.c.b16 %v1642, %v1638
    %v2023 = vpack.c.b16 %v1643, %v1639
    %v2024 = vpack.c.b16 %v1648, %v1644
    %v2025 = vpack.c.b16 %v1649, %v1645
    %v2026 = vpack.c.b16 %v1650, %v1646
    %v2027 = vpack.c.b16 %v1651, %v1647
    %v2028 = vpack.c.b16 %v1656, %v1652
    %v2029 = vpack.c.b16 %v1657, %v1653
    %v2030 = vpack.c.b16 %v1658, %v1654
    %v2031 = vpack.c.b16 %v1659, %v1655
    %v2032 = vpack.c.b16 %v1664, %v1660
    %v2033 = vpack.c.b16 %v1665, %v1661
    %v2034 = vpack.c.b16 %v1666, %v1662
    %v2035 = vpack.c.b16 %v1667, %v1663
    %v2036 = vpack.c.b16 %v1672, %v1668
    %v2037 = vpack.c.b16 %v1673, %v1669
    %v2038 = vpack.c.b16 %v1674, %v1670
    %v2039 = vpack.c.b16 %v1675, %v1671
    %v2040 = vpack.c.b16 %v1680, %v1676
    %v2041 = vpack.c.b16 %v1681, %v1677
    %v2042 = vpack.c.b16 %v1682, %v1678
    %v2043 = vpack.c.b16 %v1683, %v1679
    %v2044 = vpack.c.b16 %v1688, %v1684
    %v2045 = vpack.c.b16 %v1689, %v1685
    %v2046 = vpack.c.b16 %v1690, %v1686
    %v2047 = vpack.c.b16 %v1691, %v1687
    %v2048 = vpack.c.b16 %v1696, %v1692
    %v2049 = vpack.c.b16 %v1697, %v1693
    %v2050 = vpack.c.b16 %v1698, %v1694
    %v2051 = vpack.c.b16 %v1699, %v1695
    %v2052 = vpack.c.b16 %v1704, %v1700
    %v2053 = vpack.c.b16 %v1705, %v1701
    %v2054 = vpack.c.b16 %v1706, %v1702
    %v2055 = vpack.c.b16 %v1707, %v1703
    %v2056 = vpack.c.b16 %v1712, %v1708
    %v2057 = vpack.c.b16 %v1713, %v1709
    %v2058 = vpack.c.b16 %v1714, %v1710
    %v2059 = vpack.c.b16 %v1715, %v1711
    %v2060 = vpack.c.b16 %v1720, %v1716
    %v2061 = vpack.c.b16 %v1721, %v1717
    %v2062 = vpack.c.b16 %v1722, %v1718
    %v2063 = vpack.c.b16 %v1723, %v1719
    %v2064 = vpack.c.b16 %v1728, %v1724
    %v2065 = vpack.c.b16 %v1729, %v1725
    %v2066 = vpack.c.b16 %v1730, %v1726
    %v2067 = vpack.c.b16 %v1731, %v1727
    %v2068 = vpack.c.b16 %v1736, %v1732
    %v2069 = vpack.c.b16 %v1737, %v1733
    %v2070 = vpack.c.b16 %v1738, %v1734
    %v2071 = vpack.c.b16 %v1739, %v1735
    %v2072 = vpack.c.b16 %v1744, %v1740
    %v2073 = vpack.c.b16 %v1745, %v1741
    %v2074 = vpack.c.b16 %v1746, %v1742
    %v2075 = vpack.c.b16 %v1747, %v1743
    %v2076 = vpack.c.b16 %v1752, %v1748
    %v2077 = vpack.c.b16 %v1753, %v1749
    %v2078 = vpack.c.b16 %v1754, %v1750
    %v2079 = vpack.c.b16 %v1755, %v1751
    %v2080 = vpack.c.b16 %v1760, %v1756
    %v2081 = vpack.c.b16 %v1761, %v1757
    %v2082 = vpack.c.b16 %v1762, %v1758
    %v2083 = vpack.c.b16 %v1763, %v1759
    %v2084 = vpack.c.b16 %v1768, %v1764
    %v2085 = vpack.c.b16 %v1769, %v1765
    %v2086 = vpack.c.b16 %v1770, %v1766
    %v2087 = vpack.c.b16 %v1771, %v1767
    %v2088 = vpack.c.b16 %v1776, %v1772
    %v2089 = vpack.c.b16 %v1777, %v1773
    %v2090 = vpack.c.b16 %v1778, %v1774
    %v2091 = vpack.c.b16 %v1779, %v1775
    %v2092 = vpack.c.b16 %v1784, %v1780
    %v2093 = vpack.c.b16 %v1785, %v1781
    %v2094 = vpack.c.b16 %v1786, %v1782
    %v2095 = vpack.c.b16 %v1787, %v1783
    %v2096 = vpack.c.b16 %v1792, %v1788
    %v2097 = vpack.c.b16 %v1793, %v1789
    %v2098 = vpack.c.b16 %v1794, %v1790
    %v2099 = vpack.c.b16 %v1795, %v1791
    %v2100 = vpack.c.b16 %v1800, %v1796
    %v2101 = vpack.c.b16 %v1801, %v1797
    %v2102 = vpack.c.b16 %v1802, %v1798
    %v2103 = vpack.c.b16 %v1803, %v1799
    %v2104 = vpack.c.b16 %v1808, %v1804
    %v2105 = vpack.c.b16 %v1809, %v1805
    %v2106 = vpack.c.b16 %v1810, %v1806
    %v2107 = vpack.c.b16 %v1811, %v1807
    %v2108 = vpack.c.b16 %v1816, %v1812
    %v2109 = vpack.c.b16 %v1817, %v1813
    %v2110 = vpack.c.b16 %v1818, %v1814
    %v2111 = vpack.c.b16 %v1819, %v1815
    %v2112 = vpack.c.b16 %v1824, %v1820
    %v2113 = vpack.c.b16 %v1825, %v1821
    %v2114 = vpack.c.b16 %v1826, %v1822
    %v2115 = vpack.c.b16 %v1827, %v1823
    %v2116 = vpack.c.b16 %v1832, %v1828
    %v2117 = vpack.c.b16 %v1833, %v1829
    %v2118 = vpack.c.b16 %v1834, %v1830
    %v2119 = vpack.c.b16 %v1835, %v1831
    %v2120 = vpack.c.b16 %v1840, %v1836
    %v2121 = vpack.c.b16 %v1841, %v1837
    %v2122 = vpack.c.b16 %v1842, %v1838
    %v2123 = vpack.c.b16 %v1843, %v1839
    %v2124 = vpack.c.b16 %v1848, %v1844
    %v2125 = vpack.c.b16 %v1849, %v1845
    %v2126 = vpack.c.b16 %v1850, %v1846
    %v2127 = vpack.c.b16 %v1851, %v1847
    %v2128 = vpack.c.b16 %v1856, %v1852
    %v2129 = vpack.c.b16 %v1857, %v1853
    %v2130 = vpack.c.b16 %v1858, %v1854
    %v2131 = vpack.c.b16 %v1859, %v1855
    %v2132 = vpack.c.b16 %v1864, %v1860
    %v2133 = vpack.c.b16 %v1865, %v1861
    %v2134 = vpack.c.b16 %v1866, %v1862
    %v2135 = vpack.c.b16 %v1867, %v1863
    %v2136 = vpack.c.b16 %v1872, %v1868
    %v2137 = vpack.c.b16 %v1873, %v1869
    %v2138 = vpack.c.b16 %v1874, %v1870
    %v2139 = vpack.c.b16 %v1875, %v1871
    %v2140 = vpack.c.b16 %v1880, %v1876
    %v2141 = vpack.c.b16 %v1881, %v1877
    %v2142 = vpack.c.b16 %v1882, %v1878
    %v2143 = vpack.c.b16 %v1883, %v1879
    %v2144 = vpack.c.b16 %v1888, %v1884
    %v2145 = vpack.c.b16 %v1889, %v1885
    %v2146 = vpack.c.b16 %v1890, %v1886
    %v2147 = vpack.c.b16 %v1891, %v1887
    %2404 = vmatprep.subr.bf16.mxu0 %v1921
    %2405 = vmatpush1.bf16.msra.mxu0 %v1920
    %2406 = vmatprep.subr.bf16.mxu0 %v1917
    %2407 = vmatpush1.bf16.msra.mxu0 %v1916
    %2408 = vmatprep.subr.bf16.mxu0 %v1913
    %2409 = vmatpush1.bf16.msra.mxu0 %v1912
    %2410 = vmatprep.subr.bf16.mxu0 %v1909
    %2411 = vmatpush1.bf16.msra.mxu0 %v1908
    %2412 = vmatprep.subr.bf16.mxu0 %v1905
    %2413 = vmatpush1.bf16.msra.mxu0 %v1904
    %2414 = vmatprep.subr.bf16.mxu0 %v1901
    %2415 = vmatpush1.bf16.msra.mxu0 %v1900
    %2416 = vmatprep.subr.bf16.mxu0 %v1897
    %2417 = vmatpush1.bf16.msra.mxu0 %v1896
    %2418 = vmatprep.subr.bf16.mxu0 %v1893
    %2419 = vmatpush1.bf16.msra.mxu0 %v1892
    %2420 = vmatprep.subr.bf16.mxu0 %v1953
    %2421 = vmatpush2.bf16.msra.mxu0 %v1952
    %2422 = vmatprep.subr.bf16.mxu0 %v1949
    %2423 = vmatpush2.bf16.msra.mxu0 %v1948
    %2424 = vmatprep.subr.bf16.mxu0 %v1945
    %2425 = vmatpush2.bf16.msra.mxu0 %v1944
    %2426 = vmatprep.subr.bf16.mxu0 %v1941
    %2427 = vmatpush2.bf16.msra.mxu0 %v1940
    %2428 = vmatprep.subr.bf16.mxu0 %v1937
    %2429 = vmatpush2.bf16.msra.mxu0 %v1936
    %2430 = vmatprep.subr.bf16.mxu0 %v1933
    %2431 = vmatpush2.bf16.msra.mxu0 %v1932
    %2432 = vmatprep.subr.bf16.mxu0 %v1929
    %2433 = vmatpush2.bf16.msra.mxu0 %v1928
    %2434 = vmatprep.subr.bf16.mxu0 %v1925
    %2435 = vmatpush2.bf16.msra.mxu0 %v1924
    %2436 = vmatprep.mubr.bf16.mxu0 %v815
    %2437 = vmatmul.mubr.bf16.gmra.mxu0 %v814
    %v2438 = vpop.f32.mrf.mxu0
    %v2439 = vadd.f32 %v1107, %v2438
    %v2440 = vpop.f32.mrf.mxu0
    %v2441 = vadd.f32 %v1111, %v2440
    %v2442 = vpop.f32.mrf.mxu0
    %v2443 = vadd.f32 %v1107, %v2442
    %v2444 = vpop.f32.mrf.mxu0
    %v2445 = vadd.f32 %v1111, %v2444
    %2446 = vmatprep.mubr.bf16.mxu0 %v823
    %2447 = vmatmul.mubr.bf16.gmra.mxu0 %v822
    %v2448 = vpop.f32.mrf.mxu0
    %v2449 = vadd.f32 %v1107, %v2448
    %v2450 = vpop.f32.mrf.mxu0
    %v2451 = vadd.f32 %v1111, %v2450
    %v2452 = vpop.f32.mrf.mxu0
    %v2453 = vadd.f32 %v1107, %v2452
    %v2454 = vpop.f32.mrf.mxu0
    %v2455 = vadd.f32 %v1111, %v2454
    %2456 = vmatprep.mubr.bf16.mxu0 %v831
    %2457 = vmatmul.mubr.bf16.gmra.mxu0 %v830
    %v2458 = vpop.f32.mrf.mxu0
    %v2459 = vadd.f32 %v1107, %v2458
    %v2460 = vpop.f32.mrf.mxu0
    %v2461 = vadd.f32 %v1111, %v2460
    %v2462 = vpop.f32.mrf.mxu0
    %v2463 = vadd.f32 %v1107, %v2462
    %v2464 = vpop.f32.mrf.mxu0
    %v2465 = vadd.f32 %v1111, %v2464
    %2466 = vmatprep.mubr.bf16.mxu0 %v839
    %2467 = vmatmul.mubr.bf16.gmra.mxu0 %v838
    %v2468 = vpop.f32.mrf.mxu0
    %v2469 = vadd.f32 %v1107, %v2468
    %v2470 = vpop.f32.mrf.mxu0
    %v2471 = vadd.f32 %v1111, %v2470
    %v2472 = vpop.f32.mrf.mxu0
    %v2473 = vadd.f32 %v1107, %v2472
    %v2474 = vpop.f32.mrf.mxu0
    %v2475 = vadd.f32 %v1111, %v2474
    %2476 = vdwg.mxu0
    %2477 = vmatprep.subr.bf16.mxu0 %v1985
    %2478 = vmatpush1.bf16.msra.mxu0 %v1984
    %2479 = vmatprep.subr.bf16.mxu0 %v1981
    %2480 = vmatpush1.bf16.msra.mxu0 %v1980
    %2481 = vmatprep.subr.bf16.mxu0 %v1977
    %2482 = vmatpush1.bf16.msra.mxu0 %v1976
    %2483 = vmatprep.subr.bf16.mxu0 %v1973
    %2484 = vmatpush1.bf16.msra.mxu0 %v1972
    %2485 = vmatprep.subr.bf16.mxu0 %v1969
    %2486 = vmatpush1.bf16.msra.mxu0 %v1968
    %2487 = vmatprep.subr.bf16.mxu0 %v1965
    %2488 = vmatpush1.bf16.msra.mxu0 %v1964
    %2489 = vmatprep.subr.bf16.mxu0 %v1961
    %2490 = vmatpush1.bf16.msra.mxu0 %v1960
    %2491 = vmatprep.subr.bf16.mxu0 %v1957
    %2492 = vmatpush1.bf16.msra.mxu0 %v1956
    %2493 = vmatprep.subr.bf16.mxu0 %v2017
    %2494 = vmatpush2.bf16.msra.mxu0 %v2016
    %2495 = vmatprep.subr.bf16.mxu0 %v2013
    %2496 = vmatpush2.bf16.msra.mxu0 %v2012
    %2497 = vmatprep.subr.bf16.mxu0 %v2009
    %2498 = vmatpush2.bf16.msra.mxu0 %v2008
    %2499 = vmatprep.subr.bf16.mxu0 %v2005
    %2500 = vmatpush2.bf16.msra.mxu0 %v2004
    %2501 = vmatprep.subr.bf16.mxu0 %v2001
    %2502 = vmatpush2.bf16.msra.mxu0 %v2000
    %2503 = vmatprep.subr.bf16.mxu0 %v1997
    %2504 = vmatpush2.bf16.msra.mxu0 %v1996
    %2505 = vmatprep.subr.bf16.mxu0 %v1993
    %2506 = vmatpush2.bf16.msra.mxu0 %v1992
    %2507 = vmatprep.subr.bf16.mxu0 %v1989
    %2508 = vmatpush2.bf16.msra.mxu0 %v1988
    %2509 = vmatprep.mubr.bf16.mxu0 %v817
    %2510 = vmatmul.mubr.bf16.gmra.mxu0 %v816
    %v2511 = vpop.f32.mrf.mxu0
    %v2512 = vadd.f32 %v2439, %v2511
    %v2513 = vpop.f32.mrf.mxu0
    %v2514 = vadd.f32 %v2441, %v2513
    %v2515 = vpop.f32.mrf.mxu0
    %v2516 = vadd.f32 %v2443, %v2515
    %v2517 = vpop.f32.mrf.mxu0
    %v2518 = vadd.f32 %v2445, %v2517
    %2519 = vmatprep.mubr.bf16.mxu0 %v825
    %2520 = vmatmul.mubr.bf16.gmra.mxu0 %v824
    %v2521 = vpop.f32.mrf.mxu0
    %v2522 = vadd.f32 %v2449, %v2521
    %v2523 = vpop.f32.mrf.mxu0
    %v2524 = vadd.f32 %v2451, %v2523
    %v2525 = vpop.f32.mrf.mxu0
    %v2526 = vadd.f32 %v2453, %v2525
    %v2527 = vpop.f32.mrf.mxu0
    %v2528 = vadd.f32 %v2455, %v2527
    %2529 = vmatprep.mubr.bf16.mxu0 %v833
    %2530 = vmatmul.mubr.bf16.gmra.mxu0 %v832
    %v2531 = vpop.f32.mrf.mxu0
    %v2532 = vadd.f32 %v2459, %v2531
    %v2533 = vpop.f32.mrf.mxu0
    %v2534 = vadd.f32 %v2461, %v2533
    %v2535 = vpop.f32.mrf.mxu0
    %v2536 = vadd.f32 %v2463, %v2535
    %v2537 = vpop.f32.mrf.mxu0
    %v2538 = vadd.f32 %v2465, %v2537
    %2539 = vmatprep.mubr.bf16.mxu0 %v841
    %2540 = vmatmul.mubr.bf16.gmra.mxu0 %v840
    %v2541 = vpop.f32.mrf.mxu0
    %v2542 = vadd.f32 %v2469, %v2541
    %v2543 = vpop.f32.mrf.mxu0
    %v2544 = vadd.f32 %v2471, %v2543
    %v2545 = vpop.f32.mrf.mxu0
    %v2546 = vadd.f32 %v2473, %v2545
    %v2547 = vpop.f32.mrf.mxu0
    %v2548 = vadd.f32 %v2475, %v2547
    %2549 = vdwg.mxu0
    %2550 = vmatprep.subr.bf16.mxu0 %v2049
    %2551 = vmatpush1.bf16.msra.mxu0 %v2048
    %2552 = vmatprep.subr.bf16.mxu0 %v2045
    %2553 = vmatpush1.bf16.msra.mxu0 %v2044
    %2554 = vmatprep.subr.bf16.mxu0 %v2041
    %2555 = vmatpush1.bf16.msra.mxu0 %v2040
    %2556 = vmatprep.subr.bf16.mxu0 %v2037
    %2557 = vmatpush1.bf16.msra.mxu0 %v2036
    %2558 = vmatprep.subr.bf16.mxu0 %v2033
    %2559 = vmatpush1.bf16.msra.mxu0 %v2032
    %2560 = vmatprep.subr.bf16.mxu0 %v2029
    %2561 = vmatpush1.bf16.msra.mxu0 %v2028
    %2562 = vmatprep.subr.bf16.mxu0 %v2025
    %2563 = vmatpush1.bf16.msra.mxu0 %v2024
    %2564 = vmatprep.subr.bf16.mxu0 %v2021
    %2565 = vmatpush1.bf16.msra.mxu0 %v2020
    %2566 = vmatprep.subr.bf16.mxu0 %v2081
    %2567 = vmatpush2.bf16.msra.mxu0 %v2080
    %2568 = vmatprep.subr.bf16.mxu0 %v2077
    %2569 = vmatpush2.bf16.msra.mxu0 %v2076
    %2570 = vmatprep.subr.bf16.mxu0 %v2073
    %2571 = vmatpush2.bf16.msra.mxu0 %v2072
    %2572 = vmatprep.subr.bf16.mxu0 %v2069
    %2573 = vmatpush2.bf16.msra.mxu0 %v2068
    %2574 = vmatprep.subr.bf16.mxu0 %v2065
    %2575 = vmatpush2.bf16.msra.mxu0 %v2064
    %2576 = vmatprep.subr.bf16.mxu0 %v2061
    %2577 = vmatpush2.bf16.msra.mxu0 %v2060
    %2578 = vmatprep.subr.bf16.mxu0 %v2057
    %2579 = vmatpush2.bf16.msra.mxu0 %v2056
    %2580 = vmatprep.subr.bf16.mxu0 %v2053
    %2581 = vmatpush2.bf16.msra.mxu0 %v2052
    %2582 = vmatprep.mubr.bf16.mxu0 %v819
    %2583 = vmatmul.mubr.bf16.gmra.mxu0 %v818
    %v2584 = vpop.f32.mrf.mxu0
    %v2585 = vadd.f32 %v2512, %v2584
    %v2586 = vpop.f32.mrf.mxu0
    %v2587 = vadd.f32 %v2514, %v2586
    %v2588 = vpop.f32.mrf.mxu0
    %v2589 = vadd.f32 %v2516, %v2588
    %v2590 = vpop.f32.mrf.mxu0
    %v2591 = vadd.f32 %v2518, %v2590
    %2592 = vmatprep.mubr.bf16.mxu0 %v827
    %2593 = vmatmul.mubr.bf16.gmra.mxu0 %v826
    %v2594 = vpop.f32.mrf.mxu0
    %v2595 = vadd.f32 %v2522, %v2594
    %v2596 = vpop.f32.mrf.mxu0
    %v2597 = vadd.f32 %v2524, %v2596
    %v2598 = vpop.f32.mrf.mxu0
    %v2599 = vadd.f32 %v2526, %v2598
    %v2600 = vpop.f32.mrf.mxu0
    %v2601 = vadd.f32 %v2528, %v2600
    %2602 = vmatprep.mubr.bf16.mxu0 %v835
    %2603 = vmatmul.mubr.bf16.gmra.mxu0 %v834
    %v2604 = vpop.f32.mrf.mxu0
    %v2605 = vadd.f32 %v2532, %v2604
    %v2606 = vpop.f32.mrf.mxu0
    %v2607 = vadd.f32 %v2534, %v2606
    %v2608 = vpop.f32.mrf.mxu0
    %v2609 = vadd.f32 %v2536, %v2608
    %v2610 = vpop.f32.mrf.mxu0
    %v2611 = vadd.f32 %v2538, %v2610
    %2612 = vmatprep.mubr.bf16.mxu0 %v843
    %2613 = vmatmul.mubr.bf16.gmra.mxu0 %v842
    %v2614 = vpop.f32.mrf.mxu0
    %v2615 = vadd.f32 %v2542, %v2614
    %v2616 = vpop.f32.mrf.mxu0
    %v2617 = vadd.f32 %v2544, %v2616
    %v2618 = vpop.f32.mrf.mxu0
    %v2619 = vadd.f32 %v2546, %v2618
    %v2620 = vpop.f32.mrf.mxu0
    %v2621 = vadd.f32 %v2548, %v2620
    %2622 = vdwg.mxu0
    %2623 = vmatprep.subr.bf16.mxu0 %v2113
    %2624 = vmatpush1.bf16.msra.mxu0 %v2112
    %2625 = vmatprep.subr.bf16.mxu0 %v2109
    %2626 = vmatpush1.bf16.msra.mxu0 %v2108
    %2627 = vmatprep.subr.bf16.mxu0 %v2105
    %2628 = vmatpush1.bf16.msra.mxu0 %v2104
    %2629 = vmatprep.subr.bf16.mxu0 %v2101
    %2630 = vmatpush1.bf16.msra.mxu0 %v2100
    %2631 = vmatprep.subr.bf16.mxu0 %v2097
    %2632 = vmatpush1.bf16.msra.mxu0 %v2096
    %2633 = vmatprep.subr.bf16.mxu0 %v2093
    %2634 = vmatpush1.bf16.msra.mxu0 %v2092
    %2635 = vmatprep.subr.bf16.mxu0 %v2089
    %2636 = vmatpush1.bf16.msra.mxu0 %v2088
    %2637 = vmatprep.subr.bf16.mxu0 %v2085
    %2638 = vmatpush1.bf16.msra.mxu0 %v2084
    %2639 = vmatprep.subr.bf16.mxu0 %v2145
    %2640 = vmatpush2.bf16.msra.mxu0 %v2144
    %2641 = vmatprep.subr.bf16.mxu0 %v2141
    %2642 = vmatpush2.bf16.msra.mxu0 %v2140
    %2643 = vmatprep.subr.bf16.mxu0 %v2137
    %2644 = vmatpush2.bf16.msra.mxu0 %v2136
    %2645 = vmatprep.subr.bf16.mxu0 %v2133
    %2646 = vmatpush2.bf16.msra.mxu0 %v2132
    %2647 = vmatprep.subr.bf16.mxu0 %v2129
    %2648 = vmatpush2.bf16.msra.mxu0 %v2128
    %2649 = vmatprep.subr.bf16.mxu0 %v2125
    %2650 = vmatpush2.bf16.msra.mxu0 %v2124
    %2651 = vmatprep.subr.bf16.mxu0 %v2121
    %2652 = vmatpush2.bf16.msra.mxu0 %v2120
    %2653 = vmatprep.subr.bf16.mxu0 %v2117
    %2654 = vmatpush2.bf16.msra.mxu0 %v2116
    %2655 = vmatprep.mubr.bf16.mxu0 %v821
    %2656 = vmatmul.mubr.bf16.gmra.mxu0 %v820
    %v2657 = vpop.f32.mrf.mxu0
    %v2658 = vadd.f32 %v2585, %v2657
    %v2659 = vpop.f32.mrf.mxu0
    %v2660 = vadd.f32 %v2587, %v2659
    %v2661 = vpop.f32.mrf.mxu0
    %v2662 = vadd.f32 %v2589, %v2661
    %v2663 = vpop.f32.mrf.mxu0
    %v2664 = vadd.f32 %v2591, %v2663
    %2665 = vmatprep.mubr.bf16.mxu0 %v829
    %2666 = vmatmul.mubr.bf16.gmra.mxu0 %v828
    %v2667 = vpop.f32.mrf.mxu0
    %v2668 = vadd.f32 %v2595, %v2667
    %v2669 = vpop.f32.mrf.mxu0
    %v2670 = vadd.f32 %v2597, %v2669
    %v2671 = vpop.f32.mrf.mxu0
    %v2672 = vadd.f32 %v2599, %v2671
    %v2673 = vpop.f32.mrf.mxu0
    %v2674 = vadd.f32 %v2601, %v2673
    %2675 = vmatprep.mubr.bf16.mxu0 %v837
    %2676 = vmatmul.mubr.bf16.gmra.mxu0 %v836
    %v2677 = vpop.f32.mrf.mxu0
    %v2678 = vadd.f32 %v2605, %v2677
    %v2679 = vpop.f32.mrf.mxu0
    %v2680 = vadd.f32 %v2607, %v2679
    %v2681 = vpop.f32.mrf.mxu0
    %v2682 = vadd.f32 %v2609, %v2681
    %v2683 = vpop.f32.mrf.mxu0
    %v2684 = vadd.f32 %v2611, %v2683
    %2685 = vmatprep.mubr.bf16.mxu0 %v845
    %2686 = vmatmul.mubr.bf16.gmra.mxu0 %v844
    %v2687 = vpop.f32.mrf.mxu0
    %v2688 = vadd.f32 %v2615, %v2687
    %v2689 = vpop.f32.mrf.mxu0
    %v2690 = vadd.f32 %v2617, %v2689
    %v2691 = vpop.f32.mrf.mxu0
    %v2692 = vadd.f32 %v2619, %v2691
    %v2693 = vpop.f32.mrf.mxu0
    %v2694 = vadd.f32 %v2621, %v2693
    %2695 = vdwg.mxu0
    %2696 = vmatprep.subr.bf16.mxu0 %v1923
    %2697 = vmatpush1.bf16.msra.mxu0 %v1922
    %2698 = vmatprep.subr.bf16.mxu0 %v1919
    %2699 = vmatpush1.bf16.msra.mxu0 %v1918
    %2700 = vmatprep.subr.bf16.mxu0 %v1915
    %2701 = vmatpush1.bf16.msra.mxu0 %v1914
    %2702 = vmatprep.subr.bf16.mxu0 %v1911
    %2703 = vmatpush1.bf16.msra.mxu0 %v1910
    %2704 = vmatprep.subr.bf16.mxu0 %v1907
    %2705 = vmatpush1.bf16.msra.mxu0 %v1906
    %2706 = vmatprep.subr.bf16.mxu0 %v1903
    %2707 = vmatpush1.bf16.msra.mxu0 %v1902
    %2708 = vmatprep.subr.bf16.mxu0 %v1899
    %2709 = vmatpush1.bf16.msra.mxu0 %v1898
    %2710 = vmatprep.subr.bf16.mxu0 %v1895
    %2711 = vmatpush1.bf16.msra.mxu0 %v1894
    %2712 = vmatprep.subr.bf16.mxu0 %v1955
    %2713 = vmatpush2.bf16.msra.mxu0 %v1954
    %2714 = vmatprep.subr.bf16.mxu0 %v1951
    %2715 = vmatpush2.bf16.msra.mxu0 %v1950
    %2716 = vmatprep.subr.bf16.mxu0 %v1947
    %2717 = vmatpush2.bf16.msra.mxu0 %v1946
    %2718 = vmatprep.subr.bf16.mxu0 %v1943
    %2719 = vmatpush2.bf16.msra.mxu0 %v1942
    %2720 = vmatprep.subr.bf16.mxu0 %v1939
    %2721 = vmatpush2.bf16.msra.mxu0 %v1938
    %2722 = vmatprep.subr.bf16.mxu0 %v1935
    %2723 = vmatpush2.bf16.msra.mxu0 %v1934
    %2724 = vmatprep.subr.bf16.mxu0 %v1931
    %2725 = vmatpush2.bf16.msra.mxu0 %v1930
    %2726 = vmatprep.subr.bf16.mxu0 %v1927
    %2727 = vmatpush2.bf16.msra.mxu0 %v1926
    %2728 = vmatprep.mubr.bf16.mxu0 %v815
    %2729 = vmatmul.mubr.bf16.gmra.mxu0 %v814
    %v2730 = vpop.f32.mrf.mxu0
    %v2731 = vadd.f32 %v1115, %v2730
    %v2732 = vpop.f32.mrf.mxu0
    %v2733 = vadd.f32 %v1119, %v2732
    %v2734 = vpop.f32.mrf.mxu0
    %v2735 = vadd.f32 %v1115, %v2734
    %v2736 = vpop.f32.mrf.mxu0
    %v2737 = vadd.f32 %v1119, %v2736
    %2738 = vmatprep.mubr.bf16.mxu0 %v823
    %2739 = vmatmul.mubr.bf16.gmra.mxu0 %v822
    %v2740 = vpop.f32.mrf.mxu0
    %v2741 = vadd.f32 %v1115, %v2740
    %v2742 = vpop.f32.mrf.mxu0
    %v2743 = vadd.f32 %v1119, %v2742
    %v2744 = vpop.f32.mrf.mxu0
    %v2745 = vadd.f32 %v1115, %v2744
    %v2746 = vpop.f32.mrf.mxu0
    %v2747 = vadd.f32 %v1119, %v2746
    %2748 = vmatprep.mubr.bf16.mxu0 %v831
    %2749 = vmatmul.mubr.bf16.gmra.mxu0 %v830
    %v2750 = vpop.f32.mrf.mxu0
    %v2751 = vadd.f32 %v1115, %v2750
    %v2752 = vpop.f32.mrf.mxu0
    %v2753 = vadd.f32 %v1119, %v2752
    %v2754 = vpop.f32.mrf.mxu0
    %v2755 = vadd.f32 %v1115, %v2754
    %v2756 = vpop.f32.mrf.mxu0
    %v2757 = vadd.f32 %v1119, %v2756
    %2758 = vmatprep.mubr.bf16.mxu0 %v839
    %2759 = vmatmul.mubr.bf16.gmra.mxu0 %v838
    %v2760 = vpop.f32.mrf.mxu0
    %v2761 = vadd.f32 %v1115, %v2760
    %v2762 = vpop.f32.mrf.mxu0
    %v2763 = vadd.f32 %v1119, %v2762
    %v2764 = vpop.f32.mrf.mxu0
    %v2765 = vadd.f32 %v1115, %v2764
    %v2766 = vpop.f32.mrf.mxu0
    %v2767 = vadd.f32 %v1119, %v2766
    %2768 = vdwg.mxu0
    %2769 = vmatprep.subr.bf16.mxu0 %v1987
    %2770 = vmatpush1.bf16.msra.mxu0 %v1986
    %2771 = vmatprep.subr.bf16.mxu0 %v1983
    %2772 = vmatpush1.bf16.msra.mxu0 %v1982
    %2773 = vmatprep.subr.bf16.mxu0 %v1979
    %2774 = vmatpush1.bf16.msra.mxu0 %v1978
    %2775 = vmatprep.subr.bf16.mxu0 %v1975
    %2776 = vmatpush1.bf16.msra.mxu0 %v1974
    %2777 = vmatprep.subr.bf16.mxu0 %v1971
    %2778 = vmatpush1.bf16.msra.mxu0 %v1970
    %2779 = vmatprep.subr.bf16.mxu0 %v1967
    %2780 = vmatpush1.bf16.msra.mxu0 %v1966
    %2781 = vmatprep.subr.bf16.mxu0 %v1963
    %2782 = vmatpush1.bf16.msra.mxu0 %v1962
    %2783 = vmatprep.subr.bf16.mxu0 %v1959
    %2784 = vmatpush1.bf16.msra.mxu0 %v1958
    %2785 = vmatprep.subr.bf16.mxu0 %v2019
    %2786 = vmatpush2.bf16.msra.mxu0 %v2018
    %2787 = vmatprep.subr.bf16.mxu0 %v2015
    %2788 = vmatpush2.bf16.msra.mxu0 %v2014
    %2789 = vmatprep.subr.bf16.mxu0 %v2011
    %2790 = vmatpush2.bf16.msra.mxu0 %v2010
    %2791 = vmatprep.subr.bf16.mxu0 %v2007
    %2792 = vmatpush2.bf16.msra.mxu0 %v2006
    %2793 = vmatprep.subr.bf16.mxu0 %v2003
    %2794 = vmatpush2.bf16.msra.mxu0 %v2002
    %2795 = vmatprep.subr.bf16.mxu0 %v1999
    %2796 = vmatpush2.bf16.msra.mxu0 %v1998
    %2797 = vmatprep.subr.bf16.mxu0 %v1995
    %2798 = vmatpush2.bf16.msra.mxu0 %v1994
    %2799 = vmatprep.subr.bf16.mxu0 %v1991
    %2800 = vmatpush2.bf16.msra.mxu0 %v1990
    %2801 = vmatprep.mubr.bf16.mxu0 %v817
    %2802 = vmatmul.mubr.bf16.gmra.mxu0 %v816
    %v2803 = vpop.f32.mrf.mxu0
    %v2804 = vadd.f32 %v2731, %v2803
    %v2805 = vpop.f32.mrf.mxu0
    %v2806 = vadd.f32 %v2733, %v2805
    %v2807 = vpop.f32.mrf.mxu0
    %v2808 = vadd.f32 %v2735, %v2807
    %v2809 = vpop.f32.mrf.mxu0
    %v2810 = vadd.f32 %v2737, %v2809
    %2811 = vmatprep.mubr.bf16.mxu0 %v825
    %2812 = vmatmul.mubr.bf16.gmra.mxu0 %v824
    %v2813 = vpop.f32.mrf.mxu0
    %v2814 = vadd.f32 %v2741, %v2813
    %v2815 = vpop.f32.mrf.mxu0
    %v2816 = vadd.f32 %v2743, %v2815
    %v2817 = vpop.f32.mrf.mxu0
    %v2818 = vadd.f32 %v2745, %v2817
    %v2819 = vpop.f32.mrf.mxu0
    %v2820 = vadd.f32 %v2747, %v2819
    %2821 = vmatprep.mubr.bf16.mxu0 %v833
    %2822 = vmatmul.mubr.bf16.gmra.mxu0 %v832
    %v2823 = vpop.f32.mrf.mxu0
    %v2824 = vadd.f32 %v2751, %v2823
    %v2825 = vpop.f32.mrf.mxu0
    %v2826 = vadd.f32 %v2753, %v2825
    %v2827 = vpop.f32.mrf.mxu0
    %v2828 = vadd.f32 %v2755, %v2827
    %v2829 = vpop.f32.mrf.mxu0
    %v2830 = vadd.f32 %v2757, %v2829
    %2831 = vmatprep.mubr.bf16.mxu0 %v841
    %2832 = vmatmul.mubr.bf16.gmra.mxu0 %v840
    %v2833 = vpop.f32.mrf.mxu0
    %v2834 = vadd.f32 %v2761, %v2833
    %v2835 = vpop.f32.mrf.mxu0
    %v2836 = vadd.f32 %v2763, %v2835
    %v2837 = vpop.f32.mrf.mxu0
    %v2838 = vadd.f32 %v2765, %v2837
    %v2839 = vpop.f32.mrf.mxu0
    %v2840 = vadd.f32 %v2767, %v2839
    %2841 = vdwg.mxu0
    %2842 = vmatprep.subr.bf16.mxu0 %v2051
    %2843 = vmatpush1.bf16.msra.mxu0 %v2050
    %2844 = vmatprep.subr.bf16.mxu0 %v2047
    %2845 = vmatpush1.bf16.msra.mxu0 %v2046
    %2846 = vmatprep.subr.bf16.mxu0 %v2043
    %2847 = vmatpush1.bf16.msra.mxu0 %v2042
    %2848 = vmatprep.subr.bf16.mxu0 %v2039
    %2849 = vmatpush1.bf16.msra.mxu0 %v2038
    %2850 = vmatprep.subr.bf16.mxu0 %v2035
    %2851 = vmatpush1.bf16.msra.mxu0 %v2034
    %2852 = vmatprep.subr.bf16.mxu0 %v2031
    %2853 = vmatpush1.bf16.msra.mxu0 %v2030
    %2854 = vmatprep.subr.bf16.mxu0 %v2027
    %2855 = vmatpush1.bf16.msra.mxu0 %v2026
    %2856 = vmatprep.subr.bf16.mxu0 %v2023
    %2857 = vmatpush1.bf16.msra.mxu0 %v2022
    %2858 = vmatprep.subr.bf16.mxu0 %v2083
    %2859 = vmatpush2.bf16.msra.mxu0 %v2082
    %2860 = vmatprep.subr.bf16.mxu0 %v2079
    %2861 = vmatpush2.bf16.msra.mxu0 %v2078
    %2862 = vmatprep.subr.bf16.mxu0 %v2075
    %2863 = vmatpush2.bf16.msra.mxu0 %v2074
    %2864 = vmatprep.subr.bf16.mxu0 %v2071
    %2865 = vmatpush2.bf16.msra.mxu0 %v2070
    %2866 = vmatprep.subr.bf16.mxu0 %v2067
    %2867 = vmatpush2.bf16.msra.mxu0 %v2066
    %2868 = vmatprep.subr.bf16.mxu0 %v2063
    %2869 = vmatpush2.bf16.msra.mxu0 %v2062
    %2870 = vmatprep.subr.bf16.mxu0 %v2059
    %2871 = vmatpush2.bf16.msra.mxu0 %v2058
    %2872 = vmatprep.subr.bf16.mxu0 %v2055
    %2873 = vmatpush2.bf16.msra.mxu0 %v2054
    %2874 = vmatprep.mubr.bf16.mxu0 %v819
    %2875 = vmatmul.mubr.bf16.gmra.mxu0 %v818
    %v2876 = vpop.f32.mrf.mxu0
    %v2877 = vadd.f32 %v2804, %v2876
    %v2878 = vpop.f32.mrf.mxu0
    %v2879 = vadd.f32 %v2806, %v2878
    %v2880 = vpop.f32.mrf.mxu0
    %v2881 = vadd.f32 %v2808, %v2880
    %v2882 = vpop.f32.mrf.mxu0
    %v2883 = vadd.f32 %v2810, %v2882
    %2884 = vmatprep.mubr.bf16.mxu0 %v827
    %2885 = vmatmul.mubr.bf16.gmra.mxu0 %v826
    %v2886 = vpop.f32.mrf.mxu0
    %v2887 = vadd.f32 %v2814, %v2886
    %v2888 = vpop.f32.mrf.mxu0
    %v2889 = vadd.f32 %v2816, %v2888
    %v2890 = vpop.f32.mrf.mxu0
    %v2891 = vadd.f32 %v2818, %v2890
    %v2892 = vpop.f32.mrf.mxu0
    %v2893 = vadd.f32 %v2820, %v2892
    %2894 = vmatprep.mubr.bf16.mxu0 %v835
    %2895 = vmatmul.mubr.bf16.gmra.mxu0 %v834
    %v2896 = vpop.f32.mrf.mxu0
    %v2897 = vadd.f32 %v2824, %v2896
    %v2898 = vpop.f32.mrf.mxu0
    %v2899 = vadd.f32 %v2826, %v2898
    %v2900 = vpop.f32.mrf.mxu0
    %v2901 = vadd.f32 %v2828, %v2900
    %v2902 = vpop.f32.mrf.mxu0
    %v2903 = vadd.f32 %v2830, %v2902
    %2904 = vmatprep.mubr.bf16.mxu0 %v843
    %2905 = vmatmul.mubr.bf16.gmra.mxu0 %v842
    %v2906 = vpop.f32.mrf.mxu0
    %v2907 = vadd.f32 %v2834, %v2906
    %v2908 = vpop.f32.mrf.mxu0
    %v2909 = vadd.f32 %v2836, %v2908
    %v2910 = vpop.f32.mrf.mxu0
    %v2911 = vadd.f32 %v2838, %v2910
    %v2912 = vpop.f32.mrf.mxu0
    %v2913 = vadd.f32 %v2840, %v2912
    %2914 = vdwg.mxu0
    %2915 = vmatprep.subr.bf16.mxu0 %v2115
    %2916 = vmatpush1.bf16.msra.mxu0 %v2114
    %2917 = vmatprep.subr.bf16.mxu0 %v2111
    %2918 = vmatpush1.bf16.msra.mxu0 %v2110
    %2919 = vmatprep.subr.bf16.mxu0 %v2107
    %2920 = vmatpush1.bf16.msra.mxu0 %v2106
    %2921 = vmatprep.subr.bf16.mxu0 %v2103
    %2922 = vmatpush1.bf16.msra.mxu0 %v2102
    %2923 = vmatprep.subr.bf16.mxu0 %v2099
    %2924 = vmatpush1.bf16.msra.mxu0 %v2098
    %2925 = vmatprep.subr.bf16.mxu0 %v2095
    %2926 = vmatpush1.bf16.msra.mxu0 %v2094
    %2927 = vmatprep.subr.bf16.mxu0 %v2091
    %2928 = vmatpush1.bf16.msra.mxu0 %v2090
    %2929 = vmatprep.subr.bf16.mxu0 %v2087
    %2930 = vmatpush1.bf16.msra.mxu0 %v2086
    %2931 = vmatprep.subr.bf16.mxu0 %v2147
    %2932 = vmatpush2.bf16.msra.mxu0 %v2146
    %2933 = vmatprep.subr.bf16.mxu0 %v2143
    %2934 = vmatpush2.bf16.msra.mxu0 %v2142
    %2935 = vmatprep.subr.bf16.mxu0 %v2139
    %2936 = vmatpush2.bf16.msra.mxu0 %v2138
    %2937 = vmatprep.subr.bf16.mxu0 %v2135
    %2938 = vmatpush2.bf16.msra.mxu0 %v2134
    %2939 = vmatprep.subr.bf16.mxu0 %v2131
    %2940 = vmatpush2.bf16.msra.mxu0 %v2130
    %2941 = vmatprep.subr.bf16.mxu0 %v2127
    %2942 = vmatpush2.bf16.msra.mxu0 %v2126
    %2943 = vmatprep.subr.bf16.mxu0 %v2123
    %2944 = vmatpush2.bf16.msra.mxu0 %v2122
    %2945 = vmatprep.subr.bf16.mxu0 %v2119
    %2946 = vmatpush2.bf16.msra.mxu0 %v2118
    %2947 = vmatprep.mubr.bf16.mxu0 %v821
    %2948 = vmatmul.mubr.bf16.gmra.mxu0 %v820
    %v2949 = vpop.f32.mrf.mxu0
    %v2950 = vadd.f32 %v2877, %v2949
    %v2951 = vpop.f32.mrf.mxu0
    %v2952 = vadd.f32 %v2879, %v2951
    %v2953 = vpop.f32.mrf.mxu0
    %v2954 = vadd.f32 %v2881, %v2953
    %v2955 = vpop.f32.mrf.mxu0
    %v2956 = vadd.f32 %v2883, %v2955
    %2957 = vmatprep.mubr.bf16.mxu0 %v829
    %2958 = vmatmul.mubr.bf16.gmra.mxu0 %v828
    %v2959 = vpop.f32.mrf.mxu0
    %v2960 = vadd.f32 %v2887, %v2959
    %v2961 = vpop.f32.mrf.mxu0
    %v2962 = vadd.f32 %v2889, %v2961
    %v2963 = vpop.f32.mrf.mxu0
    %v2964 = vadd.f32 %v2891, %v2963
    %v2965 = vpop.f32.mrf.mxu0
    %v2966 = vadd.f32 %v2893, %v2965
    %2967 = vmatprep.mubr.bf16.mxu0 %v837
    %2968 = vmatmul.mubr.bf16.gmra.mxu0 %v836
    %v2969 = vpop.f32.mrf.mxu0
    %v2970 = vadd.f32 %v2897, %v2969
    %v2971 = vpop.f32.mrf.mxu0
    %v2972 = vadd.f32 %v2899, %v2971
    %v2973 = vpop.f32.mrf.mxu0
    %v2974 = vadd.f32 %v2901, %v2973
    %v2975 = vpop.f32.mrf.mxu0
    %v2976 = vadd.f32 %v2903, %v2975
    %2977 = vmatprep.mubr.bf16.mxu0 %v845
    %2978 = vmatmul.mubr.bf16.gmra.mxu0 %v844
    %v2979 = vpop.f32.mrf.mxu0
    %v2980 = vadd.f32 %v2907, %v2979
    %v2981 = vpop.f32.mrf.mxu0
    %v2982 = vadd.f32 %v2909, %v2981
    %v2983 = vpop.f32.mrf.mxu0
    %v2984 = vadd.f32 %v2911, %v2983
    %v2985 = vpop.f32.mrf.mxu0
    %v2986 = vadd.f32 %v2913, %v2985
    %2987 = vdwg.mxu0
    %v2988 = vpack.c.bf16 %v2662, %v2658
    %v2989 = vpack.c.bf16 %v2664, %v2660
    %v2990 = vpack.c.bf16 %v2954, %v2950
    %v2991 = vpack.c.bf16 %v2956, %v2952
    %v2992 = vpack.c.bf16 %v2672, %v2668
    %v2993 = vpack.c.bf16 %v2674, %v2670
    %v2994 = vpack.c.bf16 %v2964, %v2960
    %v2995 = vpack.c.bf16 %v2966, %v2962
    %v2996 = vpack.c.bf16 %v2682, %v2678
    %v2997 = vpack.c.bf16 %v2684, %v2680
    %v2998 = vpack.c.bf16 %v2974, %v2970
    %v2999 = vpack.c.bf16 %v2976, %v2972
    %v3000 = vpack.c.bf16 %v2692, %v2688
    %v3001 = vpack.c.bf16 %v2694, %v2690
    %v3002 = vpack.c.bf16 %v2984, %v2980
    %v3003 = vpack.c.bf16 %v2986, %v2982
    %v3004 = vld [vmem:[#allocation10] sm:$0xff]
    %v3005 = vld [vmem:[#allocation10 + $0x8] sm:$0xff]
    %v3006 = vld [vmem:[#allocation10 + $0x10] sm:$0xff]
    %v3007 = vld [vmem:[#allocation10 + $0x18] sm:$0xff]
    %v3008 = vld [vmem:[#allocation10 + $0x20] sm:$0xff]
    %v3009 = vld [vmem:[#allocation10 + $0x28] sm:$0xff]
    %v3010 = vld [vmem:[#allocation10 + $0x30] sm:$0xff]
    %v3011 = vld [vmem:[#allocation10 + $0x38] sm:$0xff]
    %v3012 = vld [vmem:[#allocation10 + $0x40] sm:$0xff]
    %v3013 = vld [vmem:[#allocation10 + $0x48] sm:$0xff]
    %v3014 = vld [vmem:[#allocation10 + $0x50] sm:$0xff]
    %v3015 = vld [vmem:[#allocation10 + $0x58] sm:$0xff]
    %v3016 = vld [vmem:[#allocation10 + $0x60] sm:$0xff]
    %v3017 = vld [vmem:[#allocation10 + $0x68] sm:$0xff]
    %v3018 = vld [vmem:[#allocation10 + $0x70] sm:$0xff]
    %v3019 = vld [vmem:[#allocation10 + $0x78] sm:$0xff]
    %v3020 = vld [vmem:[#allocation10 + $0x80] sm:$0xff]
    %v3021 = vld [vmem:[#allocation10 + $0x88] sm:$0xff]
    %v3022 = vld [vmem:[#allocation10 + $0x90] sm:$0xff]
    %v3023 = vld [vmem:[#allocation10 + $0x98] sm:$0xff]
    %v3024 = vld [vmem:[#allocation10 + $0xa0] sm:$0xff]
    %v3025 = vld [vmem:[#allocation10 + $0xa8] sm:$0xff]
    %v3026 = vld [vmem:[#allocation10 + $0xb0] sm:$0xff]
    %v3027 = vld [vmem:[#allocation10 + $0xb8] sm:$0xff]
    %v3028 = vld [vmem:[#allocation10 + $0xc0] sm:$0xff]
    %v3029 = vld [vmem:[#allocation10 + $0xc8] sm:$0xff]
    %v3030 = vld [vmem:[#allocation10 + $0xd0] sm:$0xff]
    %v3031 = vld [vmem:[#allocation10 + $0xd8] sm:$0xff]
    %v3032 = vld [vmem:[#allocation10 + $0xe0] sm:$0xff]
    %v3033 = vld [vmem:[#allocation10 + $0xe8] sm:$0xff]
    %v3034 = vld [vmem:[#allocation10 + $0xf0] sm:$0xff]
    %v3035 = vld [vmem:[#allocation10 + $0xf8] sm:$0xff]
    %v3036 = vld [vmem:[#allocation10 + $0x100] sm:$0xff]
    %v3037 = vld [vmem:[#allocation10 + $0x108] sm:$0xff]
    %v3038 = vld [vmem:[#allocation10 + $0x110] sm:$0xff]
    %v3039 = vld [vmem:[#allocation10 + $0x118] sm:$0xff]
    %v3040 = vld [vmem:[#allocation10 + $0x120] sm:$0xff]
    %v3041 = vld [vmem:[#allocation10 + $0x128] sm:$0xff]
    %v3042 = vld [vmem:[#allocation10 + $0x130] sm:$0xff]
    %v3043 = vld [vmem:[#allocation10 + $0x138] sm:$0xff]
    %v3044 = vld [vmem:[#allocation10 + $0x140] sm:$0xff]
    %v3045 = vld [vmem:[#allocation10 + $0x148] sm:$0xff]
    %v3046 = vld [vmem:[#allocation10 + $0x150] sm:$0xff]
    %v3047 = vld [vmem:[#allocation10 + $0x158] sm:$0xff]
    %v3048 = vld [vmem:[#allocation10 + $0x160] sm:$0xff]
    %v3049 = vld [vmem:[#allocation10 + $0x168] sm:$0xff]
    %v3050 = vld [vmem:[#allocation10 + $0x170] sm:$0xff]
    %v3051 = vld [vmem:[#allocation10 + $0x178] sm:$0xff]
    %v3052 = vld [vmem:[#allocation10 + $0x180] sm:$0xff]
    %v3053 = vld [vmem:[#allocation10 + $0x188] sm:$0xff]
    %v3054 = vld [vmem:[#allocation10 + $0x190] sm:$0xff]
    %v3055 = vld [vmem:[#allocation10 + $0x198] sm:$0xff]
    %v3056 = vld [vmem:[#allocation10 + $0x1a0] sm:$0xff]
    %v3057 = vld [vmem:[#allocation10 + $0x1a8] sm:$0xff]
    %v3058 = vld [vmem:[#allocation10 + $0x1b0] sm:$0xff]
    %v3059 = vld [vmem:[#allocation10 + $0x1b8] sm:$0xff]
    %v3060 = vld [vmem:[#allocation10 + $0x1c0] sm:$0xff]
    %v3061 = vld [vmem:[#allocation10 + $0x1c8] sm:$0xff]
    %v3062 = vld [vmem:[#allocation10 + $0x1d0] sm:$0xff]
    %v3063 = vld [vmem:[#allocation10 + $0x1d8] sm:$0xff]
    %v3064 = vld [vmem:[#allocation10 + $0x1e0] sm:$0xff]
    %v3065 = vld [vmem:[#allocation10 + $0x1e8] sm:$0xff]
    %v3066 = vld [vmem:[#allocation10 + $0x1f0] sm:$0xff]
    %v3067 = vld [vmem:[#allocation10 + $0x1f8] sm:$0xff]
    %v3068 = vld [vmem:[%s6] sm:$0x3]
    %v3070 = vlaneseq
    %v3071 = vshrl.u32 %v3070, 7
    %v3072 = vsub.s32 0, %v3071
    %v3073 = vrot.slane %v3068, %v3072
    %v3074 = vlaneseq
    %v3075 = vshrl.u32 %v3074, 7
    %v3076 = vsub.s32 1, %v3075
    %v3077 = vrot.slane %v3068, %v3076
    %v3144 = vunpack.c.l.b16 %v3004
    %v3145 = vunpack.c.h.b16 %v3004
    %v3146 = vunpack.c.l.b16 %v3005
    %v3147 = vunpack.c.h.b16 %v3005
    %v3148 = vunpack.c.l.b16 %v3006
    %v3149 = vunpack.c.h.b16 %v3006
    %v3150 = vunpack.c.l.b16 %v3007
    %v3151 = vunpack.c.h.b16 %v3007
    %v3152 = vunpack.c.l.b16 %v3008
    %v3153 = vunpack.c.h.b16 %v3008
    %v3154 = vunpack.c.l.b16 %v3009
    %v3155 = vunpack.c.h.b16 %v3009
    %v3156 = vunpack.c.l.b16 %v3010
    %v3157 = vunpack.c.h.b16 %v3010
    %v3158 = vunpack.c.l.b16 %v3011
    %v3159 = vunpack.c.h.b16 %v3011
    %v3160 = vunpack.c.l.b16 %v3012
    %v3161 = vunpack.c.h.b16 %v3012
    %v3162 = vunpack.c.l.b16 %v3013
    %v3163 = vunpack.c.h.b16 %v3013
    %v3164 = vunpack.c.l.b16 %v3014
    %v3165 = vunpack.c.h.b16 %v3014
    %v3166 = vunpack.c.l.b16 %v3015
    %v3167 = vunpack.c.h.b16 %v3015
    %v3168 = vunpack.c.l.b16 %v3016
    %v3169 = vunpack.c.h.b16 %v3016
    %v3170 = vunpack.c.l.b16 %v3017
    %v3171 = vunpack.c.h.b16 %v3017
    %v3172 = vunpack.c.l.b16 %v3018
    %v3173 = vunpack.c.h.b16 %v3018
    %v3174 = vunpack.c.l.b16 %v3019
    %v3175 = vunpack.c.h.b16 %v3019
    %v3176 = vunpack.c.l.b16 %v3020
    %v3177 = vunpack.c.h.b16 %v3020
    %v3178 = vunpack.c.l.b16 %v3021
    %v3179 = vunpack.c.h.b16 %v3021
    %v3180 = vunpack.c.l.b16 %v3022
    %v3181 = vunpack.c.h.b16 %v3022
    %v3182 = vunpack.c.l.b16 %v3023
    %v3183 = vunpack.c.h.b16 %v3023
    %v3184 = vunpack.c.l.b16 %v3024
    %v3185 = vunpack.c.h.b16 %v3024
    %v3186 = vunpack.c.l.b16 %v3025
    %v3187 = vunpack.c.h.b16 %v3025
    %v3188 = vunpack.c.l.b16 %v3026
    %v3189 = vunpack.c.h.b16 %v3026
    %v3190 = vunpack.c.l.b16 %v3027
    %v3191 = vunpack.c.h.b16 %v3027
    %v3192 = vunpack.c.l.b16 %v3028
    %v3193 = vunpack.c.h.b16 %v3028
    %v3194 = vunpack.c.l.b16 %v3029
    %v3195 = vunpack.c.h.b16 %v3029
    %v3196 = vunpack.c.l.b16 %v3030
    %v3197 = vunpack.c.h.b16 %v3030
    %v3198 = vunpack.c.l.b16 %v3031
    %v3199 = vunpack.c.h.b16 %v3031
    %v3200 = vunpack.c.l.b16 %v3032
    %v3201 = vunpack.c.h.b16 %v3032
    %v3202 = vunpack.c.l.b16 %v3033
    %v3203 = vunpack.c.h.b16 %v3033
    %v3204 = vunpack.c.l.b16 %v3034
    %v3205 = vunpack.c.h.b16 %v3034
    %v3206 = vunpack.c.l.b16 %v3035
    %v3207 = vunpack.c.h.b16 %v3035
    %v3208 = vunpack.c.l.b16 %v3036
    %v3209 = vunpack.c.h.b16 %v3036
    %v3210 = vunpack.c.l.b16 %v3037
    %v3211 = vunpack.c.h.b16 %v3037
    %v3212 = vunpack.c.l.b16 %v3038
    %v3213 = vunpack.c.h.b16 %v3038
    %v3214 = vunpack.c.l.b16 %v3039
    %v3215 = vunpack.c.h.b16 %v3039
    %v3216 = vunpack.c.l.b16 %v3040
    %v3217 = vunpack.c.h.b16 %v3040
    %v3218 = vunpack.c.l.b16 %v3041
    %v3219 = vunpack.c.h.b16 %v3041
    %v3220 = vunpack.c.l.b16 %v3042
    %v3221 = vunpack.c.h.b16 %v3042
    %v3222 = vunpack.c.l.b16 %v3043
    %v3223 = vunpack.c.h.b16 %v3043
    %v3224 = vunpack.c.l.b16 %v3044
    %v3225 = vunpack.c.h.b16 %v3044
    %v3226 = vunpack.c.l.b16 %v3045
    %v3227 = vunpack.c.h.b16 %v3045
    %v3228 = vunpack.c.l.b16 %v3046
    %v3229 = vunpack.c.h.b16 %v3046
    %v3230 = vunpack.c.l.b16 %v3047
    %v3231 = vunpack.c.h.b16 %v3047
    %v3232 = vunpack.c.l.b16 %v3048
    %v3233 = vunpack.c.h.b16 %v3048
    %v3234 = vunpack.c.l.b16 %v3049
    %v3235 = vunpack.c.h.b16 %v3049
    %v3236 = vunpack.c.l.b16 %v3050
    %v3237 = vunpack.c.h.b16 %v3050
    %v3238 = vunpack.c.l.b16 %v3051
    %v3239 = vunpack.c.h.b16 %v3051
    %v3240 = vunpack.c.l.b16 %v3052
    %v3241 = vunpack.c.h.b16 %v3052
    %v3242 = vunpack.c.l.b16 %v3053
    %v3243 = vunpack.c.h.b16 %v3053
    %v3244 = vunpack.c.l.b16 %v3054
    %v3245 = vunpack.c.h.b16 %v3054
    %v3246 = vunpack.c.l.b16 %v3055
    %v3247 = vunpack.c.h.b16 %v3055
    %v3248 = vunpack.c.l.b16 %v3056
    %v3249 = vunpack.c.h.b16 %v3056
    %v3250 = vunpack.c.l.b16 %v3057
    %v3251 = vunpack.c.h.b16 %v3057
    %v3252 = vunpack.c.l.b16 %v3058
    %v3253 = vunpack.c.h.b16 %v3058
    %v3254 = vunpack.c.l.b16 %v3059
    %v3255 = vunpack.c.h.b16 %v3059
    %v3256 = vunpack.c.l.b16 %v3060
    %v3257 = vunpack.c.h.b16 %v3060
    %v3258 = vunpack.c.l.b16 %v3061
    %v3259 = vunpack.c.h.b16 %v3061
    %v3260 = vunpack.c.l.b16 %v3062
    %v3261 = vunpack.c.h.b16 %v3062
    %v3262 = vunpack.c.l.b16 %v3063
    %v3263 = vunpack.c.h.b16 %v3063
    %v3264 = vunpack.c.l.b16 %v3064
    %v3265 = vunpack.c.h.b16 %v3064
    %v3266 = vunpack.c.l.b16 %v3065
    %v3267 = vunpack.c.h.b16 %v3065
    %v3268 = vunpack.c.l.b16 %v3066
    %v3269 = vunpack.c.h.b16 %v3066
    %v3270 = vunpack.c.l.b16 %v3067
    %v3271 = vunpack.c.h.b16 %v3067
    %v3272 = vpack.c.b16 %v3146, %v3144
    %v3273 = vpack.c.b16 %v3147, %v3145
    %v3274 = vpack.c.b16 %v3150, %v3148
    %v3275 = vpack.c.b16 %v3151, %v3149
    %v3276 = vpack.c.b16 %v3154, %v3152
    %v3277 = vpack.c.b16 %v3155, %v3153
    %v3278 = vpack.c.b16 %v3158, %v3156
    %v3279 = vpack.c.b16 %v3159, %v3157
    %v3280 = vpack.c.b16 %v3162, %v3160
    %v3281 = vpack.c.b16 %v3163, %v3161
    %v3282 = vpack.c.b16 %v3166, %v3164
    %v3283 = vpack.c.b16 %v3167, %v3165
    %v3284 = vpack.c.b16 %v3170, %v3168
    %v3285 = vpack.c.b16 %v3171, %v3169
    %v3286 = vpack.c.b16 %v3174, %v3172
    %v3287 = vpack.c.b16 %v3175, %v3173
    %v3288 = vpack.c.b16 %v3178, %v3176
    %v3289 = vpack.c.b16 %v3179, %v3177
    %v3290 = vpack.c.b16 %v3182, %v3180
    %v3291 = vpack.c.b16 %v3183, %v3181
    %v3292 = vpack.c.b16 %v3186, %v3184
    %v3293 = vpack.c.b16 %v3187, %v3185
    %v3294 = vpack.c.b16 %v3190, %v3188
    %v3295 = vpack.c.b16 %v3191, %v3189
    %v3296 = vpack.c.b16 %v3194, %v3192
    %v3297 = vpack.c.b16 %v3195, %v3193
    %v3298 = vpack.c.b16 %v3198, %v3196
    %v3299 = vpack.c.b16 %v3199, %v3197
    %v3300 = vpack.c.b16 %v3202, %v3200
    %v3301 = vpack.c.b16 %v3203, %v3201
    %v3302 = vpack.c.b16 %v3206, %v3204
    %v3303 = vpack.c.b16 %v3207, %v3205
    %v3304 = vpack.c.b16 %v3210, %v3208
    %v3305 = vpack.c.b16 %v3211, %v3209
    %v3306 = vpack.c.b16 %v3214, %v3212
    %v3307 = vpack.c.b16 %v3215, %v3213
    %v3308 = vpack.c.b16 %v3218, %v3216
    %v3309 = vpack.c.b16 %v3219, %v3217
    %v3310 = vpack.c.b16 %v3222, %v3220
    %v3311 = vpack.c.b16 %v3223, %v3221
    %v3312 = vpack.c.b16 %v3226, %v3224
    %v3313 = vpack.c.b16 %v3227, %v3225
    %v3314 = vpack.c.b16 %v3230, %v3228
    %v3315 = vpack.c.b16 %v3231, %v3229
    %v3316 = vpack.c.b16 %v3234, %v3232
    %v3317 = vpack.c.b16 %v3235, %v3233
    %v3318 = vpack.c.b16 %v3238, %v3236
    %v3319 = vpack.c.b16 %v3239, %v3237
    %v3320 = vpack.c.b16 %v3242, %v3240
    %v3321 = vpack.c.b16 %v3243, %v3241
    %v3322 = vpack.c.b16 %v3246, %v3244
    %v3323 = vpack.c.b16 %v3247, %v3245
    %v3324 = vpack.c.b16 %v3250, %v3248
    %v3325 = vpack.c.b16 %v3251, %v3249
    %v3326 = vpack.c.b16 %v3254, %v3252
    %v3327 = vpack.c.b16 %v3255, %v3253
    %v3328 = vpack.c.b16 %v3258, %v3256
    %v3329 = vpack.c.b16 %v3259, %v3257
    %v3330 = vpack.c.b16 %v3262, %v3260
    %v3331 = vpack.c.b16 %v3263, %v3261
    %v3332 = vpack.c.b16 %v3266, %v3264
    %v3333 = vpack.c.b16 %v3267, %v3265
    %v3334 = vpack.c.b16 %v3270, %v3268
    %v3335 = vpack.c.b16 %v3271, %v3269
    %3400 = vmatprep.subr.bf16.mxu0 %v3287
    %3401 = vmatpush1.bf16.msra.mxu0 %v3286
    %3402 = vmatprep.subr.bf16.mxu0 %v3285
    %3403 = vmatpush1.bf16.msra.mxu0 %v3284
    %3404 = vmatprep.subr.bf16.mxu0 %v3283
    %3405 = vmatpush1.bf16.msra.mxu0 %v3282
    %3406 = vmatprep.subr.bf16.mxu0 %v3281
    %3407 = vmatpush1.bf16.msra.mxu0 %v3280
    %3408 = vmatprep.subr.bf16.mxu0 %v3279
    %3409 = vmatpush1.bf16.msra.mxu0 %v3278
    %3410 = vmatprep.subr.bf16.mxu0 %v3277
    %3411 = vmatpush1.bf16.msra.mxu0 %v3276
    %3412 = vmatprep.subr.bf16.mxu0 %v3275
    %3413 = vmatpush1.bf16.msra.mxu0 %v3274
    %3414 = vmatprep.subr.bf16.mxu0 %v3273
    %3415 = vmatpush1.bf16.msra.mxu0 %v3272
    %3416 = vmatprep.subr.bf16.mxu0 %v3303
    %3417 = vmatpush2.bf16.msra.mxu0 %v3302
    %3418 = vmatprep.subr.bf16.mxu0 %v3301
    %3419 = vmatpush2.bf16.msra.mxu0 %v3300
    %3420 = vmatprep.subr.bf16.mxu0 %v3299
    %3421 = vmatpush2.bf16.msra.mxu0 %v3298
    %3422 = vmatprep.subr.bf16.mxu0 %v3297
    %3423 = vmatpush2.bf16.msra.mxu0 %v3296
    %3424 = vmatprep.subr.bf16.mxu0 %v3295
    %3425 = vmatpush2.bf16.msra.mxu0 %v3294
    %3426 = vmatprep.subr.bf16.mxu0 %v3293
    %3427 = vmatpush2.bf16.msra.mxu0 %v3292
    %3428 = vmatprep.subr.bf16.mxu0 %v3291
    %3429 = vmatpush2.bf16.msra.mxu0 %v3290
    %3430 = vmatprep.subr.bf16.mxu0 %v3289
    %3431 = vmatpush2.bf16.msra.mxu0 %v3288
    %3432 = vmatprep.mubr.bf16.mxu0 %v2989
    %3433 = vmatmul.mubr.bf16.gmra.mxu0 %v2988
    %v3434 = vpop.f32.mrf.mxu0
    %v3435 = vadd.f32 %v3073, %v3434
    %v3436 = vpop.f32.mrf.mxu0
    %v3437 = vadd.f32 %v3077, %v3436
    %v3438 = vpop.f32.mrf.mxu0
    %v3439 = vadd.f32 %v3073, %v3438
    %v3440 = vpop.f32.mrf.mxu0
    %v3441 = vadd.f32 %v3077, %v3440
    %3442 = vmatprep.mubr.bf16.mxu0 %v2993
    %3443 = vmatmul.mubr.bf16.gmra.mxu0 %v2992
    %v3444 = vpop.f32.mrf.mxu0
    %v3445 = vadd.f32 %v3073, %v3444
    %v3446 = vpop.f32.mrf.mxu0
    %v3447 = vadd.f32 %v3077, %v3446
    %v3448 = vpop.f32.mrf.mxu0
    %v3449 = vadd.f32 %v3073, %v3448
    %v3450 = vpop.f32.mrf.mxu0
    %v3451 = vadd.f32 %v3077, %v3450
    %3452 = vmatprep.mubr.bf16.mxu0 %v2997
    %3453 = vmatmul.mubr.bf16.gmra.mxu0 %v2996
    %v3454 = vpop.f32.mrf.mxu0
    %v3455 = vadd.f32 %v3073, %v3454
    %v3456 = vpop.f32.mrf.mxu0
    %v3457 = vadd.f32 %v3077, %v3456
    %v3458 = vpop.f32.mrf.mxu0
    %v3459 = vadd.f32 %v3073, %v3458
    %v3460 = vpop.f32.mrf.mxu0
    %v3461 = vadd.f32 %v3077, %v3460
    %3462 = vmatprep.mubr.bf16.mxu0 %v3001
    %3463 = vmatmul.mubr.bf16.gmra.mxu0 %v3000
    %v3464 = vpop.f32.mrf.mxu0
    %v3465 = vadd.f32 %v3073, %v3464
    %v3466 = vpop.f32.mrf.mxu0
    %v3467 = vadd.f32 %v3077, %v3466
    %v3468 = vpop.f32.mrf.mxu0
    %v3469 = vadd.f32 %v3073, %v3468
    %v3470 = vpop.f32.mrf.mxu0
    %v3471 = vadd.f32 %v3077, %v3470
    %3472 = vdwg.mxu0
    %3473 = vmatprep.subr.bf16.mxu0 %v3319
    %3474 = vmatpush1.bf16.msra.mxu0 %v3318
    %3475 = vmatprep.subr.bf16.mxu0 %v3317
    %3476 = vmatpush1.bf16.msra.mxu0 %v3316
    %3477 = vmatprep.subr.bf16.mxu0 %v3315
    %3478 = vmatpush1.bf16.msra.mxu0 %v3314
    %3479 = vmatprep.subr.bf16.mxu0 %v3313
    %3480 = vmatpush1.bf16.msra.mxu0 %v3312
    %3481 = vmatprep.subr.bf16.mxu0 %v3311
    %3482 = vmatpush1.bf16.msra.mxu0 %v3310
    %3483 = vmatprep.subr.bf16.mxu0 %v3309
    %3484 = vmatpush1.bf16.msra.mxu0 %v3308
    %3485 = vmatprep.subr.bf16.mxu0 %v3307
    %3486 = vmatpush1.bf16.msra.mxu0 %v3306
    %3487 = vmatprep.subr.bf16.mxu0 %v3305
    %3488 = vmatpush1.bf16.msra.mxu0 %v3304
    %3489 = vmatprep.subr.bf16.mxu0 %v3335
    %3490 = vmatpush2.bf16.msra.mxu0 %v3334
    %3491 = vmatprep.subr.bf16.mxu0 %v3333
    %3492 = vmatpush2.bf16.msra.mxu0 %v3332
    %3493 = vmatprep.subr.bf16.mxu0 %v3331
    %3494 = vmatpush2.bf16.msra.mxu0 %v3330
    %3495 = vmatprep.subr.bf16.mxu0 %v3329
    %3496 = vmatpush2.bf16.msra.mxu0 %v3328
    %3497 = vmatprep.subr.bf16.mxu0 %v3327
    %3498 = vmatpush2.bf16.msra.mxu0 %v3326
    %3499 = vmatprep.subr.bf16.mxu0 %v3325
    %3500 = vmatpush2.bf16.msra.mxu0 %v3324
    %3501 = vmatprep.subr.bf16.mxu0 %v3323
    %3502 = vmatpush2.bf16.msra.mxu0 %v3322
    %3503 = vmatprep.subr.bf16.mxu0 %v3321
    %3504 = vmatpush2.bf16.msra.mxu0 %v3320
    %3505 = vmatprep.mubr.bf16.mxu0 %v2991
    %3506 = vmatmul.mubr.bf16.gmra.mxu0 %v2990
    %v3507 = vpop.f32.mrf.mxu0
    %v3508 = vadd.f32 %v3435, %v3507
    %v3509 = vpop.f32.mrf.mxu0
    %v3510 = vadd.f32 %v3437, %v3509
    %v3511 = vpop.f32.mrf.mxu0
    %v3512 = vadd.f32 %v3439, %v3511
    %v3513 = vpop.f32.mrf.mxu0
    %v3514 = vadd.f32 %v3441, %v3513
    %3515 = vmatprep.mubr.bf16.mxu0 %v2995
    %3516 = vmatmul.mubr.bf16.gmra.mxu0 %v2994
    %v3517 = vpop.f32.mrf.mxu0
    %v3518 = vadd.f32 %v3445, %v3517
    %v3519 = vpop.f32.mrf.mxu0
    %v3520 = vadd.f32 %v3447, %v3519
    %v3521 = vpop.f32.mrf.mxu0
    %v3522 = vadd.f32 %v3449, %v3521
    %v3523 = vpop.f32.mrf.mxu0
    %v3524 = vadd.f32 %v3451, %v3523
    %3525 = vmatprep.mubr.bf16.mxu0 %v2999
    %3526 = vmatmul.mubr.bf16.gmra.mxu0 %v2998
    %v3527 = vpop.f32.mrf.mxu0
    %v3528 = vadd.f32 %v3455, %v3527
    %v3529 = vpop.f32.mrf.mxu0
    %v3530 = vadd.f32 %v3457, %v3529
    %v3531 = vpop.f32.mrf.mxu0
    %v3532 = vadd.f32 %v3459, %v3531
    %v3533 = vpop.f32.mrf.mxu0
    %v3534 = vadd.f32 %v3461, %v3533
    %3535 = vmatprep.mubr.bf16.mxu0 %v3003
    %3536 = vmatmul.mubr.bf16.gmra.mxu0 %v3002
    %v3537 = vpop.f32.mrf.mxu0
    %v3538 = vadd.f32 %v3465, %v3537
    %v3539 = vpop.f32.mrf.mxu0
    %v3540 = vadd.f32 %v3467, %v3539
    %v3541 = vpop.f32.mrf.mxu0
    %v3542 = vadd.f32 %v3469, %v3541
    %v3543 = vpop.f32.mrf.mxu0
    %v3544 = vadd.f32 %v3471, %v3543
    %3545 = vdwg.mxu0
    %v3546 = vpack.c.bf16 %v3512, %v3508
    %v3547 = vpack.c.bf16 %v3514, %v3510
    %v3548 = vpack.c.bf16 %v3522, %v3518
    %v3549 = vpack.c.bf16 %v3524, %v3520
    %v3550 = vpack.c.bf16 %v3532, %v3528
    %v3551 = vpack.c.bf16 %v3534, %v3530
    %v3552 = vpack.c.bf16 %v3542, %v3538
    %v3553 = vpack.c.bf16 %v3544, %v3540
    %v3554 = vld [vmem:[#allocation11] sm:$0xff]
    %v3555 = vld [vmem:[#allocation11 + $0x8] sm:$0xff]
    %v3556 = vld [vmem:[#allocation11 + $0x10] sm:$0xff]
    %v3557 = vld [vmem:[#allocation11 + $0x18] sm:$0xff]
    %v3558 = vld [vmem:[#allocation11 + $0x20] sm:$0xff]
    %v3559 = vld [vmem:[#allocation11 + $0x28] sm:$0xff]
    %v3560 = vld [vmem:[#allocation11 + $0x30] sm:$0xff]
    %v3561 = vld [vmem:[#allocation11 + $0x38] sm:$0xff]
    %v3562 = vld [vmem:[#allocation11 + $0x40] sm:$0xff]
    %v3563 = vld [vmem:[#allocation11 + $0x48] sm:$0xff]
    %v3564 = vld [vmem:[#allocation11 + $0x50] sm:$0xff]
    %v3565 = vld [vmem:[#allocation11 + $0x58] sm:$0xff]
    %v3566 = vld [vmem:[#allocation11 + $0x60] sm:$0xff]
    %v3567 = vld [vmem:[#allocation11 + $0x68] sm:$0xff]
    %v3568 = vld [vmem:[#allocation11 + $0x70] sm:$0xff]
    %v3569 = vld [vmem:[#allocation11 + $0x78] sm:$0xff]
    %v3570 = vld [vmem:[#allocation11 + $0x80] sm:$0xff]
    %v3571 = vld [vmem:[#allocation11 + $0x88] sm:$0xff]
    %v3572 = vld [vmem:[#allocation11 + $0x90] sm:$0xff]
    %v3573 = vld [vmem:[#allocation11 + $0x98] sm:$0xff]
    %v3574 = vld [vmem:[#allocation11 + $0xa0] sm:$0xff]
    %v3575 = vld [vmem:[#allocation11 + $0xa8] sm:$0xff]
    %v3576 = vld [vmem:[#allocation11 + $0xb0] sm:$0xff]
    %v3577 = vld [vmem:[#allocation11 + $0xb8] sm:$0xff]
    %v3578 = vld [vmem:[#allocation11 + $0xc0] sm:$0xff]
    %v3579 = vld [vmem:[#allocation11 + $0xc8] sm:$0xff]
    %v3580 = vld [vmem:[#allocation11 + $0xd0] sm:$0xff]
    %v3581 = vld [vmem:[#allocation11 + $0xd8] sm:$0xff]
    %v3582 = vld [vmem:[#allocation11 + $0xe0] sm:$0xff]
    %v3583 = vld [vmem:[#allocation11 + $0xe8] sm:$0xff]
    %v3584 = vld [vmem:[#allocation11 + $0xf0] sm:$0xff]
    %v3585 = vld [vmem:[#allocation11 + $0xf8] sm:$0xff]
    %v3586 = vld [vmem:[#allocation11 + $0x100] sm:$0xff]
    %v3587 = vld [vmem:[#allocation11 + $0x108] sm:$0xff]
    %v3588 = vld [vmem:[#allocation11 + $0x110] sm:$0xff]
    %v3589 = vld [vmem:[#allocation11 + $0x118] sm:$0xff]
    %v3590 = vld [vmem:[#allocation11 + $0x120] sm:$0xff]
    %v3591 = vld [vmem:[#allocation11 + $0x128] sm:$0xff]
    %v3592 = vld [vmem:[#allocation11 + $0x130] sm:$0xff]
    %v3593 = vld [vmem:[#allocation11 + $0x138] sm:$0xff]
    %v3594 = vld [vmem:[#allocation11 + $0x140] sm:$0xff]
    %v3595 = vld [vmem:[#allocation11 + $0x148] sm:$0xff]
    %v3596 = vld [vmem:[#allocation11 + $0x150] sm:$0xff]
    %v3597 = vld [vmem:[#allocation11 + $0x158] sm:$0xff]
    %v3598 = vld [vmem:[#allocation11 + $0x160] sm:$0xff]
    %v3599 = vld [vmem:[#allocation11 + $0x168] sm:$0xff]
    %v3600 = vld [vmem:[#allocation11 + $0x170] sm:$0xff]
    %v3601 = vld [vmem:[#allocation11 + $0x178] sm:$0xff]
    %v3602 = vld [vmem:[#allocation11 + $0x180] sm:$0xff]
    %v3603 = vld [vmem:[#allocation11 + $0x188] sm:$0xff]
    %v3604 = vld [vmem:[#allocation11 + $0x190] sm:$0xff]
    %v3605 = vld [vmem:[#allocation11 + $0x198] sm:$0xff]
    %v3606 = vld [vmem:[#allocation11 + $0x1a0] sm:$0xff]
    %v3607 = vld [vmem:[#allocation11 + $0x1a8] sm:$0xff]
    %v3608 = vld [vmem:[#allocation11 + $0x1b0] sm:$0xff]
    %v3609 = vld [vmem:[#allocation11 + $0x1b8] sm:$0xff]
    %v3610 = vld [vmem:[#allocation11 + $0x1c0] sm:$0xff]
    %v3611 = vld [vmem:[#allocation11 + $0x1c8] sm:$0xff]
    %v3612 = vld [vmem:[#allocation11 + $0x1d0] sm:$0xff]
    %v3613 = vld [vmem:[#allocation11 + $0x1d8] sm:$0xff]
    %v3614 = vld [vmem:[#allocation11 + $0x1e0] sm:$0xff]
    %v3615 = vld [vmem:[#allocation11 + $0x1e8] sm:$0xff]
    %v3616 = vld [vmem:[#allocation11 + $0x1f0] sm:$0xff]
    %v3617 = vld [vmem:[#allocation11 + $0x1f8] sm:$0xff]
    %v3618 = vld [vmem:[#allocation11 + $0x200] sm:$0xff]
    %v3619 = vld [vmem:[#allocation11 + $0x208] sm:$0xff]
    %v3620 = vld [vmem:[#allocation11 + $0x210] sm:$0xff]
    %v3621 = vld [vmem:[#allocation11 + $0x218] sm:$0xff]
    %v3622 = vld [vmem:[#allocation11 + $0x220] sm:$0xff]
    %v3623 = vld [vmem:[#allocation11 + $0x228] sm:$0xff]
    %v3624 = vld [vmem:[#allocation11 + $0x230] sm:$0xff]
    %v3625 = vld [vmem:[#allocation11 + $0x238] sm:$0xff]
    %v3626 = vld [vmem:[#allocation11 + $0x240] sm:$0xff]
    %v3627 = vld [vmem:[#allocation11 + $0x248] sm:$0xff]
    %v3628 = vld [vmem:[#allocation11 + $0x250] sm:$0xff]
    %v3629 = vld [vmem:[#allocation11 + $0x258] sm:$0xff]
    %v3630 = vld [vmem:[#allocation11 + $0x260] sm:$0xff]
    %v3631 = vld [vmem:[#allocation11 + $0x268] sm:$0xff]
    %v3632 = vld [vmem:[#allocation11 + $0x270] sm:$0xff]
    %v3633 = vld [vmem:[#allocation11 + $0x278] sm:$0xff]
    %v3634 = vld [vmem:[#allocation11 + $0x280] sm:$0xff]
    %v3635 = vld [vmem:[#allocation11 + $0x288] sm:$0xff]
    %v3636 = vld [vmem:[#allocation11 + $0x290] sm:$0xff]
    %v3637 = vld [vmem:[#allocation11 + $0x298] sm:$0xff]
    %v3638 = vld [vmem:[#allocation11 + $0x2a0] sm:$0xff]
    %v3639 = vld [vmem:[#allocation11 + $0x2a8] sm:$0xff]
    %v3640 = vld [vmem:[#allocation11 + $0x2b0] sm:$0xff]
    %v3641 = vld [vmem:[#allocation11 + $0x2b8] sm:$0xff]
    %v3642 = vld [vmem:[#allocation11 + $0x2c0] sm:$0xff]
    %v3643 = vld [vmem:[#allocation11 + $0x2c8] sm:$0xff]
    %v3644 = vld [vmem:[#allocation11 + $0x2d0] sm:$0xff]
    %v3645 = vld [vmem:[#allocation11 + $0x2d8] sm:$0xff]
    %v3646 = vld [vmem:[#allocation11 + $0x2e0] sm:$0xff]
    %v3647 = vld [vmem:[#allocation11 + $0x2e8] sm:$0xff]
    %v3648 = vld [vmem:[#allocation11 + $0x2f0] sm:$0xff]
    %v3649 = vld [vmem:[#allocation11 + $0x2f8] sm:$0xff]
    %v3650 = vld [vmem:[#allocation11 + $0x300] sm:$0xff]
    %v3651 = vld [vmem:[#allocation11 + $0x308] sm:$0xff]
    %v3652 = vld [vmem:[#allocation11 + $0x310] sm:$0xff]
    %v3653 = vld [vmem:[#allocation11 + $0x318] sm:$0xff]
    %v3654 = vld [vmem:[#allocation11 + $0x320] sm:$0xff]
    %v3655 = vld [vmem:[#allocation11 + $0x328] sm:$0xff]
    %v3656 = vld [vmem:[#allocation11 + $0x330] sm:$0xff]
    %v3657 = vld [vmem:[#allocation11 + $0x338] sm:$0xff]
    %v3658 = vld [vmem:[#allocation11 + $0x340] sm:$0xff]
    %v3659 = vld [vmem:[#allocation11 + $0x348] sm:$0xff]
    %v3660 = vld [vmem:[#allocation11 + $0x350] sm:$0xff]
    %v3661 = vld [vmem:[#allocation11 + $0x358] sm:$0xff]
    %v3662 = vld [vmem:[#allocation11 + $0x360] sm:$0xff]
    %v3663 = vld [vmem:[#allocation11 + $0x368] sm:$0xff]
    %v3664 = vld [vmem:[#allocation11 + $0x370] sm:$0xff]
    %v3665 = vld [vmem:[#allocation11 + $0x378] sm:$0xff]
    %v3666 = vld [vmem:[#allocation11 + $0x380] sm:$0xff]
    %v3667 = vld [vmem:[#allocation11 + $0x388] sm:$0xff]
    %v3668 = vld [vmem:[#allocation11 + $0x390] sm:$0xff]
    %v3669 = vld [vmem:[#allocation11 + $0x398] sm:$0xff]
    %v3670 = vld [vmem:[#allocation11 + $0x3a0] sm:$0xff]
    %v3671 = vld [vmem:[#allocation11 + $0x3a8] sm:$0xff]
    %v3672 = vld [vmem:[#allocation11 + $0x3b0] sm:$0xff]
    %v3673 = vld [vmem:[#allocation11 + $0x3b8] sm:$0xff]
    %v3674 = vld [vmem:[#allocation11 + $0x3c0] sm:$0xff]
    %v3675 = vld [vmem:[#allocation11 + $0x3c8] sm:$0xff]
    %v3676 = vld [vmem:[#allocation11 + $0x3d0] sm:$0xff]
    %v3677 = vld [vmem:[#allocation11 + $0x3d8] sm:$0xff]
    %v3678 = vld [vmem:[#allocation11 + $0x3e0] sm:$0xff]
    %v3679 = vld [vmem:[#allocation11 + $0x3e8] sm:$0xff]
    %v3680 = vld [vmem:[#allocation11 + $0x3f0] sm:$0xff]
    %v3681 = vld [vmem:[#allocation11 + $0x3f8] sm:$0xff]
    %v3682 = vld [vmem:[%s8] sm:$0xff]
    %v3684 = vlaneseq
    %v3685 = vshrl.u32 %v3684, 7
    %v3686 = vsub.s32 0, %v3685
    %v3687 = vrot.slane %v3682, %v3686
    %v3688 = vlaneseq
    %v3689 = vshrl.u32 %v3688, 7
    %v3690 = vsub.s32 1, %v3689
    %v3691 = vrot.slane %v3682, %v3690
    %v3692 = vlaneseq
    %v3693 = vshrl.u32 %v3692, 7
    %v3694 = vsub.s32 2, %v3693
    %v3695 = vrot.slane %v3682, %v3694
    %v3696 = vlaneseq
    %v3697 = vshrl.u32 %v3696, 7
    %v3698 = vsub.s32 3, %v3697
    %v3699 = vrot.slane %v3682, %v3698
    %v3700 = vlaneseq
    %v3701 = vshrl.u32 %v3700, 7
    %v3702 = vsub.s32 4, %v3701
    %v3703 = vrot.slane %v3682, %v3702
    %v3704 = vlaneseq
    %v3705 = vshrl.u32 %v3704, 7
    %v3706 = vsub.s32 5, %v3705
    %v3707 = vrot.slane %v3682, %v3706
    %v3708 = vlaneseq
    %v3709 = vshrl.u32 %v3708, 7
    %v3710 = vsub.s32 6, %v3709
    %v3711 = vrot.slane %v3682, %v3710
    %v3712 = vlaneseq
    %v3713 = vshrl.u32 %v3712, 7
    %v3714 = vsub.s32 7, %v3713
    %v3715 = vrot.slane %v3682, %v3714
    %v3852 = vunpack.c.l.b16 %v3554
    %v3853 = vunpack.c.h.b16 %v3554
    %v3854 = vunpack.c.l.b16 %v3555
    %v3855 = vunpack.c.h.b16 %v3555
    %v3856 = vunpack.c.l.b16 %v3556
    %v3857 = vunpack.c.h.b16 %v3556
    %v3858 = vunpack.c.l.b16 %v3557
    %v3859 = vunpack.c.h.b16 %v3557
    %v3860 = vunpack.c.l.b16 %v3558
    %v3861 = vunpack.c.h.b16 %v3558
    %v3862 = vunpack.c.l.b16 %v3559
    %v3863 = vunpack.c.h.b16 %v3559
    %v3864 = vunpack.c.l.b16 %v3560
    %v3865 = vunpack.c.h.b16 %v3560
    %v3866 = vunpack.c.l.b16 %v3561
    %v3867 = vunpack.c.h.b16 %v3561
    %v3868 = vunpack.c.l.b16 %v3562
    %v3869 = vunpack.c.h.b16 %v3562
    %v3870 = vunpack.c.l.b16 %v3563
    %v3871 = vunpack.c.h.b16 %v3563
    %v3872 = vunpack.c.l.b16 %v3564
    %v3873 = vunpack.c.h.b16 %v3564
    %v3874 = vunpack.c.l.b16 %v3565
    %v3875 = vunpack.c.h.b16 %v3565
    %v3876 = vunpack.c.l.b16 %v3566
    %v3877 = vunpack.c.h.b16 %v3566
    %v3878 = vunpack.c.l.b16 %v3567
    %v3879 = vunpack.c.h.b16 %v3567
    %v3880 = vunpack.c.l.b16 %v3568
    %v3881 = vunpack.c.h.b16 %v3568
    %v3882 = vunpack.c.l.b16 %v3569
    %v3883 = vunpack.c.h.b16 %v3569
    %v3884 = vunpack.c.l.b16 %v3570
    %v3885 = vunpack.c.h.b16 %v3570
    %v3886 = vunpack.c.l.b16 %v3571
    %v3887 = vunpack.c.h.b16 %v3571
    %v3888 = vunpack.c.l.b16 %v3572
    %v3889 = vunpack.c.h.b16 %v3572
    %v3890 = vunpack.c.l.b16 %v3573
    %v3891 = vunpack.c.h.b16 %v3573
    %v3892 = vunpack.c.l.b16 %v3574
    %v3893 = vunpack.c.h.b16 %v3574
    %v3894 = vunpack.c.l.b16 %v3575
    %v3895 = vunpack.c.h.b16 %v3575
    %v3896 = vunpack.c.l.b16 %v3576
    %v3897 = vunpack.c.h.b16 %v3576
    %v3898 = vunpack.c.l.b16 %v3577
    %v3899 = vunpack.c.h.b16 %v3577
    %v3900 = vunpack.c.l.b16 %v3578
    %v3901 = vunpack.c.h.b16 %v3578
    %v3902 = vunpack.c.l.b16 %v3579
    %v3903 = vunpack.c.h.b16 %v3579
    %v3904 = vunpack.c.l.b16 %v3580
    %v3905 = vunpack.c.h.b16 %v3580
    %v3906 = vunpack.c.l.b16 %v3581
    %v3907 = vunpack.c.h.b16 %v3581
    %v3908 = vunpack.c.l.b16 %v3582
    %v3909 = vunpack.c.h.b16 %v3582
    %v3910 = vunpack.c.l.b16 %v3583
    %v3911 = vunpack.c.h.b16 %v3583
    %v3912 = vunpack.c.l.b16 %v3584
    %v3913 = vunpack.c.h.b16 %v3584
    %v3914 = vunpack.c.l.b16 %v3585
    %v3915 = vunpack.c.h.b16 %v3585
    %v3916 = vunpack.c.l.b16 %v3586
    %v3917 = vunpack.c.h.b16 %v3586
    %v3918 = vunpack.c.l.b16 %v3587
    %v3919 = vunpack.c.h.b16 %v3587
    %v3920 = vunpack.c.l.b16 %v3588
    %v3921 = vunpack.c.h.b16 %v3588
    %v3922 = vunpack.c.l.b16 %v3589
    %v3923 = vunpack.c.h.b16 %v3589
    %v3924 = vunpack.c.l.b16 %v3590
    %v3925 = vunpack.c.h.b16 %v3590
    %v3926 = vunpack.c.l.b16 %v3591
    %v3927 = vunpack.c.h.b16 %v3591
    %v3928 = vunpack.c.l.b16 %v3592
    %v3929 = vunpack.c.h.b16 %v3592
    %v3930 = vunpack.c.l.b16 %v3593
    %v3931 = vunpack.c.h.b16 %v3593
    %v3932 = vunpack.c.l.b16 %v3594
    %v3933 = vunpack.c.h.b16 %v3594
    %v3934 = vunpack.c.l.b16 %v3595
    %v3935 = vunpack.c.h.b16 %v3595
    %v3936 = vunpack.c.l.b16 %v3596
    %v3937 = vunpack.c.h.b16 %v3596
    %v3938 = vunpack.c.l.b16 %v3597
    %v3939 = vunpack.c.h.b16 %v3597
    %v3940 = vunpack.c.l.b16 %v3598
    %v3941 = vunpack.c.h.b16 %v3598
    %v3942 = vunpack.c.l.b16 %v3599
    %v3943 = vunpack.c.h.b16 %v3599
    %v3944 = vunpack.c.l.b16 %v3600
    %v3945 = vunpack.c.h.b16 %v3600
    %v3946 = vunpack.c.l.b16 %v3601
    %v3947 = vunpack.c.h.b16 %v3601
    %v3948 = vunpack.c.l.b16 %v3602
    %v3949 = vunpack.c.h.b16 %v3602
    %v3950 = vunpack.c.l.b16 %v3603
    %v3951 = vunpack.c.h.b16 %v3603
    %v3952 = vunpack.c.l.b16 %v3604
    %v3953 = vunpack.c.h.b16 %v3604
    %v3954 = vunpack.c.l.b16 %v3605
    %v3955 = vunpack.c.h.b16 %v3605
    %v3956 = vunpack.c.l.b16 %v3606
    %v3957 = vunpack.c.h.b16 %v3606
    %v3958 = vunpack.c.l.b16 %v3607
    %v3959 = vunpack.c.h.b16 %v3607
    %v3960 = vunpack.c.l.b16 %v3608
    %v3961 = vunpack.c.h.b16 %v3608
    %v3962 = vunpack.c.l.b16 %v3609
    %v3963 = vunpack.c.h.b16 %v3609
    %v3964 = vunpack.c.l.b16 %v3610
    %v3965 = vunpack.c.h.b16 %v3610
    %v3966 = vunpack.c.l.b16 %v3611
    %v3967 = vunpack.c.h.b16 %v3611
    %v3968 = vunpack.c.l.b16 %v3612
    %v3969 = vunpack.c.h.b16 %v3612
    %v3970 = vunpack.c.l.b16 %v3613
    %v3971 = vunpack.c.h.b16 %v3613
    %v3972 = vunpack.c.l.b16 %v3614
    %v3973 = vunpack.c.h.b16 %v3614
    %v3974 = vunpack.c.l.b16 %v3615
    %v3975 = vunpack.c.h.b16 %v3615
    %v3976 = vunpack.c.l.b16 %v3616
    %v3977 = vunpack.c.h.b16 %v3616
    %v3978 = vunpack.c.l.b16 %v3617
    %v3979 = vunpack.c.h.b16 %v3617
    %v3980 = vunpack.c.l.b16 %v3618
    %v3981 = vunpack.c.h.b16 %v3618
    %v3982 = vunpack.c.l.b16 %v3619
    %v3983 = vunpack.c.h.b16 %v3619
    %v3984 = vunpack.c.l.b16 %v3620
    %v3985 = vunpack.c.h.b16 %v3620
    %v3986 = vunpack.c.l.b16 %v3621
    %v3987 = vunpack.c.h.b16 %v3621
    %v3988 = vunpack.c.l.b16 %v3622
    %v3989 = vunpack.c.h.b16 %v3622
    %v3990 = vunpack.c.l.b16 %v3623
    %v3991 = vunpack.c.h.b16 %v3623
    %v3992 = vunpack.c.l.b16 %v3624
    %v3993 = vunpack.c.h.b16 %v3624
    %v3994 = vunpack.c.l.b16 %v3625
    %v3995 = vunpack.c.h.b16 %v3625
    %v3996 = vunpack.c.l.b16 %v3626
    %v3997 = vunpack.c.h.b16 %v3626
    %v3998 = vunpack.c.l.b16 %v3627
    %v3999 = vunpack.c.h.b16 %v3627
    %v4000 = vunpack.c.l.b16 %v3628
    %v4001 = vunpack.c.h.b16 %v3628
    %v4002 = vunpack.c.l.b16 %v3629
    %v4003 = vunpack.c.h.b16 %v3629
    %v4004 = vunpack.c.l.b16 %v3630
    %v4005 = vunpack.c.h.b16 %v3630
    %v4006 = vunpack.c.l.b16 %v3631
    %v4007 = vunpack.c.h.b16 %v3631
    %v4008 = vunpack.c.l.b16 %v3632
    %v4009 = vunpack.c.h.b16 %v3632
    %v4010 = vunpack.c.l.b16 %v3633
    %v4011 = vunpack.c.h.b16 %v3633
    %v4012 = vunpack.c.l.b16 %v3634
    %v4013 = vunpack.c.h.b16 %v3634
    %v4014 = vunpack.c.l.b16 %v3635
    %v4015 = vunpack.c.h.b16 %v3635
    %v4016 = vunpack.c.l.b16 %v3636
    %v4017 = vunpack.c.h.b16 %v3636
    %v4018 = vunpack.c.l.b16 %v3637
    %v4019 = vunpack.c.h.b16 %v3637
    %v4020 = vunpack.c.l.b16 %v3638
    %v4021 = vunpack.c.h.b16 %v3638
    %v4022 = vunpack.c.l.b16 %v3639
    %v4023 = vunpack.c.h.b16 %v3639
    %v4024 = vunpack.c.l.b16 %v3640
    %v4025 = vunpack.c.h.b16 %v3640
    %v4026 = vunpack.c.l.b16 %v3641
    %v4027 = vunpack.c.h.b16 %v3641
    %v4028 = vunpack.c.l.b16 %v3642
    %v4029 = vunpack.c.h.b16 %v3642
    %v4030 = vunpack.c.l.b16 %v3643
    %v4031 = vunpack.c.h.b16 %v3643
    %v4032 = vunpack.c.l.b16 %v3644
    %v4033 = vunpack.c.h.b16 %v3644
    %v4034 = vunpack.c.l.b16 %v3645
    %v4035 = vunpack.c.h.b16 %v3645
    %v4036 = vunpack.c.l.b16 %v3646
    %v4037 = vunpack.c.h.b16 %v3646
    %v4038 = vunpack.c.l.b16 %v3647
    %v4039 = vunpack.c.h.b16 %v3647
    %v4040 = vunpack.c.l.b16 %v3648
    %v4041 = vunpack.c.h.b16 %v3648
    %v4042 = vunpack.c.l.b16 %v3649
    %v4043 = vunpack.c.h.b16 %v3649
    %v4044 = vunpack.c.l.b16 %v3650
    %v4045 = vunpack.c.h.b16 %v3650
    %v4046 = vunpack.c.l.b16 %v3651
    %v4047 = vunpack.c.h.b16 %v3651
    %v4048 = vunpack.c.l.b16 %v3652
    %v4049 = vunpack.c.h.b16 %v3652
    %v4050 = vunpack.c.l.b16 %v3653
    %v4051 = vunpack.c.h.b16 %v3653
    %v4052 = vunpack.c.l.b16 %v3654
    %v4053 = vunpack.c.h.b16 %v3654
    %v4054 = vunpack.c.l.b16 %v3655
    %v4055 = vunpack.c.h.b16 %v3655
    %v4056 = vunpack.c.l.b16 %v3656
    %v4057 = vunpack.c.h.b16 %v3656
    %v4058 = vunpack.c.l.b16 %v3657
    %v4059 = vunpack.c.h.b16 %v3657
    %v4060 = vunpack.c.l.b16 %v3658
    %v4061 = vunpack.c.h.b16 %v3658
    %v4062 = vunpack.c.l.b16 %v3659
    %v4063 = vunpack.c.h.b16 %v3659
    %v4064 = vunpack.c.l.b16 %v3660
    %v4065 = vunpack.c.h.b16 %v3660
    %v4066 = vunpack.c.l.b16 %v3661
    %v4067 = vunpack.c.h.b16 %v3661
    %v4068 = vunpack.c.l.b16 %v3662
    %v4069 = vunpack.c.h.b16 %v3662
    %v4070 = vunpack.c.l.b16 %v3663
    %v4071 = vunpack.c.h.b16 %v3663
    %v4072 = vunpack.c.l.b16 %v3664
    %v4073 = vunpack.c.h.b16 %v3664
    %v4074 = vunpack.c.l.b16 %v3665
    %v4075 = vunpack.c.h.b16 %v3665
    %v4076 = vunpack.c.l.b16 %v3666
    %v4077 = vunpack.c.h.b16 %v3666
    %v4078 = vunpack.c.l.b16 %v3667
    %v4079 = vunpack.c.h.b16 %v3667
    %v4080 = vunpack.c.l.b16 %v3668
    %v4081 = vunpack.c.h.b16 %v3668
    %v4082 = vunpack.c.l.b16 %v3669
    %v4083 = vunpack.c.h.b16 %v3669
    %v4084 = vunpack.c.l.b16 %v3670
    %v4085 = vunpack.c.h.b16 %v3670
    %v4086 = vunpack.c.l.b16 %v3671
    %v4087 = vunpack.c.h.b16 %v3671
    %v4088 = vunpack.c.l.b16 %v3672
    %v4089 = vunpack.c.h.b16 %v3672
    %v4090 = vunpack.c.l.b16 %v3673
    %v4091 = vunpack.c.h.b16 %v3673
    %v4092 = vunpack.c.l.b16 %v3674
    %v4093 = vunpack.c.h.b16 %v3674
    %v4094 = vunpack.c.l.b16 %v3675
    %v4095 = vunpack.c.h.b16 %v3675
    %v4096 = vunpack.c.l.b16 %v3676
    %v4097 = vunpack.c.h.b16 %v3676
    %v4098 = vunpack.c.l.b16 %v3677
    %v4099 = vunpack.c.h.b16 %v3677
    %v4100 = vunpack.c.l.b16 %v3678
    %v4101 = vunpack.c.h.b16 %v3678
    %v4102 = vunpack.c.l.b16 %v3679
    %v4103 = vunpack.c.h.b16 %v3679
    %v4104 = vunpack.c.l.b16 %v3680
    %v4105 = vunpack.c.h.b16 %v3680
    %v4106 = vunpack.c.l.b16 %v3681
    %v4107 = vunpack.c.h.b16 %v3681
    %v4108 = vpack.c.b16 %v3860, %v3852
    %v4109 = vpack.c.b16 %v3861, %v3853
    %v4110 = vpack.c.b16 %v3862, %v3854
    %v4111 = vpack.c.b16 %v3863, %v3855
    %v4112 = vpack.c.b16 %v3864, %v3856
    %v4113 = vpack.c.b16 %v3865, %v3857
    %v4114 = vpack.c.b16 %v3866, %v3858
    %v4115 = vpack.c.b16 %v3867, %v3859
    %v4116 = vpack.c.b16 %v3876, %v3868
    %v4117 = vpack.c.b16 %v3877, %v3869
    %v4118 = vpack.c.b16 %v3878, %v3870
    %v4119 = vpack.c.b16 %v3879, %v3871
    %v4120 = vpack.c.b16 %v3880, %v3872
    %v4121 = vpack.c.b16 %v3881, %v3873
    %v4122 = vpack.c.b16 %v3882, %v3874
    %v4123 = vpack.c.b16 %v3883, %v3875
    %v4124 = vpack.c.b16 %v3892, %v3884
    %v4125 = vpack.c.b16 %v3893, %v3885
    %v4126 = vpack.c.b16 %v3894, %v3886
    %v4127 = vpack.c.b16 %v3895, %v3887
    %v4128 = vpack.c.b16 %v3896, %v3888
    %v4129 = vpack.c.b16 %v3897, %v3889
    %v4130 = vpack.c.b16 %v3898, %v3890
    %v4131 = vpack.c.b16 %v3899, %v3891
    %v4132 = vpack.c.b16 %v3908, %v3900
    %v4133 = vpack.c.b16 %v3909, %v3901
    %v4134 = vpack.c.b16 %v3910, %v3902
    %v4135 = vpack.c.b16 %v3911, %v3903
    %v4136 = vpack.c.b16 %v3912, %v3904
    %v4137 = vpack.c.b16 %v3913, %v3905
    %v4138 = vpack.c.b16 %v3914, %v3906
    %v4139 = vpack.c.b16 %v3915, %v3907
    %v4140 = vpack.c.b16 %v3924, %v3916
    %v4141 = vpack.c.b16 %v3925, %v3917
    %v4142 = vpack.c.b16 %v3926, %v3918
    %v4143 = vpack.c.b16 %v3927, %v3919
    %v4144 = vpack.c.b16 %v3928, %v3920
    %v4145 = vpack.c.b16 %v3929, %v3921
    %v4146 = vpack.c.b16 %v3930, %v3922
    %v4147 = vpack.c.b16 %v3931, %v3923
    %v4148 = vpack.c.b16 %v3940, %v3932
    %v4149 = vpack.c.b16 %v3941, %v3933
    %v4150 = vpack.c.b16 %v3942, %v3934
    %v4151 = vpack.c.b16 %v3943, %v3935
    %v4152 = vpack.c.b16 %v3944, %v3936
    %v4153 = vpack.c.b16 %v3945, %v3937
    %v4154 = vpack.c.b16 %v3946, %v3938
    %v4155 = vpack.c.b16 %v3947, %v3939
    %v4156 = vpack.c.b16 %v3956, %v3948
    %v4157 = vpack.c.b16 %v3957, %v3949
    %v4158 = vpack.c.b16 %v3958, %v3950
    %v4159 = vpack.c.b16 %v3959, %v3951
    %v4160 = vpack.c.b16 %v3960, %v3952
    %v4161 = vpack.c.b16 %v3961, %v3953
    %v4162 = vpack.c.b16 %v3962, %v3954
    %v4163 = vpack.c.b16 %v3963, %v3955
    %v4164 = vpack.c.b16 %v3972, %v3964
    %v4165 = vpack.c.b16 %v3973, %v3965
    %v4166 = vpack.c.b16 %v3974, %v3966
    %v4167 = vpack.c.b16 %v3975, %v3967
    %v4168 = vpack.c.b16 %v3976, %v3968
    %v4169 = vpack.c.b16 %v3977, %v3969
    %v4170 = vpack.c.b16 %v3978, %v3970
    %v4171 = vpack.c.b16 %v3979, %v3971
    %v4172 = vpack.c.b16 %v3988, %v3980
    %v4173 = vpack.c.b16 %v3989, %v3981
    %v4174 = vpack.c.b16 %v3990, %v3982
    %v4175 = vpack.c.b16 %v3991, %v3983
    %v4176 = vpack.c.b16 %v3992, %v3984
    %v4177 = vpack.c.b16 %v3993, %v3985
    %v4178 = vpack.c.b16 %v3994, %v3986
    %v4179 = vpack.c.b16 %v3995, %v3987
    %v4180 = vpack.c.b16 %v4004, %v3996
    %v4181 = vpack.c.b16 %v4005, %v3997
    %v4182 = vpack.c.b16 %v4006, %v3998
    %v4183 = vpack.c.b16 %v4007, %v3999
    %v4184 = vpack.c.b16 %v4008, %v4000
    %v4185 = vpack.c.b16 %v4009, %v4001
    %v4186 = vpack.c.b16 %v4010, %v4002
    %v4187 = vpack.c.b16 %v4011, %v4003
    %v4188 = vpack.c.b16 %v4020, %v4012
    %v4189 = vpack.c.b16 %v4021, %v4013
    %v4190 = vpack.c.b16 %v4022, %v4014
    %v4191 = vpack.c.b16 %v4023, %v4015
    %v4192 = vpack.c.b16 %v4024, %v4016
    %v4193 = vpack.c.b16 %v4025, %v4017
    %v4194 = vpack.c.b16 %v4026, %v4018
    %v4195 = vpack.c.b16 %v4027, %v4019
    %v4196 = vpack.c.b16 %v4036, %v4028
    %v4197 = vpack.c.b16 %v4037, %v4029
    %v4198 = vpack.c.b16 %v4038, %v4030
    %v4199 = vpack.c.b16 %v4039, %v4031
    %v4200 = vpack.c.b16 %v4040, %v4032
    %v4201 = vpack.c.b16 %v4041, %v4033
    %v4202 = vpack.c.b16 %v4042, %v4034
    %v4203 = vpack.c.b16 %v4043, %v4035
    %v4204 = vpack.c.b16 %v4052, %v4044
    %v4205 = vpack.c.b16 %v4053, %v4045
    %v4206 = vpack.c.b16 %v4054, %v4046
    %v4207 = vpack.c.b16 %v4055, %v4047
    %v4208 = vpack.c.b16 %v4056, %v4048
    %v4209 = vpack.c.b16 %v4057, %v4049
    %v4210 = vpack.c.b16 %v4058, %v4050
    %v4211 = vpack.c.b16 %v4059, %v4051
    %v4212 = vpack.c.b16 %v4068, %v4060
    %v4213 = vpack.c.b16 %v4069, %v4061
    %v4214 = vpack.c.b16 %v4070, %v4062
    %v4215 = vpack.c.b16 %v4071, %v4063
    %v4216 = vpack.c.b16 %v4072, %v4064
    %v4217 = vpack.c.b16 %v4073, %v4065
    %v4218 = vpack.c.b16 %v4074, %v4066
    %v4219 = vpack.c.b16 %v4075, %v4067
    %v4220 = vpack.c.b16 %v4084, %v4076
    %v4221 = vpack.c.b16 %v4085, %v4077
    %v4222 = vpack.c.b16 %v4086, %v4078
    %v4223 = vpack.c.b16 %v4087, %v4079
    %v4224 = vpack.c.b16 %v4088, %v4080
    %v4225 = vpack.c.b16 %v4089, %v4081
    %v4226 = vpack.c.b16 %v4090, %v4082
    %v4227 = vpack.c.b16 %v4091, %v4083
    %v4228 = vpack.c.b16 %v4100, %v4092
    %v4229 = vpack.c.b16 %v4101, %v4093
    %v4230 = vpack.c.b16 %v4102, %v4094
    %v4231 = vpack.c.b16 %v4103, %v4095
    %v4232 = vpack.c.b16 %v4104, %v4096
    %v4233 = vpack.c.b16 %v4105, %v4097
    %v4234 = vpack.c.b16 %v4106, %v4098
    %v4235 = vpack.c.b16 %v4107, %v4099
    %4364 = vmatprep.subr.bf16.mxu0 %v4165
    %4365 = vmatpush1.bf16.msra.mxu0 %v4164
    %4366 = vmatprep.subr.bf16.mxu0 %v4157
    %4367 = vmatpush1.bf16.msra.mxu0 %v4156
    %4368 = vmatprep.subr.bf16.mxu0 %v4149
    %4369 = vmatpush1.bf16.msra.mxu0 %v4148
    %4370 = vmatprep.subr.bf16.mxu0 %v4141
    %4371 = vmatpush1.bf16.msra.mxu0 %v4140
    %4372 = vmatprep.subr.bf16.mxu0 %v4133
    %4373 = vmatpush1.bf16.msra.mxu0 %v4132
    %4374 = vmatprep.subr.bf16.mxu0 %v4125
    %4375 = vmatpush1.bf16.msra.mxu0 %v4124
    %4376 = vmatprep.subr.bf16.mxu0 %v4117
    %4377 = vmatpush1.bf16.msra.mxu0 %v4116
    %4378 = vmatprep.subr.bf16.mxu0 %v4109
    %4379 = vmatpush1.bf16.msra.mxu0 %v4108
    %4380 = vmatprep.subr.bf16.mxu0 %v4229
    %4381 = vmatpush2.bf16.msra.mxu0 %v4228
    %4382 = vmatprep.subr.bf16.mxu0 %v4221
    %4383 = vmatpush2.bf16.msra.mxu0 %v4220
    %4384 = vmatprep.subr.bf16.mxu0 %v4213
    %4385 = vmatpush2.bf16.msra.mxu0 %v4212
    %4386 = vmatprep.subr.bf16.mxu0 %v4205
    %4387 = vmatpush2.bf16.msra.mxu0 %v4204
    %4388 = vmatprep.subr.bf16.mxu0 %v4197
    %4389 = vmatpush2.bf16.msra.mxu0 %v4196
    %4390 = vmatprep.subr.bf16.mxu0 %v4189
    %4391 = vmatpush2.bf16.msra.mxu0 %v4188
    %4392 = vmatprep.subr.bf16.mxu0 %v4181
    %4393 = vmatpush2.bf16.msra.mxu0 %v4180
    %4394 = vmatprep.subr.bf16.mxu0 %v4173
    %4395 = vmatpush2.bf16.msra.mxu0 %v4172
    %4396 = vmatprep.mubr.bf16.mxu0 %v3547
    %4397 = vmatmul.mubr.bf16.gmra.mxu0 %v3546
    %v4398 = vpop.f32.mrf.mxu0
    %v4399 = vadd.f32 %v3687, %v4398
    %v4400 = vpop.f32.mrf.mxu0
    %v4401 = vadd.f32 %v3691, %v4400
    %v4402 = vpop.f32.mrf.mxu0
    %v4403 = vadd.f32 %v3687, %v4402
    %v4404 = vpop.f32.mrf.mxu0
    %v4405 = vadd.f32 %v3691, %v4404
    %4406 = vmatprep.mubr.bf16.mxu0 %v3549
    %4407 = vmatmul.mubr.bf16.gmra.mxu0 %v3548
    %v4408 = vpop.f32.mrf.mxu0
    %v4409 = vadd.f32 %v3687, %v4408
    %v4410 = vpop.f32.mrf.mxu0
    %v4411 = vadd.f32 %v3691, %v4410
    %v4412 = vpop.f32.mrf.mxu0
    %v4413 = vadd.f32 %v3687, %v4412
    %v4414 = vpop.f32.mrf.mxu0
    %v4415 = vadd.f32 %v3691, %v4414
    %4416 = vmatprep.mubr.bf16.mxu0 %v3551
    %4417 = vmatmul.mubr.bf16.gmra.mxu0 %v3550
    %v4418 = vpop.f32.mrf.mxu0
    %v4419 = vadd.f32 %v3687, %v4418
    %v4420 = vpop.f32.mrf.mxu0
    %v4421 = vadd.f32 %v3691, %v4420
    %v4422 = vpop.f32.mrf.mxu0
    %v4423 = vadd.f32 %v3687, %v4422
    %v4424 = vpop.f32.mrf.mxu0
    %v4425 = vadd.f32 %v3691, %v4424
    %4426 = vmatprep.mubr.bf16.mxu0 %v3553
    %4427 = vmatmul.mubr.bf16.gmra.mxu0 %v3552
    %v4428 = vpop.f32.mrf.mxu0
    %v4429 = vadd.f32 %v3687, %v4428
    %v4430 = vpop.f32.mrf.mxu0
    %v4431 = vadd.f32 %v3691, %v4430
    %v4432 = vpop.f32.mrf.mxu0
    %v4433 = vadd.f32 %v3687, %v4432
    %v4434 = vpop.f32.mrf.mxu0
    %v4435 = vadd.f32 %v3691, %v4434
    %4436 = vdwg.mxu0
    %4437 = vmatprep.subr.bf16.mxu0 %v4167
    %4438 = vmatpush1.bf16.msra.mxu0 %v4166
    %4439 = vmatprep.subr.bf16.mxu0 %v4159
    %4440 = vmatpush1.bf16.msra.mxu0 %v4158
    %4441 = vmatprep.subr.bf16.mxu0 %v4151
    %4442 = vmatpush1.bf16.msra.mxu0 %v4150
    %4443 = vmatprep.subr.bf16.mxu0 %v4143
    %4444 = vmatpush1.bf16.msra.mxu0 %v4142
    %4445 = vmatprep.subr.bf16.mxu0 %v4135
    %4446 = vmatpush1.bf16.msra.mxu0 %v4134
    %4447 = vmatprep.subr.bf16.mxu0 %v4127
    %4448 = vmatpush1.bf16.msra.mxu0 %v4126
    %4449 = vmatprep.subr.bf16.mxu0 %v4119
    %4450 = vmatpush1.bf16.msra.mxu0 %v4118
    %4451 = vmatprep.subr.bf16.mxu0 %v4111
    %4452 = vmatpush1.bf16.msra.mxu0 %v4110
    %4453 = vmatprep.subr.bf16.mxu0 %v4231
    %4454 = vmatpush2.bf16.msra.mxu0 %v4230
    %4455 = vmatprep.subr.bf16.mxu0 %v4223
    %4456 = vmatpush2.bf16.msra.mxu0 %v4222
    %4457 = vmatprep.subr.bf16.mxu0 %v4215
    %4458 = vmatpush2.bf16.msra.mxu0 %v4214
    %4459 = vmatprep.subr.bf16.mxu0 %v4207
    %4460 = vmatpush2.bf16.msra.mxu0 %v4206
    %4461 = vmatprep.subr.bf16.mxu0 %v4199
    %4462 = vmatpush2.bf16.msra.mxu0 %v4198
    %4463 = vmatprep.subr.bf16.mxu0 %v4191
    %4464 = vmatpush2.bf16.msra.mxu0 %v4190
    %4465 = vmatprep.subr.bf16.mxu0 %v4183
    %4466 = vmatpush2.bf16.msra.mxu0 %v4182
    %4467 = vmatprep.subr.bf16.mxu0 %v4175
    %4468 = vmatpush2.bf16.msra.mxu0 %v4174
    %4469 = vmatprep.mubr.bf16.mxu0 %v3547
    %4470 = vmatmul.mubr.bf16.gmra.mxu0 %v3546
    %v4471 = vpop.f32.mrf.mxu0
    %v4472 = vadd.f32 %v3695, %v4471
    %v4473 = vpop.f32.mrf.mxu0
    %v4474 = vadd.f32 %v3699, %v4473
    %v4475 = vpop.f32.mrf.mxu0
    %v4476 = vadd.f32 %v3695, %v4475
    %v4477 = vpop.f32.mrf.mxu0
    %v4478 = vadd.f32 %v3699, %v4477
    %4479 = vmatprep.mubr.bf16.mxu0 %v3549
    %4480 = vmatmul.mubr.bf16.gmra.mxu0 %v3548
    %v4481 = vpop.f32.mrf.mxu0
    %v4482 = vadd.f32 %v3695, %v4481
    %v4483 = vpop.f32.mrf.mxu0
    %v4484 = vadd.f32 %v3699, %v4483
    %v4485 = vpop.f32.mrf.mxu0
    %v4486 = vadd.f32 %v3695, %v4485
    %v4487 = vpop.f32.mrf.mxu0
    %v4488 = vadd.f32 %v3699, %v4487
    %4489 = vmatprep.mubr.bf16.mxu0 %v3551
    %4490 = vmatmul.mubr.bf16.gmra.mxu0 %v3550
    %v4491 = vpop.f32.mrf.mxu0
    %v4492 = vadd.f32 %v3695, %v4491
    %v4493 = vpop.f32.mrf.mxu0
    %v4494 = vadd.f32 %v3699, %v4493
    %v4495 = vpop.f32.mrf.mxu0
    %v4496 = vadd.f32 %v3695, %v4495
    %v4497 = vpop.f32.mrf.mxu0
    %v4498 = vadd.f32 %v3699, %v4497
    %4499 = vmatprep.mubr.bf16.mxu0 %v3553
    %4500 = vmatmul.mubr.bf16.gmra.mxu0 %v3552
    %v4501 = vpop.f32.mrf.mxu0
    %v4502 = vadd.f32 %v3695, %v4501
    %v4503 = vpop.f32.mrf.mxu0
    %v4504 = vadd.f32 %v3699, %v4503
    %v4505 = vpop.f32.mrf.mxu0
    %v4506 = vadd.f32 %v3695, %v4505
    %v4507 = vpop.f32.mrf.mxu0
    %v4508 = vadd.f32 %v3699, %v4507
    %4509 = vdwg.mxu0
    %4510 = vmatprep.subr.bf16.mxu0 %v4169
    %4511 = vmatpush1.bf16.msra.mxu0 %v4168
    %4512 = vmatprep.subr.bf16.mxu0 %v4161
    %4513 = vmatpush1.bf16.msra.mxu0 %v4160
    %4514 = vmatprep.subr.bf16.mxu0 %v4153
    %4515 = vmatpush1.bf16.msra.mxu0 %v4152
    %4516 = vmatprep.subr.bf16.mxu0 %v4145
    %4517 = vmatpush1.bf16.msra.mxu0 %v4144
    %4518 = vmatprep.subr.bf16.mxu0 %v4137
    %4519 = vmatpush1.bf16.msra.mxu0 %v4136
    %4520 = vmatprep.subr.bf16.mxu0 %v4129
    %4521 = vmatpush1.bf16.msra.mxu0 %v4128
    %4522 = vmatprep.subr.bf16.mxu0 %v4121
    %4523 = vmatpush1.bf16.msra.mxu0 %v4120
    %4524 = vmatprep.subr.bf16.mxu0 %v4113
    %4525 = vmatpush1.bf16.msra.mxu0 %v4112
    %4526 = vmatprep.subr.bf16.mxu0 %v4233
    %4527 = vmatpush2.bf16.msra.mxu0 %v4232
    %4528 = vmatprep.subr.bf16.mxu0 %v4225
    %4529 = vmatpush2.bf16.msra.mxu0 %v4224
    %4530 = vmatprep.subr.bf16.mxu0 %v4217
    %4531 = vmatpush2.bf16.msra.mxu0 %v4216
    %4532 = vmatprep.subr.bf16.mxu0 %v4209
    %4533 = vmatpush2.bf16.msra.mxu0 %v4208
    %4534 = vmatprep.subr.bf16.mxu0 %v4201
    %4535 = vmatpush2.bf16.msra.mxu0 %v4200
    %4536 = vmatprep.subr.bf16.mxu0 %v4193
    %4537 = vmatpush2.bf16.msra.mxu0 %v4192
    %4538 = vmatprep.subr.bf16.mxu0 %v4185
    %4539 = vmatpush2.bf16.msra.mxu0 %v4184
    %4540 = vmatprep.subr.bf16.mxu0 %v4177
    %4541 = vmatpush2.bf16.msra.mxu0 %v4176
    %4542 = vmatprep.mubr.bf16.mxu0 %v3547
    %4543 = vmatmul.mubr.bf16.gmra.mxu0 %v3546
    %v4544 = vpop.f32.mrf.mxu0
    %v4545 = vadd.f32 %v3703, %v4544
    %v4546 = vpop.f32.mrf.mxu0
    %v4547 = vadd.f32 %v3707, %v4546
    %v4548 = vpop.f32.mrf.mxu0
    %v4549 = vadd.f32 %v3703, %v4548
    %v4550 = vpop.f32.mrf.mxu0
    %v4551 = vadd.f32 %v3707, %v4550
    %4552 = vmatprep.mubr.bf16.mxu0 %v3549
    %4553 = vmatmul.mubr.bf16.gmra.mxu0 %v3548
    %v4554 = vpop.f32.mrf.mxu0
    %v4555 = vadd.f32 %v3703, %v4554
    %v4556 = vpop.f32.mrf.mxu0
    %v4557 = vadd.f32 %v3707, %v4556
    %v4558 = vpop.f32.mrf.mxu0
    %v4559 = vadd.f32 %v3703, %v4558
    %v4560 = vpop.f32.mrf.mxu0
    %v4561 = vadd.f32 %v3707, %v4560
    %4562 = vmatprep.mubr.bf16.mxu0 %v3551
    %4563 = vmatmul.mubr.bf16.gmra.mxu0 %v3550
    %v4564 = vpop.f32.mrf.mxu0
    %v4565 = vadd.f32 %v3703, %v4564
    %v4566 = vpop.f32.mrf.mxu0
    %v4567 = vadd.f32 %v3707, %v4566
    %v4568 = vpop.f32.mrf.mxu0
    %v4569 = vadd.f32 %v3703, %v4568
    %v4570 = vpop.f32.mrf.mxu0
    %v4571 = vadd.f32 %v3707, %v4570
    %4572 = vmatprep.mubr.bf16.mxu0 %v3553
    %4573 = vmatmul.mubr.bf16.gmra.mxu0 %v3552
    %v4574 = vpop.f32.mrf.mxu0
    %v4575 = vadd.f32 %v3703, %v4574
    %v4576 = vpop.f32.mrf.mxu0
    %v4577 = vadd.f32 %v3707, %v4576
    %v4578 = vpop.f32.mrf.mxu0
    %v4579 = vadd.f32 %v3703, %v4578
    %v4580 = vpop.f32.mrf.mxu0
    %v4581 = vadd.f32 %v3707, %v4580
    %4582 = vdwg.mxu0
    %4583 = vmatprep.subr.bf16.mxu0 %v4171
    %4584 = vmatpush1.bf16.msra.mxu0 %v4170
    %4585 = vmatprep.subr.bf16.mxu0 %v4163
    %4586 = vmatpush1.bf16.msra.mxu0 %v4162
    %4587 = vmatprep.subr.bf16.mxu0 %v4155
    %4588 = vmatpush1.bf16.msra.mxu0 %v4154
    %4589 = vmatprep.subr.bf16.mxu0 %v4147
    %4590 = vmatpush1.bf16.msra.mxu0 %v4146
    %4591 = vmatprep.subr.bf16.mxu0 %v4139
    %4592 = vmatpush1.bf16.msra.mxu0 %v4138
    %4593 = vmatprep.subr.bf16.mxu0 %v4131
    %4594 = vmatpush1.bf16.msra.mxu0 %v4130
    %4595 = vmatprep.subr.bf16.mxu0 %v4123
    %4596 = vmatpush1.bf16.msra.mxu0 %v4122
    %4597 = vmatprep.subr.bf16.mxu0 %v4115
    %4598 = vmatpush1.bf16.msra.mxu0 %v4114
    %4599 = vmatprep.subr.bf16.mxu0 %v4235
    %4600 = vmatpush2.bf16.msra.mxu0 %v4234
    %4601 = vmatprep.subr.bf16.mxu0 %v4227
    %4602 = vmatpush2.bf16.msra.mxu0 %v4226
    %4603 = vmatprep.subr.bf16.mxu0 %v4219
    %4604 = vmatpush2.bf16.msra.mxu0 %v4218
    %4605 = vmatprep.subr.bf16.mxu0 %v4211
    %4606 = vmatpush2.bf16.msra.mxu0 %v4210
    %4607 = vmatprep.subr.bf16.mxu0 %v4203
    %4608 = vmatpush2.bf16.msra.mxu0 %v4202
    %4609 = vmatprep.subr.bf16.mxu0 %v4195
    %4610 = vmatpush2.bf16.msra.mxu0 %v4194
    %4611 = vmatprep.subr.bf16.mxu0 %v4187
    %4612 = vmatpush2.bf16.msra.mxu0 %v4186
    %4613 = vmatprep.subr.bf16.mxu0 %v4179
    %4614 = vmatpush2.bf16.msra.mxu0 %v4178
    %4615 = vmatprep.mubr.bf16.mxu0 %v3547
    %4616 = vmatmul.mubr.bf16.gmra.mxu0 %v3546
    %v4617 = vpop.f32.mrf.mxu0
    %v4618 = vadd.f32 %v3711, %v4617
    %v4619 = vpop.f32.mrf.mxu0
    %v4620 = vadd.f32 %v3715, %v4619
    %v4621 = vpop.f32.mrf.mxu0
    %v4622 = vadd.f32 %v3711, %v4621
    %v4623 = vpop.f32.mrf.mxu0
    %v4624 = vadd.f32 %v3715, %v4623
    %4625 = vmatprep.mubr.bf16.mxu0 %v3549
    %4626 = vmatmul.mubr.bf16.gmra.mxu0 %v3548
    %v4627 = vpop.f32.mrf.mxu0
    %v4628 = vadd.f32 %v3711, %v4627
    %v4629 = vpop.f32.mrf.mxu0
    %v4630 = vadd.f32 %v3715, %v4629
    %v4631 = vpop.f32.mrf.mxu0
    %v4632 = vadd.f32 %v3711, %v4631
    %v4633 = vpop.f32.mrf.mxu0
    %v4634 = vadd.f32 %v3715, %v4633
    %4635 = vmatprep.mubr.bf16.mxu0 %v3551
    %4636 = vmatmul.mubr.bf16.gmra.mxu0 %v3550
    %v4637 = vpop.f32.mrf.mxu0
    %v4638 = vadd.f32 %v3711, %v4637
    %v4639 = vpop.f32.mrf.mxu0
    %v4640 = vadd.f32 %v3715, %v4639
    %v4641 = vpop.f32.mrf.mxu0
    %v4642 = vadd.f32 %v3711, %v4641
    %v4643 = vpop.f32.mrf.mxu0
    %v4644 = vadd.f32 %v3715, %v4643
    %4645 = vmatprep.mubr.bf16.mxu0 %v3553
    %4646 = vmatmul.mubr.bf16.gmra.mxu0 %v3552
    %v4647 = vpop.f32.mrf.mxu0
    %v4648 = vadd.f32 %v3711, %v4647
    %v4649 = vpop.f32.mrf.mxu0
    %v4650 = vadd.f32 %v3715, %v4649
    %v4651 = vpop.f32.mrf.mxu0
    %v4652 = vadd.f32 %v3711, %v4651
    %v4653 = vpop.f32.mrf.mxu0
    %v4654 = vadd.f32 %v3715, %v4653
    %4655 = vdwg.mxu0
    %v4656 = vadd.f32 %v750, %v4399
    %v4657 = vadd.f32 %v751, %v4401
    %v4658 = vadd.f32 %v752, %v4472
    %v4659 = vadd.f32 %v753, %v4474
    %v4660 = vadd.f32 %v754, %v4545
    %v4661 = vadd.f32 %v755, %v4547
    %v4662 = vadd.f32 %v756, %v4618
    %v4663 = vadd.f32 %v757, %v4620
    %v4664 = vadd.f32 %v758, %v4403
    %v4665 = vadd.f32 %v759, %v4405
    %v4666 = vadd.f32 %v760, %v4476
    %v4667 = vadd.f32 %v761, %v4478
    %v4668 = vadd.f32 %v762, %v4549
    %v4669 = vadd.f32 %v763, %v4551
    %v4670 = vadd.f32 %v764, %v4622
    %v4671 = vadd.f32 %v765, %v4624
    %v4672 = vadd.f32 %v766, %v4409
    %v4673 = vadd.f32 %v767, %v4411
    %v4674 = vadd.f32 %v768, %v4482
    %v4675 = vadd.f32 %v769, %v4484
    %v4676 = vadd.f32 %v770, %v4555
    %v4677 = vadd.f32 %v771, %v4557
    %v4678 = vadd.f32 %v772, %v4628
    %v4679 = vadd.f32 %v773, %v4630
    %v4680 = vadd.f32 %v774, %v4413
    %v4681 = vadd.f32 %v775, %v4415
    %v4682 = vadd.f32 %v776, %v4486
    %v4683 = vadd.f32 %v777, %v4488
    %v4684 = vadd.f32 %v778, %v4559
    %v4685 = vadd.f32 %v779, %v4561
    %v4686 = vadd.f32 %v780, %v4632
    %v4687 = vadd.f32 %v781, %v4634
    %v4688 = vadd.f32 %v782, %v4419
    %v4689 = vadd.f32 %v783, %v4421
    %v4690 = vadd.f32 %v784, %v4492
    %v4691 = vadd.f32 %v785, %v4494
    %v4692 = vadd.f32 %v786, %v4565
    %v4693 = vadd.f32 %v787, %v4567
    %v4694 = vadd.f32 %v788, %v4638
    %v4695 = vadd.f32 %v789, %v4640
    %v4696 = vadd.f32 %v790, %v4423
    %v4697 = vadd.f32 %v791, %v4425
    %v4698 = vadd.f32 %v792, %v4496
    %v4699 = vadd.f32 %v793, %v4498
    %v4700 = vadd.f32 %v794, %v4569
    %v4701 = vadd.f32 %v795, %v4571
    %v4702 = vadd.f32 %v796, %v4642
    %v4703 = vadd.f32 %v797, %v4644
    %v4704 = vadd.f32 %v798, %v4429
    %v4705 = vadd.f32 %v799, %v4431
    %v4706 = vadd.f32 %v800, %v4502
    %v4707 = vadd.f32 %v801, %v4504
    %v4708 = vadd.f32 %v802, %v4575
    %v4709 = vadd.f32 %v803, %v4577
    %v4710 = vadd.f32 %v804, %v4648
    %v4711 = vadd.f32 %v805, %v4650
    %v4712 = vadd.f32 %v806, %v4433
    %v4713 = vadd.f32 %v807, %v4435
    %v4714 = vadd.f32 %v808, %v4506
    %v4715 = vadd.f32 %v809, %v4508
    %v4716 = vadd.f32 %v810, %v4579
    %v4717 = vadd.f32 %v811, %v4581
    %v4718 = vadd.f32 %v812, %v4652
    %v4719 = vadd.f32 %v813, %v4654
    %v4720 = vmax.f32 %v4656, 0.0
    %v4721 = vmax.f32 %v4657, 0.0
    %v4722 = vmax.f32 %v4658, 0.0
    %v4723 = vmax.f32 %v4659, 0.0
    %v4724 = vmax.f32 %v4660, 0.0
    %v4725 = vmax.f32 %v4661, 0.0
    %v4726 = vmax.f32 %v4662, 0.0
    %v4727 = vmax.f32 %v4663, 0.0
    %v4728 = vmax.f32 %v4664, 0.0
    %v4729 = vmax.f32 %v4665, 0.0
    %v4730 = vmax.f32 %v4666, 0.0
    %v4731 = vmax.f32 %v4667, 0.0
    %v4732 = vmax.f32 %v4668, 0.0
    %v4733 = vmax.f32 %v4669, 0.0
    %v4734 = vmax.f32 %v4670, 0.0
    %v4735 = vmax.f32 %v4671, 0.0
    %v4736 = vmax.f32 %v4672, 0.0
    %v4737 = vmax.f32 %v4673, 0.0
    %v4738 = vmax.f32 %v4674, 0.0
    %v4739 = vmax.f32 %v4675, 0.0
    %v4740 = vmax.f32 %v4676, 0.0
    %v4741 = vmax.f32 %v4677, 0.0
    %v4742 = vmax.f32 %v4678, 0.0
    %v4743 = vmax.f32 %v4679, 0.0
    %v4744 = vmax.f32 %v4680, 0.0
    %v4745 = vmax.f32 %v4681, 0.0
    %v4746 = vmax.f32 %v4682, 0.0
    %v4747 = vmax.f32 %v4683, 0.0
    %v4748 = vmax.f32 %v4684, 0.0
    %v4749 = vmax.f32 %v4685, 0.0
    %v4750 = vmax.f32 %v4686, 0.0
    %v4751 = vmax.f32 %v4687, 0.0
    %v4752 = vmax.f32 %v4688, 0.0
    %v4753 = vmax.f32 %v4689, 0.0
    %v4754 = vmax.f32 %v4690, 0.0
    %v4755 = vmax.f32 %v4691, 0.0
    %v4756 = vmax.f32 %v4692, 0.0
    %v4757 = vmax.f32 %v4693, 0.0
    %v4758 = vmax.f32 %v4694, 0.0
    %v4759 = vmax.f32 %v4695, 0.0
    %v4760 = vmax.f32 %v4696, 0.0
    %v4761 = vmax.f32 %v4697, 0.0
    %v4762 = vmax.f32 %v4698, 0.0
    %v4763 = vmax.f32 %v4699, 0.0
    %v4764 = vmax.f32 %v4700, 0.0
    %v4765 = vmax.f32 %v4701, 0.0
    %v4766 = vmax.f32 %v4702, 0.0
    %v4767 = vmax.f32 %v4703, 0.0
    %v4768 = vmax.f32 %v4704, 0.0
    %v4769 = vmax.f32 %v4705, 0.0
    %v4770 = vmax.f32 %v4706, 0.0
    %v4771 = vmax.f32 %v4707, 0.0
    %v4772 = vmax.f32 %v4708, 0.0
    %v4773 = vmax.f32 %v4709, 0.0
    %v4774 = vmax.f32 %v4710, 0.0
    %v4775 = vmax.f32 %v4711, 0.0
    %v4776 = vmax.f32 %v4712, 0.0
    %v4777 = vmax.f32 %v4713, 0.0
    %v4778 = vmax.f32 %v4714, 0.0
    %v4779 = vmax.f32 %v4715, 0.0
    %v4780 = vmax.f32 %v4716, 0.0
    %v4781 = vmax.f32 %v4717, 0.0
    %v4782 = vmax.f32 %v4718, 0.0
    %v4783 = vmax.f32 %v4719, 0.0
    %4784 = vst [vmem:[#allocation13] sm:$0xff] %v4720
    %4785 = vst [vmem:[#allocation13 + $0x8] sm:$0xff] %v4721
    %4786 = vst [vmem:[#allocation13 + $0x10] sm:$0xff] %v4722
    %4787 = vst [vmem:[#allocation13 + $0x18] sm:$0xff] %v4723
    %4788 = vst [vmem:[#allocation13 + $0x20] sm:$0xff] %v4724
    %4789 = vst [vmem:[#allocation13 + $0x28] sm:$0xff] %v4725
    %4790 = vst [vmem:[#allocation13 + $0x30] sm:$0xff] %v4726
    %4791 = vst [vmem:[#allocation13 + $0x38] sm:$0xff] %v4727
    %4792 = vst [vmem:[#allocation13 + $0x40] sm:$0xff] %v4728
    %4793 = vst [vmem:[#allocation13 + $0x48] sm:$0xff] %v4729
    %4794 = vst [vmem:[#allocation13 + $0x50] sm:$0xff] %v4730
    %4795 = vst [vmem:[#allocation13 + $0x58] sm:$0xff] %v4731
    %4796 = vst [vmem:[#allocation13 + $0x60] sm:$0xff] %v4732
    %4797 = vst [vmem:[#allocation13 + $0x68] sm:$0xff] %v4733
    %4798 = vst [vmem:[#allocation13 + $0x70] sm:$0xff] %v4734
    %4799 = vst [vmem:[#allocation13 + $0x78] sm:$0xff] %v4735
    %4800 = vst [vmem:[#allocation13 + $0x80] sm:$0xff] %v4736
    %4801 = vst [vmem:[#allocation13 + $0x88] sm:$0xff] %v4737
    %4802 = vst [vmem:[#allocation13 + $0x90] sm:$0xff] %v4738
    %4803 = vst [vmem:[#allocation13 + $0x98] sm:$0xff] %v4739
    %4804 = vst [vmem:[#allocation13 + $0xa0] sm:$0xff] %v4740
    %4805 = vst [vmem:[#allocation13 + $0xa8] sm:$0xff] %v4741
    %4806 = vst [vmem:[#allocation13 + $0xb0] sm:$0xff] %v4742
    %4807 = vst [vmem:[#allocation13 + $0xb8] sm:$0xff] %v4743
    %4808 = vst [vmem:[#allocation13 + $0xc0] sm:$0xff] %v4744
    %4809 = vst [vmem:[#allocation13 + $0xc8] sm:$0xff] %v4745
    %4810 = vst [vmem:[#allocation13 + $0xd0] sm:$0xff] %v4746
    %4811 = vst [vmem:[#allocation13 + $0xd8] sm:$0xff] %v4747
    %4812 = vst [vmem:[#allocation13 + $0xe0] sm:$0xff] %v4748
    %4813 = vst [vmem:[#allocation13 + $0xe8] sm:$0xff] %v4749
    %4814 = vst [vmem:[#allocation13 + $0xf0] sm:$0xff] %v4750
    %4815 = vst [vmem:[#allocation13 + $0xf8] sm:$0xff] %v4751
    %4816 = vst [vmem:[#allocation13 + $0x100] sm:$0xff] %v4752
    %4817 = vst [vmem:[#allocation13 + $0x108] sm:$0xff] %v4753
    %4818 = vst [vmem:[#allocation13 + $0x110] sm:$0xff] %v4754
    %4819 = vst [vmem:[#allocation13 + $0x118] sm:$0xff] %v4755
    %4820 = vst [vmem:[#allocation13 + $0x120] sm:$0xff] %v4756
    %4821 = vst [vmem:[#allocation13 + $0x128] sm:$0xff] %v4757
    %4822 = vst [vmem:[#allocation13 + $0x130] sm:$0xff] %v4758
    %4823 = vst [vmem:[#allocation13 + $0x138] sm:$0xff] %v4759
    %4824 = vst [vmem:[#allocation13 + $0x140] sm:$0xff] %v4760
    %4825 = vst [vmem:[#allocation13 + $0x148] sm:$0xff] %v4761
    %4826 = vst [vmem:[#allocation13 + $0x150] sm:$0xff] %v4762
    %4827 = vst [vmem:[#allocation13 + $0x158] sm:$0xff] %v4763
    %4828 = vst [vmem:[#allocation13 + $0x160] sm:$0xff] %v4764
    %4829 = vst [vmem:[#allocation13 + $0x168] sm:$0xff] %v4765
    %4830 = vst [vmem:[#allocation13 + $0x170] sm:$0xff] %v4766
    %4831 = vst [vmem:[#allocation13 + $0x178] sm:$0xff] %v4767
    %4832 = vst [vmem:[#allocation13 + $0x180] sm:$0xff] %v4768
    %4833 = vst [vmem:[#allocation13 + $0x188] sm:$0xff] %v4769
    %4834 = vst [vmem:[#allocation13 + $0x190] sm:$0xff] %v4770
    %4835 = vst [vmem:[#allocation13 + $0x198] sm:$0xff] %v4771
    %4836 = vst [vmem:[#allocation13 + $0x1a0] sm:$0xff] %v4772
    %4837 = vst [vmem:[#allocation13 + $0x1a8] sm:$0xff] %v4773
    %4838 = vst [vmem:[#allocation13 + $0x1b0] sm:$0xff] %v4774
    %4839 = vst [vmem:[#allocation13 + $0x1b8] sm:$0xff] %v4775
    %4840 = vst [vmem:[#allocation13 + $0x1c0] sm:$0xff] %v4776
    %4841 = vst [vmem:[#allocation13 + $0x1c8] sm:$0xff] %v4777
    %4842 = vst [vmem:[#allocation13 + $0x1d0] sm:$0xff] %v4778
    %4843 = vst [vmem:[#allocation13 + $0x1d8] sm:$0xff] %v4779
    %4844 = vst [vmem:[#allocation13 + $0x1e0] sm:$0xff] %v4780
    %4845 = vst [vmem:[#allocation13 + $0x1e8] sm:$0xff] %v4781
    %4846 = vst [vmem:[#allocation13 + $0x1f0] sm:$0xff] %v4782
    %4847 = vst [vmem:[#allocation13 + $0x1f8] sm:$0xff] %v4783
    // Predicated region
    $region62: #{tpu_custom_call.1} parent=1 // pred_check
      _
    $region63: #{tpu_custom_call.1} parent=1 // pred_check_branch
      %4849 = sbr.rel (0) target = $region65
    $region64: #{tpu_custom_call.1} parent=1 // pred_region
      %s4851 = ssub.s32 8192, 8192
      %4852 = vsyncadd [#allocation4], %s4851
      %s4853 = sshll.u32 [#allocation13], 4
      %s4854 = int_to_ptr.vmem [resolvable:$true] %s4853
      %4859 = dma.vmem_to_hbm [thread:$0]  %s4854, 8192, %s9, [#allocation4], 1024, 1024, 64
    $region65: #{tpu_custom_call.1} parent=1 // pred_fallthru
      _
    // Predicated region
    $region66: #{tpu_custom_call.1} parent=1 // pred_check
      _
    $region67: #{tpu_custom_call.1} parent=1 // pred_check_branch
      %4861 = sbr.rel (0) target = $region69
    $region68: #{tpu_custom_call.1} parent=1 // pred_region
      %4862 = dma.done [#allocation4], 8192
    $region69: #{tpu_custom_call.1} parent=1 // pred_fallthru
      _
    %4863 = vsyncpa [#allocation3], 1
    %4864 = vsyncpa [#allocation6], 1
    %4865 = vsyncpa [#allocation9], 1
    %4866 = vsyncpa [#allocation12], 1
    %4867 = vsyncpa [#allocation4], 1

</llo_original>
